<compile_context>
chip_gen: v6e
topology: v6e:2x2x1
jax: 0.10.0
libtpu: 0.0.40
codegen_flags: <defaults>
</compile_context>

<pallas_src>
import functools

import numpy as np
import jax
import jax.numpy as jnp
from jax import lax
from jax.experimental import pallas as pl
from jax.experimental.pallas import tpu as pltpu


LANES = 128


def _round_up(x, m):
    return (x + m - 1) // m * m


def _conv_out(size, k, s, p):
    return (size + 2 * p - k) // s + 1


def _selection_matrix(h_in, w_in, ksize, stride, pad):
    """0/1 matrix S of shape (k*k*P_out, P_in) such that
    (S @ act_flat)[t*P_out + p, c] == input pixel for tap t of output pos p
    (all-zero rows encode the convolution's zero padding)."""
    h_out = _conv_out(h_in, ksize, stride, pad)
    w_out = _conv_out(w_in, ksize, stride, pad)
    n_out = h_out * w_out
    sel = np.zeros((ksize * ksize * n_out, h_in * w_in), np.float32)
    for kh in range(ksize):
        for kw in range(ksize):
            t = kh * ksize + kw
            for ho in range(h_out):
                for wo in range(w_out):
                    r = ho * stride + kh - pad
                    c = wo * stride + kw - pad
                    if 0 <= r < h_in and 0 <= c < w_in:
                        sel[t * n_out + ho * w_out + wo, r * w_in + c] = 1.0
    return sel


# ------------------------------ Pallas kernel ------------------------------ #
def _make_fused_pose_kernel(n_p1, n_p2, c_mid, taps=9):
    f32, bf16 = jnp.float32, jnp.bfloat16

    def tap_conv(sel, act_bf16, w_ref, shift_ref, n_out):
        # sel: (taps*n_out, P_in) 0/1 bf16;  act_bf16: (P_in, c_mid) bf16
        # w_ref: (taps*c_mid, c_out) bf16 stacked per tap (t = kh*3 + kw)
        pat = jnp.dot(sel, act_bf16, preferred_element_type=f32).astype(bf16)
        acc = jnp.zeros((n_out, w_ref.shape[1]), f32)
        for t in range(taps):
            acc = acc + jnp.dot(pat[t * n_out:(t + 1) * n_out, :],
                                w_ref[t * c_mid:(t + 1) * c_mid, :],
                                preferred_element_type=f32)
        return acc + shift_ref[...]

    def kernel(p1_ref, w1_ref, b1_ref, s2_ref, w2_ref, b2_ref,
               s3_ref, w3_ref, b3_ref, w4_ref, b4_ref, wh_ref, bh_ref, o_ref):
        # Stem conv1 (+BN+ReLU): patches pre-built by XLA, K padded to 128.
        y1 = jnp.dot(p1_ref[0], w1_ref[...], preferred_element_type=f32)
        y1 = jnp.maximum(y1 + b1_ref[...], 0.0).astype(bf16)      # (n_p1, c_mid)

        # Stem conv2 (3x3 / s2 / p1) + BN + ReLU, in-VMEM im2col.
        y2 = jnp.maximum(tap_conv(s2_ref[...], y1, w2_ref, b2_ref, n_p2), 0.0)
        y2b = y2.astype(bf16)                                      # (n_p2, c_mid)

        # BasicBlock: conv-BN-ReLU -> conv-BN -> +residual -> ReLU.
        y3 = jnp.maximum(tap_conv(s3_ref[...], y2b, w3_ref, b3_ref, n_p2),
                         0.0).astype(bf16)
        y4 = jnp.maximum(tap_conv(s3_ref[...], y3, w4_ref, b4_ref, n_p2) + y2,
                         0.0)

        # Fused 1x1 heatmap head (lane-dense padded output columns).
        out = jnp.dot(y4.astype(bf16), wh_ref[...], preferred_element_type=f32)
        o_ref[0] = (out + bh_ref[...]).astype(o_ref.dtype)

    return kernel


# ------------------------------- parameters -------------------------------- #
def _fold_bn(gamma, beta, mean, var, eps=1e-5):
    scale = gamma / jnp.sqrt(var + eps)
    shift = beta - mean * scale
    return scale, shift


def init_params(key, num_points, stem_ch=32):
    ks = jax.random.split(key, 10)

    def conv_w(k, kh, kw, cin, cout):
        fan_in = kh * kw * cin
        return jax.random.normal(k, (kh, kw, cin, cout), jnp.float32) / jnp.sqrt(
            jnp.asarray(fan_in, jnp.float32))

    def bn(k, c):
        k1, k2, k3, k4 = jax.random.split(k, 4)
        gamma = 1.0 + 0.1 * jax.random.normal(k1, (c,), jnp.float32)
        beta = 0.1 * jax.random.normal(k2, (c,), jnp.float32)
        mean = 0.1 * jax.random.normal(k3, (c,), jnp.float32)
        var = jnp.abs(1.0 + 0.1 * jax.random.normal(k4, (c,), jnp.float32))
        return _fold_bn(gamma, beta, mean, var)

    return {
        "conv1_w": conv_w(ks[0], 3, 3, 3, stem_ch),
        "bn1": bn(ks[1], stem_ch),
        "conv2_w": conv_w(ks[2], 3, 3, stem_ch, stem_ch),
        "bn2": bn(ks[3], stem_ch),
        "blk_conv1_w": conv_w(ks[4], 3, 3, stem_ch, stem_ch),
        "blk_bn1": bn(ks[5], stem_ch),
        "blk_conv2_w": conv_w(ks[6], 3, 3, stem_ch, stem_ch),
        "blk_bn2": bn(ks[7], stem_ch),
        "final_w": conv_w(ks[8], 1, 1, stem_ch, num_points),
        "final_b": 0.01 * jax.random.normal(ks[9], (num_points,), jnp.float32),
    }


def prepare_params(params, height, width, num_points, stem_ch=32):
    """One-time prep: fold BN into weights, stack per-tap weights, and build
    the constant im2col selection matrices for the given input size."""
    h1, w1 = _conv_out(height, 3, 2, 1), _conv_out(width, 3, 2, 1)
    h2, w2 = _conv_out(h1, 3, 2, 1), _conv_out(w1, 3, 2, 1)
    c = stem_ch
    k1 = 3 * 3 * params["conv1_w"].shape[2]
    k1_pad = _round_up(k1, LANES)          # lane-dense patch operand
    ch_pad = _round_up(num_points, LANES)  # lane-dense head output

    def patch_weight(w, scale, k_pad):
        # (KH,KW,Cin,Cout) -> (Cin*KH*KW, Cout); matches the channel-major
        # feature order of conv_general_dilated_patches; BN scale folded in.
        wm = jnp.transpose(w, (2, 0, 1, 3)).reshape(-1, w.shape[-1])
        wm = wm * scale.astype(jnp.float32)[None, :]
        return jnp.pad(wm, ((0, k_pad - wm.shape[0]), (0, 0))).astype(jnp.bfloat16)

    def tap_weight(w, scale):
        # (3,3,Cin,Cout) -> (9*Cin, Cout) stacked per tap t = kh*3 + kw.
        wm = w * scale.astype(jnp.float32)[None, None, None, :]
        return wm.reshape(9 * w.shape[2], w.shape[3]).astype(jnp.bfloat16)

    def shift_row(shift, pad_to=None):
        s = shift.astype(jnp.float32).reshape(1, -1)
        if pad_to is not None:
            s = jnp.pad(s, ((0, 0), (0, pad_to - s.shape[1])))
        return s

    scale1, shift1 = params["bn1"]
    scale2, shift2 = params["bn2"]
    scale3, shift3 = params["blk_bn1"]
    scale4, shift4 = params["blk_bn2"]

    wh = params["final_w"].reshape(c, num_points).astype(jnp.float32)
    wh = jnp.pad(wh, ((0, 0), (0, ch_pad - num_points))).astype(jnp.bfloat16)

    return {
        "p1_w": patch_weight(params["conv1_w"], scale1, k1_pad),
        "b1": shift_row(shift1),
        "s2": jnp.asarray(_selection_matrix(h1, w1, 3, 2, 1), jnp.bfloat16),
        "w2": tap_weight(params["conv2_w"], scale2),
        "b2": shift_row(shift2),
        "s3": jnp.asarray(_selection_matrix(h2, w2, 3, 1, 1), jnp.bfloat16),
        "w3": tap_weight(params["blk_conv1_w"], scale3),
        "b3": shift_row(shift3),
        "w4": tap_weight(params["blk_conv2_w"], scale4),
        "b4": shift_row(shift4),
        "wh": wh,
        "bh": shift_row(params["final_b"], ch_pad),
    }


# ------------------------------ forward pass -------------------------------- #
def main_model_forward(prepared, x_nchw, num_points):
    """MainModel.forward: prediction = pose_net(x); returns NCHW heatmaps."""
    n, _, h, w = x_nchw.shape
    h1, w1 = _conv_out(h, 3, 2, 1), _conv_out(w, 3, 2, 1)
    h2, w2 = _conv_out(h1, 3, 2, 1), _conv_out(w1, 3, 2, 1)
    n_p1, n_p2 = h1 * w1, h2 * w2
    k1_pad, c_mid = prepared["p1_w"].shape
    ch_pad = prepared["wh"].shape[1]

    # Stem conv1 patches via one XLA op on the raw input (channel-major
    # feature order); K zero-padded to a full 128-lane tile.
    x = jnp.transpose(x_nchw, (0, 2, 3, 1)).astype(jnp.bfloat16)   # NCHW -> NHWC
    p1 = lax.conv_general_dilated_patches(
        x, (3, 3), (2, 2), ((1, 1), (1, 1)),
        dimension_numbers=("NHWC", "OIHW", "NHWC")).reshape(n, n_p1, -1)
    p1 = jnp.pad(p1, ((0, 0), (0, 0), (0, k1_pad - p1.shape[-1])))

    kernel = _make_fused_pose_kernel(n_p1, n_p2, c_mid)
    const2 = lambda i: (0, 0)
    in_specs = [
        pl.BlockSpec((1, n_p1, k1_pad), lambda i: (i, 0, 0)),   # per-image patches
        pl.BlockSpec(prepared["p1_w"].shape, const2),
        pl.BlockSpec(prepared["b1"].shape, const2),
        pl.BlockSpec(prepared["s2"].shape, const2),
        pl.BlockSpec(prepared["w2"].shape, const2),
        pl.BlockSpec(prepared["b2"].shape, const2),
        pl.BlockSpec(prepared["s3"].shape, const2),
        pl.BlockSpec(prepared["w3"].shape, const2),
        pl.BlockSpec(prepared["b3"].shape, const2),
        pl.BlockSpec(prepared["w4"].shape, const2),
        pl.BlockSpec(prepared["b4"].shape, const2),
        pl.BlockSpec(prepared["wh"].shape, const2),
        pl.BlockSpec(prepared["bh"].shape, const2),
    ]

    out = pl.pallas_call(
        kernel,
        out_shape=jax.ShapeDtypeStruct((n, n_p2, ch_pad), jnp.float32),
        grid=(n,),
        in_specs=in_specs,
        out_specs=pl.BlockSpec((1, n_p2, ch_pad), lambda i: (i, 0, 0)),
        compiler_params=pltpu.CompilerParams(
            dimension_semantics=("parallel",),          # batch across TCs (v7x)
            vmem_limit_bytes=32 * 1024 * 1024),
    )(p1, prepared["p1_w"], prepared["b1"], prepared["s2"], prepared["w2"],
      prepared["b2"], prepared["s3"], prepared["w3"], prepared["b3"],
      prepared["w4"], prepared["b4"], prepared["wh"], prepared["bh"])

    heat = out[:, :, :num_points].reshape(n, h2, w2, num_points)
    return jnp.transpose(heat, (0, 3, 1, 2))                       # NHWC -> NCHW


# ------------------------- pure-XLA f32 reference --------------------------- #
def reference_forward(params, x_nchw):
    x = jnp.transpose(x_nchw, (0, 2, 3, 1)).astype(jnp.float32)

    def conv_bn(y, w, scale, shift, stride, pad, relu):
        y = lax.conv_general_dilated(
            y, w.astype(jnp.float32), (stride, stride),
            ((pad, pad), (pad, pad)),
            dimension_numbers=("NHWC", "HWIO", "NHWC"))
        y = y * scale + shift
        return jnp.maximum(y, 0.0) if relu else y

    y = conv_bn(x, params["conv1_w"], *params["bn1"], 2, 1, True)
    y = conv_bn(y, params["conv2_w"], *params["bn2"], 2, 1, True)
    r = y
    z = conv_bn(y, params["blk_conv1_w"], *params["blk_bn1"], 1, 1, True)
    z = conv_bn(z, params["blk_conv2_w"], *params["blk_bn2"], 1, 1, False)
    z = jnp.maximum(z + r, 0.0)
    heat = lax.conv_general_dilated(
        z, params["final_w"], (1, 1), ((0, 0), (0, 0)),
        dimension_numbers=("NHWC", "HWIO", "NHWC")) + params["final_b"]
    return jnp.transpose(heat, (0, 3, 1, 2))


if __name__ == "__main__":
    key = jax.random.PRNGKey(0)
    kp, kx = jax.random.split(key)

    num_points = 8
    height = width = 16
    params = init_params(kp, num_points)
    prepared = prepare_params(params, height, width, num_points)

    # small NCHW input consistent with the module's conv stem (RGB image)
    x = jax.random.normal(kx, (2, 3, height, width), jnp.float32)

    fwd = jax.jit(functools.partial(main_model_forward, prepared,
                                    num_points=num_points))
    out = fwd(x)
    jax.block_until_ready(out)

    assert out.shape == (2, num_points, height // 4, width // 4), out.shape
    assert out.dtype == jnp.float32

    # Numerical check vs the f32 XLA reference (kernel uses bf16 MXU operands).
    ref = jax.jit(functools.partial(reference_forward, params))(x)
    err = float(jnp.max(jnp.abs(out - ref)))
    assert err < 1e-1, f"max abs err {err}"

    print("KERNEL_OK")
</pallas_src>

<mosaic_0001>
module attributes {stable_mosaic.version = 11 : i64} {
  func.func @kernel(%arg0: i32, %arg1: memref<1x64x128xbf16, #tpu.memory_space<vmem>>, %arg2: memref<128x32xbf16, #tpu.memory_space<vmem>>, %arg3: memref<1x32xf32, #tpu.memory_space<vmem>>, %arg4: memref<144x64xbf16, #tpu.memory_space<vmem>>, %arg5: memref<288x32xbf16, #tpu.memory_space<vmem>>, %arg6: memref<1x32xf32, #tpu.memory_space<vmem>>, %arg7: memref<144x16xbf16, #tpu.memory_space<vmem>>, %arg8: memref<288x32xbf16, #tpu.memory_space<vmem>>, %arg9: memref<1x32xf32, #tpu.memory_space<vmem>>, %arg10: memref<288x32xbf16, #tpu.memory_space<vmem>>, %arg11: memref<1x32xf32, #tpu.memory_space<vmem>>, %arg12: memref<32x128xbf16, #tpu.memory_space<vmem>>, %arg13: memref<1x128xf32, #tpu.memory_space<vmem>>, %arg14: memref<1x16x128xf32, #tpu.memory_space<vmem>>) attributes {dimension_semantics = [#tpu.dimension_semantics<parallel>], iteration_bounds = array<i64: 2>, scalar_prefetch = 0 : i64, scratch_operands = 0 : i64, tpu.core_type = #tpu.core_type<tc>, window_params = [{transform_indices = @transform_0, window_bounds = array<i64: 1, 64, 128>}, {pipeline_mode = #tpu.pipeline_mode<synchronous>, transform_indices = @transform_1, window_bounds = array<i64: 128, 32>}, {pipeline_mode = #tpu.pipeline_mode<synchronous>, transform_indices = @transform_2, window_bounds = array<i64: 1, 32>}, {pipeline_mode = #tpu.pipeline_mode<synchronous>, transform_indices = @transform_3, window_bounds = array<i64: 144, 64>}, {pipeline_mode = #tpu.pipeline_mode<synchronous>, transform_indices = @transform_4, window_bounds = array<i64: 288, 32>}, {pipeline_mode = #tpu.pipeline_mode<synchronous>, transform_indices = @transform_5, window_bounds = array<i64: 1, 32>}, {pipeline_mode = #tpu.pipeline_mode<synchronous>, transform_indices = @transform_6, window_bounds = array<i64: 144, 16>}, {pipeline_mode = #tpu.pipeline_mode<synchronous>, transform_indices = @transform_7, window_bounds = array<i64: 288, 32>}, {pipeline_mode = #tpu.pipeline_mode<synchronous>, transform_indices = @transform_8, window_bounds = array<i64: 1, 32>}, {pipeline_mode = #tpu.pipeline_mode<synchronous>, transform_indices = @transform_9, window_bounds = array<i64: 288, 32>}, {pipeline_mode = #tpu.pipeline_mode<synchronous>, transform_indices = @transform_10, window_bounds = array<i64: 1, 32>}, {pipeline_mode = #tpu.pipeline_mode<synchronous>, transform_indices = @transform_11, window_bounds = array<i64: 32, 128>}, {pipeline_mode = #tpu.pipeline_mode<synchronous>, transform_indices = @transform_12, window_bounds = array<i64: 1, 128>}, {transform_indices = @transform_13, window_bounds = array<i64: 1, 16, 128>}]} {
    %c0 = arith.constant 0 : index
    %c0_0 = arith.constant 0 : index
    %c0_1 = arith.constant 0 : index
    %0 = vector.load %arg1[%c0, %c0_0, %c0_1] : memref<1x64x128xbf16, #tpu.memory_space<vmem>>, vector<1x64x128xbf16>
    %1 = vector.shape_cast %0 : vector<1x64x128xbf16> to vector<64x128xbf16>
    %c0_2 = arith.constant 0 : index
    %c0_3 = arith.constant 0 : index
    %2 = vector.load %arg2[%c0_2, %c0_3] : memref<128x32xbf16, #tpu.memory_space<vmem>>, vector<128x32xbf16>
    %cst = arith.constant dense<0.000000e+00> : vector<64x32xf32>
    %3 = tpu.matmul %1, %2, %cst {dimension_numbers = #tpu.dot_dimension_numbers<[1], [0], [0], [1], [0, 0, 1, 1], [], []>} : vector<64x128xbf16>, vector<128x32xbf16>, vector<64x32xf32> -> vector<64x32xf32>
    %c0_4 = arith.constant 0 : index
    %c0_5 = arith.constant 0 : index
    %4 = vector.load %arg3[%c0_4, %c0_5] : memref<1x32xf32, #tpu.memory_space<vmem>>, vector<1x32xf32>
    %5 = vector.broadcast %4 : vector<1x32xf32> to vector<64x32xf32>
    %6 = arith.addf %3, %5 : vector<64x32xf32>
    %cst_6 = arith.constant 0.000000e+00 : f32
    %7 = vector.broadcast %cst_6 : f32 to vector<64x32xf32>
    %8 = arith.maximumf %6, %7 : vector<64x32xf32>
    %9 = arith.truncf %8 : vector<64x32xf32> to vector<64x32xbf16>
    %c0_7 = arith.constant 0 : index
    %c0_8 = arith.constant 0 : index
    %10 = vector.load %arg4[%c0_7, %c0_8] : memref<144x64xbf16, #tpu.memory_space<vmem>>, vector<144x64xbf16>
    %cst_9 = arith.constant dense<0.000000e+00> : vector<144x32xf32>
    %11 = tpu.matmul %10, %9, %cst_9 {dimension_numbers = #tpu.dot_dimension_numbers<[1], [0], [0], [1], [0, 0, 1, 1], [], []>} : vector<144x64xbf16>, vector<64x32xbf16>, vector<144x32xf32> -> vector<144x32xf32>
    %12 = arith.truncf %11 : vector<144x32xf32> to vector<144x32xbf16>
    %cst_10 = arith.constant 0.000000e+00 : f32
    %13 = vector.broadcast %cst_10 : f32 to vector<16x32xf32>
    %14 = vector.extract_strided_slice %12 {offsets = [0, 0], sizes = [16, 32], strides = [1, 1]} : vector<144x32xbf16> to vector<16x32xbf16>
    %c0_11 = arith.constant 0 : index
    %c0_12 = arith.constant 0 : index
    %15 = vector.load %arg5[%c0_11, %c0_12] : memref<288x32xbf16, #tpu.memory_space<vmem>>, vector<32x32xbf16>
    %cst_13 = arith.constant dense<0.000000e+00> : vector<16x32xf32>
    %16 = tpu.matmul %14, %15, %cst_13 {dimension_numbers = #tpu.dot_dimension_numbers<[1], [0], [0], [1], [0, 0, 1, 1], [], []>} : vector<16x32xbf16>, vector<32x32xbf16>, vector<16x32xf32> -> vector<16x32xf32>
    %17 = arith.addf %13, %16 : vector<16x32xf32>
    %18 = vector.extract_strided_slice %12 {offsets = [16, 0], sizes = [16, 32], strides = [1, 1]} : vector<144x32xbf16> to vector<16x32xbf16>
    %c32 = arith.constant 32 : index
    %c0_14 = arith.constant 0 : index
    %19 = vector.load %arg5[%c32, %c0_14] : memref<288x32xbf16, #tpu.memory_space<vmem>>, vector<32x32xbf16>
    %cst_15 = arith.constant dense<0.000000e+00> : vector<16x32xf32>
    %20 = tpu.matmul %18, %19, %cst_15 {dimension_numbers = #tpu.dot_dimension_numbers<[1], [0], [0], [1], [0, 0, 1, 1], [], []>} : vector<16x32xbf16>, vector<32x32xbf16>, vector<16x32xf32> -> vector<16x32xf32>
    %21 = arith.addf %17, %20 : vector<16x32xf32>
    %22 = vector.extract_strided_slice %12 {offsets = [32, 0], sizes = [16, 32], strides = [1, 1]} : vector<144x32xbf16> to vector<16x32xbf16>
    %c64 = arith.constant 64 : index
    %c0_16 = arith.constant 0 : index
    %23 = vector.load %arg5[%c64, %c0_16] : memref<288x32xbf16, #tpu.memory_space<vmem>>, vector<32x32xbf16>
    %cst_17 = arith.constant dense<0.000000e+00> : vector<16x32xf32>
    %24 = tpu.matmul %22, %23, %cst_17 {dimension_numbers = #tpu.dot_dimension_numbers<[1], [0], [0], [1], [0, 0, 1, 1], [], []>} : vector<16x32xbf16>, vector<32x32xbf16>, vector<16x32xf32> -> vector<16x32xf32>
    %25 = arith.addf %21, %24 : vector<16x32xf32>
    %26 = vector.extract_strided_slice %12 {offsets = [48, 0], sizes = [16, 32], strides = [1, 1]} : vector<144x32xbf16> to vector<16x32xbf16>
    %c96 = arith.constant 96 : index
    %c0_18 = arith.constant 0 : index
    %27 = vector.load %arg5[%c96, %c0_18] : memref<288x32xbf16, #tpu.memory_space<vmem>>, vector<32x32xbf16>
    %cst_19 = arith.constant dense<0.000000e+00> : vector<16x32xf32>
    %28 = tpu.matmul %26, %27, %cst_19 {dimension_numbers = #tpu.dot_dimension_numbers<[1], [0], [0], [1], [0, 0, 1, 1], [], []>} : vector<16x32xbf16>, vector<32x32xbf16>, vector<16x32xf32> -> vector<16x32xf32>
    %29 = arith.addf %25, %28 : vector<16x32xf32>
    %30 = vector.extract_strided_slice %12 {offsets = [64, 0], sizes = [16, 32], strides = [1, 1]} : vector<144x32xbf16> to vector<16x32xbf16>
    %c128 = arith.constant 128 : index
    %c0_20 = arith.constant 0 : index
    %31 = vector.load %arg5[%c128, %c0_20] : memref<288x32xbf16, #tpu.memory_space<vmem>>, vector<32x32xbf16>
    %cst_21 = arith.constant dense<0.000000e+00> : vector<16x32xf32>
    %32 = tpu.matmul %30, %31, %cst_21 {dimension_numbers = #tpu.dot_dimension_numbers<[1], [0], [0], [1], [0, 0, 1, 1], [], []>} : vector<16x32xbf16>, vector<32x32xbf16>, vector<16x32xf32> -> vector<16x32xf32>
    %33 = arith.addf %29, %32 : vector<16x32xf32>
    %34 = vector.extract_strided_slice %12 {offsets = [80, 0], sizes = [16, 32], strides = [1, 1]} : vector<144x32xbf16> to vector<16x32xbf16>
    %c160 = arith.constant 160 : index
    %c0_22 = arith.constant 0 : index
    %35 = vector.load %arg5[%c160, %c0_22] : memref<288x32xbf16, #tpu.memory_space<vmem>>, vector<32x32xbf16>
    %cst_23 = arith.constant dense<0.000000e+00> : vector<16x32xf32>
    %36 = tpu.matmul %34, %35, %cst_23 {dimension_numbers = #tpu.dot_dimension_numbers<[1], [0], [0], [1], [0, 0, 1, 1], [], []>} : vector<16x32xbf16>, vector<32x32xbf16>, vector<16x32xf32> -> vector<16x32xf32>
    %37 = arith.addf %33, %36 : vector<16x32xf32>
    %38 = vector.extract_strided_slice %12 {offsets = [96, 0], sizes = [16, 32], strides = [1, 1]} : vector<144x32xbf16> to vector<16x32xbf16>
    %c192 = arith.constant 192 : index
    %c0_24 = arith.constant 0 : index
    %39 = vector.load %arg5[%c192, %c0_24] : memref<288x32xbf16, #tpu.memory_space<vmem>>, vector<32x32xbf16>
    %cst_25 = arith.constant dense<0.000000e+00> : vector<16x32xf32>
    %40 = tpu.matmul %38, %39, %cst_25 {dimension_numbers = #tpu.dot_dimension_numbers<[1], [0], [0], [1], [0, 0, 1, 1], [], []>} : vector<16x32xbf16>, vector<32x32xbf16>, vector<16x32xf32> -> vector<16x32xf32>
    %41 = arith.addf %37, %40 : vector<16x32xf32>
    %42 = vector.extract_strided_slice %12 {offsets = [112, 0], sizes = [16, 32], strides = [1, 1]} : vector<144x32xbf16> to vector<16x32xbf16>
    %c224 = arith.constant 224 : index
    %c0_26 = arith.constant 0 : index
    %43 = vector.load %arg5[%c224, %c0_26] : memref<288x32xbf16, #tpu.memory_space<vmem>>, vector<32x32xbf16>
    %cst_27 = arith.constant dense<0.000000e+00> : vector<16x32xf32>
    %44 = tpu.matmul %42, %43, %cst_27 {dimension_numbers = #tpu.dot_dimension_numbers<[1], [0], [0], [1], [0, 0, 1, 1], [], []>} : vector<16x32xbf16>, vector<32x32xbf16>, vector<16x32xf32> -> vector<16x32xf32>
    %45 = arith.addf %41, %44 : vector<16x32xf32>
    %46 = vector.extract_strided_slice %12 {offsets = [128, 0], sizes = [16, 32], strides = [1, 1]} : vector<144x32xbf16> to vector<16x32xbf16>
    %c256 = arith.constant 256 : index
    %c0_28 = arith.constant 0 : index
    %47 = vector.load %arg5[%c256, %c0_28] : memref<288x32xbf16, #tpu.memory_space<vmem>>, vector<32x32xbf16>
    %cst_29 = arith.constant dense<0.000000e+00> : vector<16x32xf32>
    %48 = tpu.matmul %46, %47, %cst_29 {dimension_numbers = #tpu.dot_dimension_numbers<[1], [0], [0], [1], [0, 0, 1, 1], [], []>} : vector<16x32xbf16>, vector<32x32xbf16>, vector<16x32xf32> -> vector<16x32xf32>
    %49 = arith.addf %45, %48 : vector<16x32xf32>
    %c0_30 = arith.constant 0 : index
    %c0_31 = arith.constant 0 : index
    %50 = vector.load %arg6[%c0_30, %c0_31] : memref<1x32xf32, #tpu.memory_space<vmem>>, vector<1x32xf32>
    %51 = vector.broadcast %50 : vector<1x32xf32> to vector<16x32xf32>
    %52 = arith.addf %49, %51 : vector<16x32xf32>
    %cst_32 = arith.constant 0.000000e+00 : f32
    %53 = vector.broadcast %cst_32 : f32 to vector<16x32xf32>
    %54 = arith.maximumf %52, %53 : vector<16x32xf32>
    %55 = arith.truncf %54 : vector<16x32xf32> to vector<16x32xbf16>
    %c0_33 = arith.constant 0 : index
    %c0_34 = arith.constant 0 : index
    %56 = vector.load %arg7[%c0_33, %c0_34] : memref<144x16xbf16, #tpu.memory_space<vmem>>, vector<144x16xbf16>
    %cst_35 = arith.constant dense<0.000000e+00> : vector<144x32xf32>
    %57 = tpu.matmul %56, %55, %cst_35 {dimension_numbers = #tpu.dot_dimension_numbers<[1], [0], [0], [1], [0, 0, 1, 1], [], []>} : vector<144x16xbf16>, vector<16x32xbf16>, vector<144x32xf32> -> vector<144x32xf32>
    %58 = arith.truncf %57 : vector<144x32xf32> to vector<144x32xbf16>
    %cst_36 = arith.constant 0.000000e+00 : f32
    %59 = vector.broadcast %cst_36 : f32 to vector<16x32xf32>
    %60 = vector.extract_strided_slice %58 {offsets = [0, 0], sizes = [16, 32], strides = [1, 1]} : vector<144x32xbf16> to vector<16x32xbf16>
    %c0_37 = arith.constant 0 : index
    %c0_38 = arith.constant 0 : index
    %61 = vector.load %arg8[%c0_37, %c0_38] : memref<288x32xbf16, #tpu.memory_space<vmem>>, vector<32x32xbf16>
    %cst_39 = arith.constant dense<0.000000e+00> : vector<16x32xf32>
    %62 = tpu.matmul %60, %61, %cst_39 {dimension_numbers = #tpu.dot_dimension_numbers<[1], [0], [0], [1], [0, 0, 1, 1], [], []>} : vector<16x32xbf16>, vector<32x32xbf16>, vector<16x32xf32> -> vector<16x32xf32>
    %63 = arith.addf %59, %62 : vector<16x32xf32>
    %64 = vector.extract_strided_slice %58 {offsets = [16, 0], sizes = [16, 32], strides = [1, 1]} : vector<144x32xbf16> to vector<16x32xbf16>
    %c32_40 = arith.constant 32 : index
    %c0_41 = arith.constant 0 : index
    %65 = vector.load %arg8[%c32_40, %c0_41] : memref<288x32xbf16, #tpu.memory_space<vmem>>, vector<32x32xbf16>
    %cst_42 = arith.constant dense<0.000000e+00> : vector<16x32xf32>
    %66 = tpu.matmul %64, %65, %cst_42 {dimension_numbers = #tpu.dot_dimension_numbers<[1], [0], [0], [1], [0, 0, 1, 1], [], []>} : vector<16x32xbf16>, vector<32x32xbf16>, vector<16x32xf32> -> vector<16x32xf32>
    %67 = arith.addf %63, %66 : vector<16x32xf32>
    %68 = vector.extract_strided_slice %58 {offsets = [32, 0], sizes = [16, 32], strides = [1, 1]} : vector<144x32xbf16> to vector<16x32xbf16>
    %c64_43 = arith.constant 64 : index
    %c0_44 = arith.constant 0 : index
    %69 = vector.load %arg8[%c64_43, %c0_44] : memref<288x32xbf16, #tpu.memory_space<vmem>>, vector<32x32xbf16>
    %cst_45 = arith.constant dense<0.000000e+00> : vector<16x32xf32>
    %70 = tpu.matmul %68, %69, %cst_45 {dimension_numbers = #tpu.dot_dimension_numbers<[1], [0], [0], [1], [0, 0, 1, 1], [], []>} : vector<16x32xbf16>, vector<32x32xbf16>, vector<16x32xf32> -> vector<16x32xf32>
    %71 = arith.addf %67, %70 : vector<16x32xf32>
    %72 = vector.extract_strided_slice %58 {offsets = [48, 0], sizes = [16, 32], strides = [1, 1]} : vector<144x32xbf16> to vector<16x32xbf16>
    %c96_46 = arith.constant 96 : index
    %c0_47 = arith.constant 0 : index
    %73 = vector.load %arg8[%c96_46, %c0_47] : memref<288x32xbf16, #tpu.memory_space<vmem>>, vector<32x32xbf16>
    %cst_48 = arith.constant dense<0.000000e+00> : vector<16x32xf32>
    %74 = tpu.matmul %72, %73, %cst_48 {dimension_numbers = #tpu.dot_dimension_numbers<[1], [0], [0], [1], [0, 0, 1, 1], [], []>} : vector<16x32xbf16>, vector<32x32xbf16>, vector<16x32xf32> -> vector<16x32xf32>
    %75 = arith.addf %71, %74 : vector<16x32xf32>
    %76 = vector.extract_strided_slice %58 {offsets = [64, 0], sizes = [16, 32], strides = [1, 1]} : vector<144x32xbf16> to vector<16x32xbf16>
    %c128_49 = arith.constant 128 : index
    %c0_50 = arith.constant 0 : index
    %77 = vector.load %arg8[%c128_49, %c0_50] : memref<288x32xbf16, #tpu.memory_space<vmem>>, vector<32x32xbf16>
    %cst_51 = arith.constant dense<0.000000e+00> : vector<16x32xf32>
    %78 = tpu.matmul %76, %77, %cst_51 {dimension_numbers = #tpu.dot_dimension_numbers<[1], [0], [0], [1], [0, 0, 1, 1], [], []>} : vector<16x32xbf16>, vector<32x32xbf16>, vector<16x32xf32> -> vector<16x32xf32>
    %79 = arith.addf %75, %78 : vector<16x32xf32>
    %80 = vector.extract_strided_slice %58 {offsets = [80, 0], sizes = [16, 32], strides = [1, 1]} : vector<144x32xbf16> to vector<16x32xbf16>
    %c160_52 = arith.constant 160 : index
    %c0_53 = arith.constant 0 : index
    %81 = vector.load %arg8[%c160_52, %c0_53] : memref<288x32xbf16, #tpu.memory_space<vmem>>, vector<32x32xbf16>
    %cst_54 = arith.constant dense<0.000000e+00> : vector<16x32xf32>
    %82 = tpu.matmul %80, %81, %cst_54 {dimension_numbers = #tpu.dot_dimension_numbers<[1], [0], [0], [1], [0, 0, 1, 1], [], []>} : vector<16x32xbf16>, vector<32x32xbf16>, vector<16x32xf32> -> vector<16x32xf32>
    %83 = arith.addf %79, %82 : vector<16x32xf32>
    %84 = vector.extract_strided_slice %58 {offsets = [96, 0], sizes = [16, 32], strides = [1, 1]} : vector<144x32xbf16> to vector<16x32xbf16>
    %c192_55 = arith.constant 192 : index
    %c0_56 = arith.constant 0 : index
    %85 = vector.load %arg8[%c192_55, %c0_56] : memref<288x32xbf16, #tpu.memory_space<vmem>>, vector<32x32xbf16>
    %cst_57 = arith.constant dense<0.000000e+00> : vector<16x32xf32>
    %86 = tpu.matmul %84, %85, %cst_57 {dimension_numbers = #tpu.dot_dimension_numbers<[1], [0], [0], [1], [0, 0, 1, 1], [], []>} : vector<16x32xbf16>, vector<32x32xbf16>, vector<16x32xf32> -> vector<16x32xf32>
    %87 = arith.addf %83, %86 : vector<16x32xf32>
    %88 = vector.extract_strided_slice %58 {offsets = [112, 0], sizes = [16, 32], strides = [1, 1]} : vector<144x32xbf16> to vector<16x32xbf16>
    %c224_58 = arith.constant 224 : index
    %c0_59 = arith.constant 0 : index
    %89 = vector.load %arg8[%c224_58, %c0_59] : memref<288x32xbf16, #tpu.memory_space<vmem>>, vector<32x32xbf16>
    %cst_60 = arith.constant dense<0.000000e+00> : vector<16x32xf32>
    %90 = tpu.matmul %88, %89, %cst_60 {dimension_numbers = #tpu.dot_dimension_numbers<[1], [0], [0], [1], [0, 0, 1, 1], [], []>} : vector<16x32xbf16>, vector<32x32xbf16>, vector<16x32xf32> -> vector<16x32xf32>
    %91 = arith.addf %87, %90 : vector<16x32xf32>
    %92 = vector.extract_strided_slice %58 {offsets = [128, 0], sizes = [16, 32], strides = [1, 1]} : vector<144x32xbf16> to vector<16x32xbf16>
    %c256_61 = arith.constant 256 : index
    %c0_62 = arith.constant 0 : index
    %93 = vector.load %arg8[%c256_61, %c0_62] : memref<288x32xbf16, #tpu.memory_space<vmem>>, vector<32x32xbf16>
    %cst_63 = arith.constant dense<0.000000e+00> : vector<16x32xf32>
    %94 = tpu.matmul %92, %93, %cst_63 {dimension_numbers = #tpu.dot_dimension_numbers<[1], [0], [0], [1], [0, 0, 1, 1], [], []>} : vector<16x32xbf16>, vector<32x32xbf16>, vector<16x32xf32> -> vector<16x32xf32>
    %95 = arith.addf %91, %94 : vector<16x32xf32>
    %c0_64 = arith.constant 0 : index
    %c0_65 = arith.constant 0 : index
    %96 = vector.load %arg9[%c0_64, %c0_65] : memref<1x32xf32, #tpu.memory_space<vmem>>, vector<1x32xf32>
    %97 = vector.broadcast %96 : vector<1x32xf32> to vector<16x32xf32>
    %98 = arith.addf %95, %97 : vector<16x32xf32>
    %cst_66 = arith.constant 0.000000e+00 : f32
    %99 = vector.broadcast %cst_66 : f32 to vector<16x32xf32>
    %100 = arith.maximumf %98, %99 : vector<16x32xf32>
    %101 = arith.truncf %100 : vector<16x32xf32> to vector<16x32xbf16>
    %c0_67 = arith.constant 0 : index
    %c0_68 = arith.constant 0 : index
    %102 = vector.load %arg7[%c0_67, %c0_68] : memref<144x16xbf16, #tpu.memory_space<vmem>>, vector<144x16xbf16>
    %cst_69 = arith.constant dense<0.000000e+00> : vector<144x32xf32>
    %103 = tpu.matmul %102, %101, %cst_69 {dimension_numbers = #tpu.dot_dimension_numbers<[1], [0], [0], [1], [0, 0, 1, 1], [], []>} : vector<144x16xbf16>, vector<16x32xbf16>, vector<144x32xf32> -> vector<144x32xf32>
    %104 = arith.truncf %103 : vector<144x32xf32> to vector<144x32xbf16>
    %cst_70 = arith.constant 0.000000e+00 : f32
    %105 = vector.broadcast %cst_70 : f32 to vector<16x32xf32>
    %106 = vector.extract_strided_slice %104 {offsets = [0, 0], sizes = [16, 32], strides = [1, 1]} : vector<144x32xbf16> to vector<16x32xbf16>
    %c0_71 = arith.constant 0 : index
    %c0_72 = arith.constant 0 : index
    %107 = vector.load %arg10[%c0_71, %c0_72] : memref<288x32xbf16, #tpu.memory_space<vmem>>, vector<32x32xbf16>
    %cst_73 = arith.constant dense<0.000000e+00> : vector<16x32xf32>
    %108 = tpu.matmul %106, %107, %cst_73 {dimension_numbers = #tpu.dot_dimension_numbers<[1], [0], [0], [1], [0, 0, 1, 1], [], []>} : vector<16x32xbf16>, vector<32x32xbf16>, vector<16x32xf32> -> vector<16x32xf32>
    %109 = arith.addf %105, %108 : vector<16x32xf32>
    %110 = vector.extract_strided_slice %104 {offsets = [16, 0], sizes = [16, 32], strides = [1, 1]} : vector<144x32xbf16> to vector<16x32xbf16>
    %c32_74 = arith.constant 32 : index
    %c0_75 = arith.constant 0 : index
    %111 = vector.load %arg10[%c32_74, %c0_75] : memref<288x32xbf16, #tpu.memory_space<vmem>>, vector<32x32xbf16>
    %cst_76 = arith.constant dense<0.000000e+00> : vector<16x32xf32>
    %112 = tpu.matmul %110, %111, %cst_76 {dimension_numbers = #tpu.dot_dimension_numbers<[1], [0], [0], [1], [0, 0, 1, 1], [], []>} : vector<16x32xbf16>, vector<32x32xbf16>, vector<16x32xf32> -> vector<16x32xf32>
    %113 = arith.addf %109, %112 : vector<16x32xf32>
    %114 = vector.extract_strided_slice %104 {offsets = [32, 0], sizes = [16, 32], strides = [1, 1]} : vector<144x32xbf16> to vector<16x32xbf16>
    %c64_77 = arith.constant 64 : index
    %c0_78 = arith.constant 0 : index
    %115 = vector.load %arg10[%c64_77, %c0_78] : memref<288x32xbf16, #tpu.memory_space<vmem>>, vector<32x32xbf16>
    %cst_79 = arith.constant dense<0.000000e+00> : vector<16x32xf32>
    %116 = tpu.matmul %114, %115, %cst_79 {dimension_numbers = #tpu.dot_dimension_numbers<[1], [0], [0], [1], [0, 0, 1, 1], [], []>} : vector<16x32xbf16>, vector<32x32xbf16>, vector<16x32xf32> -> vector<16x32xf32>
    %117 = arith.addf %113, %116 : vector<16x32xf32>
    %118 = vector.extract_strided_slice %104 {offsets = [48, 0], sizes = [16, 32], strides = [1, 1]} : vector<144x32xbf16> to vector<16x32xbf16>
    %c96_80 = arith.constant 96 : index
    %c0_81 = arith.constant 0 : index
    %119 = vector.load %arg10[%c96_80, %c0_81] : memref<288x32xbf16, #tpu.memory_space<vmem>>, vector<32x32xbf16>
    %cst_82 = arith.constant dense<0.000000e+00> : vector<16x32xf32>
    %120 = tpu.matmul %118, %119, %cst_82 {dimension_numbers = #tpu.dot_dimension_numbers<[1], [0], [0], [1], [0, 0, 1, 1], [], []>} : vector<16x32xbf16>, vector<32x32xbf16>, vector<16x32xf32> -> vector<16x32xf32>
    %121 = arith.addf %117, %120 : vector<16x32xf32>
    %122 = vector.extract_strided_slice %104 {offsets = [64, 0], sizes = [16, 32], strides = [1, 1]} : vector<144x32xbf16> to vector<16x32xbf16>
    %c128_83 = arith.constant 128 : index
    %c0_84 = arith.constant 0 : index
    %123 = vector.load %arg10[%c128_83, %c0_84] : memref<288x32xbf16, #tpu.memory_space<vmem>>, vector<32x32xbf16>
    %cst_85 = arith.constant dense<0.000000e+00> : vector<16x32xf32>
    %124 = tpu.matmul %122, %123, %cst_85 {dimension_numbers = #tpu.dot_dimension_numbers<[1], [0], [0], [1], [0, 0, 1, 1], [], []>} : vector<16x32xbf16>, vector<32x32xbf16>, vector<16x32xf32> -> vector<16x32xf32>
    %125 = arith.addf %121, %124 : vector<16x32xf32>
    %126 = vector.extract_strided_slice %104 {offsets = [80, 0], sizes = [16, 32], strides = [1, 1]} : vector<144x32xbf16> to vector<16x32xbf16>
    %c160_86 = arith.constant 160 : index
    %c0_87 = arith.constant 0 : index
    %127 = vector.load %arg10[%c160_86, %c0_87] : memref<288x32xbf16, #tpu.memory_space<vmem>>, vector<32x32xbf16>
    %cst_88 = arith.constant dense<0.000000e+00> : vector<16x32xf32>
    %128 = tpu.matmul %126, %127, %cst_88 {dimension_numbers = #tpu.dot_dimension_numbers<[1], [0], [0], [1], [0, 0, 1, 1], [], []>} : vector<16x32xbf16>, vector<32x32xbf16>, vector<16x32xf32> -> vector<16x32xf32>
    %129 = arith.addf %125, %128 : vector<16x32xf32>
    %130 = vector.extract_strided_slice %104 {offsets = [96, 0], sizes = [16, 32], strides = [1, 1]} : vector<144x32xbf16> to vector<16x32xbf16>
    %c192_89 = arith.constant 192 : index
    %c0_90 = arith.constant 0 : index
    %131 = vector.load %arg10[%c192_89, %c0_90] : memref<288x32xbf16, #tpu.memory_space<vmem>>, vector<32x32xbf16>
    %cst_91 = arith.constant dense<0.000000e+00> : vector<16x32xf32>
    %132 = tpu.matmul %130, %131, %cst_91 {dimension_numbers = #tpu.dot_dimension_numbers<[1], [0], [0], [1], [0, 0, 1, 1], [], []>} : vector<16x32xbf16>, vector<32x32xbf16>, vector<16x32xf32> -> vector<16x32xf32>
    %133 = arith.addf %129, %132 : vector<16x32xf32>
    %134 = vector.extract_strided_slice %104 {offsets = [112, 0], sizes = [16, 32], strides = [1, 1]} : vector<144x32xbf16> to vector<16x32xbf16>
    %c224_92 = arith.constant 224 : index
    %c0_93 = arith.constant 0 : index
    %135 = vector.load %arg10[%c224_92, %c0_93] : memref<288x32xbf16, #tpu.memory_space<vmem>>, vector<32x32xbf16>
    %cst_94 = arith.constant dense<0.000000e+00> : vector<16x32xf32>
    %136 = tpu.matmul %134, %135, %cst_94 {dimension_numbers = #tpu.dot_dimension_numbers<[1], [0], [0], [1], [0, 0, 1, 1], [], []>} : vector<16x32xbf16>, vector<32x32xbf16>, vector<16x32xf32> -> vector<16x32xf32>
    %137 = arith.addf %133, %136 : vector<16x32xf32>
    %138 = vector.extract_strided_slice %104 {offsets = [128, 0], sizes = [16, 32], strides = [1, 1]} : vector<144x32xbf16> to vector<16x32xbf16>
    %c256_95 = arith.constant 256 : index
    %c0_96 = arith.constant 0 : index
    %139 = vector.load %arg10[%c256_95, %c0_96] : memref<288x32xbf16, #tpu.memory_space<vmem>>, vector<32x32xbf16>
    %cst_97 = arith.constant dense<0.000000e+00> : vector<16x32xf32>
    %140 = tpu.matmul %138, %139, %cst_97 {dimension_numbers = #tpu.dot_dimension_numbers<[1], [0], [0], [1], [0, 0, 1, 1], [], []>} : vector<16x32xbf16>, vector<32x32xbf16>, vector<16x32xf32> -> vector<16x32xf32>
    %141 = arith.addf %137, %140 : vector<16x32xf32>
    %c0_98 = arith.constant 0 : index
    %c0_99 = arith.constant 0 : index
    %142 = vector.load %arg11[%c0_98, %c0_99] : memref<1x32xf32, #tpu.memory_space<vmem>>, vector<1x32xf32>
    %143 = vector.broadcast %142 : vector<1x32xf32> to vector<16x32xf32>
    %144 = arith.addf %141, %143 : vector<16x32xf32>
    %145 = arith.addf %144, %54 : vector<16x32xf32>
    %cst_100 = arith.constant 0.000000e+00 : f32
    %146 = vector.broadcast %cst_100 : f32 to vector<16x32xf32>
    %147 = arith.maximumf %145, %146 : vector<16x32xf32>
    %148 = arith.truncf %147 : vector<16x32xf32> to vector<16x32xbf16>
    %c0_101 = arith.constant 0 : index
    %c0_102 = arith.constant 0 : index
    %149 = vector.load %arg12[%c0_101, %c0_102] : memref<32x128xbf16, #tpu.memory_space<vmem>>, vector<32x128xbf16>
    %cst_103 = arith.constant dense<0.000000e+00> : vector<16x128xf32>
    %150 = tpu.matmul %148, %149, %cst_103 {dimension_numbers = #tpu.dot_dimension_numbers<[1], [0], [0], [1], [0, 0, 1, 1], [], []>} : vector<16x32xbf16>, vector<32x128xbf16>, vector<16x128xf32> -> vector<16x128xf32>
    %c0_104 = arith.constant 0 : index
    %c0_105 = arith.constant 0 : index
    %151 = vector.load %arg13[%c0_104, %c0_105] : memref<1x128xf32, #tpu.memory_space<vmem>>, vector<1x128xf32>
    %152 = vector.broadcast %151 : vector<1x128xf32> to vector<16x128xf32>
    %153 = arith.addf %150, %152 : vector<16x128xf32>
    %c0_106 = arith.constant 0 : index
    %c0_107 = arith.constant 0 : index
    %c0_108 = arith.constant 0 : index
    %154 = vector.load %arg14[%c0_106, %c0_107, %c0_108] : memref<1x16x128xf32, #tpu.memory_space<vmem>>, vector<1x16x128xf32>
    %155 = vector.shape_cast %154 : vector<1x16x128xf32> to vector<16x128xf32>
    %156 = vector.shape_cast %153 : vector<16x128xf32> to vector<1x16x128xf32>
    tpu.vector_store %arg14[%c0_106, %c0_107, %c0_108], %156 {strides = array<i32>} : memref<1x16x128xf32, #tpu.memory_space<vmem>>, vector<1x16x128xf32>,
    return
  }
  func.func @transform_0(%arg0: i32) -> (i32, i32, i32) {
    %c0_i32 = arith.constant 0 : i32
    %c0_i32_0 = arith.constant 0 : i32
    %c0_i32_1 = arith.constant 0 : i32
    return %arg0, %c0_i32, %c0_i32_0 : i32, i32, i32
  }
  func.func @transform_1(%arg0: i32) -> (i32, i32) {
    %c0_i32 = arith.constant 0 : i32
    %c0_i32_0 = arith.constant 0 : i32
    %c0_i32_1 = arith.constant 0 : i32
    return %c0_i32, %c0_i32_0 : i32, i32
  }
  func.func @transform_2(%arg0: i32) -> (i32, i32) {
    %c0_i32 = arith.constant 0 : i32
    %c0_i32_0 = arith.constant 0 : i32
    %c0_i32_1 = arith.constant 0 : i32
    return %c0_i32, %c0_i32_0 : i32, i32
  }
  func.func @transform_3(%arg0: i32) -> (i32, i32) {
    %c0_i32 = arith.constant 0 : i32
    %c0_i32_0 = arith.constant 0 : i32
    %c0_i32_1 = arith.constant 0 : i32
    return %c0_i32, %c0_i32_0 : i32, i32
  }
  func.func @transform_4(%arg0: i32) -> (i32, i32) {
    %c0_i32 = arith.constant 0 : i32
    %c0_i32_0 = arith.constant 0 : i32
    %c0_i32_1 = arith.constant 0 : i32
    return %c0_i32, %c0_i32_0 : i32, i32
  }
  func.func @transform_5(%arg0: i32) -> (i32, i32) {
    %c0_i32 = arith.constant 0 : i32
    %c0_i32_0 = arith.constant 0 : i32
    %c0_i32_1 = arith.constant 0 : i32
    return %c0_i32, %c0_i32_0 : i32, i32
  }
  func.func @transform_6(%arg0: i32) -> (i32, i32) {
    %c0_i32 = arith.constant 0 : i32
    %c0_i32_0 = arith.constant 0 : i32
    %c0_i32_1 = arith.constant 0 : i32
    return %c0_i32, %c0_i32_0 : i32, i32
  }
  func.func @transform_7(%arg0: i32) -> (i32, i32) {
    %c0_i32 = arith.constant 0 : i32
    %c0_i32_0 = arith.constant 0 : i32
    %c0_i32_1 = arith.constant 0 : i32
    return %c0_i32, %c0_i32_0 : i32, i32
  }
  func.func @transform_8(%arg0: i32) -> (i32, i32) {
    %c0_i32 = arith.constant 0 : i32
    %c0_i32_0 = arith.constant 0 : i32
    %c0_i32_1 = arith.constant 0 : i32
    return %c0_i32, %c0_i32_0 : i32, i32
  }
  func.func @transform_9(%arg0: i32) -> (i32, i32) {
    %c0_i32 = arith.constant 0 : i32
    %c0_i32_0 = arith.constant 0 : i32
    %c0_i32_1 = arith.constant 0 : i32
    return %c0_i32, %c0_i32_0 : i32, i32
  }
  func.func @transform_10(%arg0: i32) -> (i32, i32) {
    %c0_i32 = arith.constant 0 : i32
    %c0_i32_0 = arith.constant 0 : i32
    %c0_i32_1 = arith.constant 0 : i32
    return %c0_i32, %c0_i32_0 : i32, i32
  }
  func.func @transform_11(%arg0: i32) -> (i32, i32) {
    %c0_i32 = arith.constant 0 : i32
    %c0_i32_0 = arith.constant 0 : i32
    %c0_i32_1 = arith.constant 0 : i32
    return %c0_i32, %c0_i32_0 : i32, i32
  }
  func.func @transform_12(%arg0: i32) -> (i32, i32) {
    %c0_i32 = arith.constant 0 : i32
    %c0_i32_0 = arith.constant 0 : i32
    %c0_i32_1 = arith.constant 0 : i32
    return %c0_i32, %c0_i32_0 : i32, i32
  }
  func.func @transform_13(%arg0: i32) -> (i32, i32, i32) {
    %c0_i32 = arith.constant 0 : i32
    %c0_i32_0 = arith.constant 0 : i32
    %c0_i32_1 = arith.constant 0 : i32
    return %arg0, %c0_i32, %c0_i32_0 : i32, i32, i32
  }
}

</mosaic_0001>

<llo_original>
// kernel: main_model_forward.1
$region0: #{main_model_forward.1}
  #allocation0 [shape = 'u32[]', space=smem, size = 0x4, offset = 0x4, fixed_abs, tag = 'smem constant byte address 0x4 - core index']
  #allocation1 [shape = 'u32[144,128]{1,0:T(1,128)}', space=vmem, size = 0x12000, scoped, tag = 'internal scratch']
  %s0 = inlined_call_operand.vmem [shape: bf16[2,64,128], index: 0, kind: input, shape index: {}]
  %s1 = inlined_call_operand.vmem [shape: bf16[128,32], index: 1, kind: input, shape index: {}]
  %s2 = inlined_call_operand.vmem [shape: f32[1,32], index: 2, kind: input, shape index: {}]
  %s3 = inlined_call_operand.vmem [shape: bf16[144,64], index: 3, kind: input, shape index: {}]
  %s4 = inlined_call_operand.vmem [shape: bf16[288,32], index: 4, kind: input, shape index: {}]
  %s5 = inlined_call_operand.vmem [shape: f32[1,32], index: 5, kind: input, shape index: {}]
  %s6 = inlined_call_operand.vmem [shape: bf16[144,16], index: 6, kind: input, shape index: {}]
  %s7 = inlined_call_operand.vmem [shape: bf16[288,32], index: 7, kind: input, shape index: {}]
  %s8 = inlined_call_operand.vmem [shape: f32[1,32], index: 8, kind: input, shape index: {}]
  %s9 = inlined_call_operand.vmem [shape: bf16[288,32], index: 9, kind: input, shape index: {}]
  %s10 = inlined_call_operand.vmem [shape: f32[1,32], index: 10, kind: input, shape index: {}]
  %s11 = inlined_call_operand.vmem [shape: bf16[32,128], index: 11, kind: input, shape index: {}]
  %s12 = inlined_call_operand.vmem [shape: f32[1,128], index: 12, kind: input, shape index: {}]
  %s13 = inlined_call_operand.hbm [shape: f32[2,16,128], index: 13, kind: output, shape index: {}]
  %s14 = sld [smem:[#allocation0]]
  $region85: #{main_model_forward.1} parent=0
    _
  %s16 = ssub.s32 1, %s14
  %s17 = scalar_select 0, %s16, %s14
  $region1: #{main_model_forward.1} parent=0
    #allocation2 [shape = 'u8[16384]{0}', space=vmem, size = 0x4000, scoped, tag = 'output window, operand 0']
    #allocation3 [shape = 's32[2]{0}', space=sflag, size = 0x8, scoped, tag = 'scoped memory for main_model_forward.1']
    %18 = vsyncpa [#allocation3], 0
    %s19 = scalar_lea.sflag [#allocation3], 1
    %20 = vsyncpa %s19, 0
    loop: start=0, step=1, limit=4
    $region2: #{main_model_forward.1} parent=1 // loop_pre_header
      _
    $region3: #{main_model_forward.1} parent=1 // loop_header
      %s22 = sphi 0, %s26
      %p23 = scmp.ge.s32.totalorder %s22, 4
      %s32 = sphi 0, %s34
      %s35 = sphi 0, %s32
      %s36 = sphi 0, %s35
      %s52 = sphi 0, %s36
      %s56 = sphi 0, %s56
      %s58 = sphi 0, %s56
      %s59 = sphi 0, %s58
      %s73 = sphi 0, %s59
      %s77 = sphi 0, %s77
      %s79 = sphi 0, %s77
      %s80 = sphi 0, %s79
      %s94 = sphi 0, %s80
      %s98 = sphi 0, %s98
      %s100 = sphi 0, %s98
      %s101 = sphi 0, %s100
      %s115 = sphi 0, %s101
      %s119 = sphi 0, %s119
      %s121 = sphi 0, %s119
      %s122 = sphi 0, %s121
      %s136 = sphi 0, %s122
      %s140 = sphi 0, %s140
      %s142 = sphi 0, %s140
      %s143 = sphi 0, %s142
      %s157 = sphi 0, %s143
      %s161 = sphi 0, %s161
      %s163 = sphi 0, %s161
      %s164 = sphi 0, %s163
      %s178 = sphi 0, %s164
      %s182 = sphi 0, %s182
      %s184 = sphi 0, %s182
      %s185 = sphi 0, %s184
      %s199 = sphi 0, %s185
      %s203 = sphi 0, %s203
      %s205 = sphi 0, %s203
      %s206 = sphi 0, %s205
      %s220 = sphi 0, %s206
      %s224 = sphi 0, %s224
      %s226 = sphi 0, %s224
      %s227 = sphi 0, %s226
      %s241 = sphi 0, %s227
      %s245 = sphi 0, %s245
      %s247 = sphi 0, %s245
      %s248 = sphi 0, %s247
      %s262 = sphi 0, %s248
      %s266 = sphi 0, %s266
      %s268 = sphi 0, %s266
      %s269 = sphi 0, %s268
      %s283 = sphi 0, %s269
      %s287 = sphi 0, %s287
      %s289 = sphi 0, %s287
      %s290 = sphi 0, %s289
      %s304 = sphi 0, %s290
      %s310 = sphi 0, %s312
      %s313 = sphi 0, %s310
      %s314 = sphi 0, %s313
      %s330 = sphi 0, %s314
    $region4: #{main_model_forward.1} parent=1 // loop_header_branch
      %25 = sbr.rel (%p23) target = $region8
    $region5: #{main_model_forward.1} parent=1 // loop_body
      %s27 = ssub.s32 %s22, 1
      %s28 = ssub.s32 %s22, 2
      %s29 = sadd.s32 %s22, 1
      %s30 = ssub.s32 %s22, %s29
      %p31 = scmp.eq.s32.totalorder %s30, 0
      %s33 = sadd.s32 %s32, 1
      %s34 = scalar_select %p31, %s32, %s33
      %p37 = pneg %p31
      %p38 = scmp.eq.s32.totalorder %s22, 1
      %p39 = por %p37, %p38
      %p40 = scmp.ne.s32.totalorder %s32, %s35
      %p41 = scmp.eq.s32.totalorder %s22, 0
      %p42 = por %p40, %p41
      %p43 = scmp.ne.s32.totalorder %s32, %s35
      %p44 = scmp.eq.s32.totalorder %s27, 1
      %p45 = por %p43, %p44
      %p46 = scmp.ne.s32.totalorder %s35, %s36
      %p47 = scmp.eq.s32.totalorder %s27, 0
      %p48 = por %p46, %p47
      %p49 = scmp.ne.s32.totalorder %s35, %s36
      %p50 = scmp.eq.s32.totalorder %s28, 1
      %p51 = por %p49, %p50
      %p53 = scmp.ne.s32.totalorder %s36, %s52
      %p54 = scmp.eq.s32.totalorder %s28, 0
      %p55 = por %p53, %p54
      %s57 = sadd.s32 %s56, 1
      %p60 = scmp.eq.s32.totalorder %s22, 1
      %p61 = scmp.ne.s32.totalorder %s56, %s58
      %p62 = scmp.eq.s32.totalorder %s22, 0
      %p63 = por %p61, %p62
      %p64 = scmp.ne.s32.totalorder %s56, %s58
      %p65 = scmp.eq.s32.totalorder %s27, 1
      %p66 = por %p64, %p65
      %p67 = scmp.ne.s32.totalorder %s58, %s59
      %p68 = scmp.eq.s32.totalorder %s27, 0
      %p69 = por %p67, %p68
      %p70 = scmp.ne.s32.totalorder %s58, %s59
      %p71 = scmp.eq.s32.totalorder %s28, 1
      %p72 = por %p70, %p71
      %p74 = scmp.ne.s32.totalorder %s59, %s73
      %p75 = scmp.eq.s32.totalorder %s28, 0
      %p76 = por %p74, %p75
      %s78 = sadd.s32 %s77, 1
      %p81 = scmp.eq.s32.totalorder %s22, 1
      %p82 = scmp.ne.s32.totalorder %s77, %s79
      %p83 = scmp.eq.s32.totalorder %s22, 0
      %p84 = por %p82, %p83
      %p85 = scmp.ne.s32.totalorder %s77, %s79
      %p86 = scmp.eq.s32.totalorder %s27, 1
      %p87 = por %p85, %p86
      %p88 = scmp.ne.s32.totalorder %s79, %s80
      %p89 = scmp.eq.s32.totalorder %s27, 0
      %p90 = por %p88, %p89
      %p91 = scmp.ne.s32.totalorder %s79, %s80
      %p92 = scmp.eq.s32.totalorder %s28, 1
      %p93 = por %p91, %p92
      %p95 = scmp.ne.s32.totalorder %s80, %s94
      %p96 = scmp.eq.s32.totalorder %s28, 0
      %p97 = por %p95, %p96
      %s99 = sadd.s32 %s98, 1
      %p102 = scmp.eq.s32.totalorder %s22, 1
      %p103 = scmp.ne.s32.totalorder %s98, %s100
      %p104 = scmp.eq.s32.totalorder %s22, 0
      %p105 = por %p103, %p104
      %p106 = scmp.ne.s32.totalorder %s98, %s100
      %p107 = scmp.eq.s32.totalorder %s27, 1
      %p108 = por %p106, %p107
      %p109 = scmp.ne.s32.totalorder %s100, %s101
      %p110 = scmp.eq.s32.totalorder %s27, 0
      %p111 = por %p109, %p110
      %p112 = scmp.ne.s32.totalorder %s100, %s101
      %p113 = scmp.eq.s32.totalorder %s28, 1
      %p114 = por %p112, %p113
      %p116 = scmp.ne.s32.totalorder %s101, %s115
      %p117 = scmp.eq.s32.totalorder %s28, 0
      %p118 = por %p116, %p117
      %s120 = sadd.s32 %s119, 1
      %p123 = scmp.eq.s32.totalorder %s22, 1
      %p124 = scmp.ne.s32.totalorder %s119, %s121
      %p125 = scmp.eq.s32.totalorder %s22, 0
      %p126 = por %p124, %p125
      %p127 = scmp.ne.s32.totalorder %s119, %s121
      %p128 = scmp.eq.s32.totalorder %s27, 1
      %p129 = por %p127, %p128
      %p130 = scmp.ne.s32.totalorder %s121, %s122
      %p131 = scmp.eq.s32.totalorder %s27, 0
      %p132 = por %p130, %p131
      %p133 = scmp.ne.s32.totalorder %s121, %s122
      %p134 = scmp.eq.s32.totalorder %s28, 1
      %p135 = por %p133, %p134
      %p137 = scmp.ne.s32.totalorder %s122, %s136
      %p138 = scmp.eq.s32.totalorder %s28, 0
      %p139 = por %p137, %p138
      %s141 = sadd.s32 %s140, 1
      %p144 = scmp.eq.s32.totalorder %s22, 1
      %p145 = scmp.ne.s32.totalorder %s140, %s142
      %p146 = scmp.eq.s32.totalorder %s22, 0
      %p147 = por %p145, %p146
      %p148 = scmp.ne.s32.totalorder %s140, %s142
      %p149 = scmp.eq.s32.totalorder %s27, 1
      %p150 = por %p148, %p149
      %p151 = scmp.ne.s32.totalorder %s142, %s143
      %p152 = scmp.eq.s32.totalorder %s27, 0
      %p153 = por %p151, %p152
      %p154 = scmp.ne.s32.totalorder %s142, %s143
      %p155 = scmp.eq.s32.totalorder %s28, 1
      %p156 = por %p154, %p155
      %p158 = scmp.ne.s32.totalorder %s143, %s157
      %p159 = scmp.eq.s32.totalorder %s28, 0
      %p160 = por %p158, %p159
      %s162 = sadd.s32 %s161, 1
      %p165 = scmp.eq.s32.totalorder %s22, 1
      %p166 = scmp.ne.s32.totalorder %s161, %s163
      %p167 = scmp.eq.s32.totalorder %s22, 0
      %p168 = por %p166, %p167
      %p169 = scmp.ne.s32.totalorder %s161, %s163
      %p170 = scmp.eq.s32.totalorder %s27, 1
      %p171 = por %p169, %p170
      %p172 = scmp.ne.s32.totalorder %s163, %s164
      %p173 = scmp.eq.s32.totalorder %s27, 0
      %p174 = por %p172, %p173
      %p175 = scmp.ne.s32.totalorder %s163, %s164
      %p176 = scmp.eq.s32.totalorder %s28, 1
      %p177 = por %p175, %p176
      %p179 = scmp.ne.s32.totalorder %s164, %s178
      %p180 = scmp.eq.s32.totalorder %s28, 0
      %p181 = por %p179, %p180
      %s183 = sadd.s32 %s182, 1
      %p186 = scmp.eq.s32.totalorder %s22, 1
      %p187 = scmp.ne.s32.totalorder %s182, %s184
      %p188 = scmp.eq.s32.totalorder %s22, 0
      %p189 = por %p187, %p188
      %p190 = scmp.ne.s32.totalorder %s182, %s184
      %p191 = scmp.eq.s32.totalorder %s27, 1
      %p192 = por %p190, %p191
      %p193 = scmp.ne.s32.totalorder %s184, %s185
      %p194 = scmp.eq.s32.totalorder %s27, 0
      %p195 = por %p193, %p194
      %p196 = scmp.ne.s32.totalorder %s184, %s185
      %p197 = scmp.eq.s32.totalorder %s28, 1
      %p198 = por %p196, %p197
      %p200 = scmp.ne.s32.totalorder %s185, %s199
      %p201 = scmp.eq.s32.totalorder %s28, 0
      %p202 = por %p200, %p201
      %s204 = sadd.s32 %s203, 1
      %p207 = scmp.eq.s32.totalorder %s22, 1
      %p208 = scmp.ne.s32.totalorder %s203, %s205
      %p209 = scmp.eq.s32.totalorder %s22, 0
      %p210 = por %p208, %p209
      %p211 = scmp.ne.s32.totalorder %s203, %s205
      %p212 = scmp.eq.s32.totalorder %s27, 1
      %p213 = por %p211, %p212
      %p214 = scmp.ne.s32.totalorder %s205, %s206
      %p215 = scmp.eq.s32.totalorder %s27, 0
      %p216 = por %p214, %p215
      %p217 = scmp.ne.s32.totalorder %s205, %s206
      %p218 = scmp.eq.s32.totalorder %s28, 1
      %p219 = por %p217, %p218
      %p221 = scmp.ne.s32.totalorder %s206, %s220
      %p222 = scmp.eq.s32.totalorder %s28, 0
      %p223 = por %p221, %p222
      %s225 = sadd.s32 %s224, 1
      %p228 = scmp.eq.s32.totalorder %s22, 1
      %p229 = scmp.ne.s32.totalorder %s224, %s226
      %p230 = scmp.eq.s32.totalorder %s22, 0
      %p231 = por %p229, %p230
      %p232 = scmp.ne.s32.totalorder %s224, %s226
      %p233 = scmp.eq.s32.totalorder %s27, 1
      %p234 = por %p232, %p233
      %p235 = scmp.ne.s32.totalorder %s226, %s227
      %p236 = scmp.eq.s32.totalorder %s27, 0
      %p237 = por %p235, %p236
      %p238 = scmp.ne.s32.totalorder %s226, %s227
      %p239 = scmp.eq.s32.totalorder %s28, 1
      %p240 = por %p238, %p239
      %p242 = scmp.ne.s32.totalorder %s227, %s241
      %p243 = scmp.eq.s32.totalorder %s28, 0
      %p244 = por %p242, %p243
      %s246 = sadd.s32 %s245, 1
      %p249 = scmp.eq.s32.totalorder %s22, 1
      %p250 = scmp.ne.s32.totalorder %s245, %s247
      %p251 = scmp.eq.s32.totalorder %s22, 0
      %p252 = por %p250, %p251
      %p253 = scmp.ne.s32.totalorder %s245, %s247
      %p254 = scmp.eq.s32.totalorder %s27, 1
      %p255 = por %p253, %p254
      %p256 = scmp.ne.s32.totalorder %s247, %s248
      %p257 = scmp.eq.s32.totalorder %s27, 0
      %p258 = por %p256, %p257
      %p259 = scmp.ne.s32.totalorder %s247, %s248
      %p260 = scmp.eq.s32.totalorder %s28, 1
      %p261 = por %p259, %p260
      %p263 = scmp.ne.s32.totalorder %s248, %s262
      %p264 = scmp.eq.s32.totalorder %s28, 0
      %p265 = por %p263, %p264
      %s267 = sadd.s32 %s266, 1
      %p270 = scmp.eq.s32.totalorder %s22, 1
      %p271 = scmp.ne.s32.totalorder %s266, %s268
      %p272 = scmp.eq.s32.totalorder %s22, 0
      %p273 = por %p271, %p272
      %p274 = scmp.ne.s32.totalorder %s266, %s268
      %p275 = scmp.eq.s32.totalorder %s27, 1
      %p276 = por %p274, %p275
      %p277 = scmp.ne.s32.totalorder %s268, %s269
      %p278 = scmp.eq.s32.totalorder %s27, 0
      %p279 = por %p277, %p278
      %p280 = scmp.ne.s32.totalorder %s268, %s269
      %p281 = scmp.eq.s32.totalorder %s28, 1
      %p282 = por %p280, %p281
      %p284 = scmp.ne.s32.totalorder %s269, %s283
      %p285 = scmp.eq.s32.totalorder %s28, 0
      %p286 = por %p284, %p285
      %s288 = sadd.s32 %s287, 1
      %p291 = scmp.eq.s32.totalorder %s22, 1
      %p292 = scmp.ne.s32.totalorder %s287, %s289
      %p293 = scmp.eq.s32.totalorder %s22, 0
      %p294 = por %p292, %p293
      %p295 = scmp.ne.s32.totalorder %s287, %s289
      %p296 = scmp.eq.s32.totalorder %s27, 1
      %p297 = por %p295, %p296
      %p298 = scmp.ne.s32.totalorder %s289, %s290
      %p299 = scmp.eq.s32.totalorder %s27, 0
      %p300 = por %p298, %p299
      %p301 = scmp.ne.s32.totalorder %s289, %s290
      %p302 = scmp.eq.s32.totalorder %s28, 1
      %p303 = por %p301, %p302
      %p305 = scmp.ne.s32.totalorder %s290, %s304
      %p306 = scmp.eq.s32.totalorder %s28, 0
      %p307 = por %p305, %p306
      %s308 = ssub.s32 %s22, %s29
      %p309 = scmp.eq.s32.totalorder %s308, 0
      %s311 = sadd.s32 %s310, 1
      %s312 = scalar_select %p309, %s310, %s311
      %p315 = pneg %p309
      %p316 = scmp.eq.s32.totalorder %s22, 1
      %p317 = por %p315, %p316
      %p318 = scmp.ne.s32.totalorder %s310, %s313
      %p319 = scmp.eq.s32.totalorder %s22, 0
      %p320 = por %p318, %p319
      %p321 = scmp.ne.s32.totalorder %s310, %s313
      %p322 = scmp.eq.s32.totalorder %s27, 1
      %p323 = por %p321, %p322
      %p324 = scmp.ne.s32.totalorder %s313, %s314
      %p325 = scmp.eq.s32.totalorder %s27, 0
      %p326 = por %p324, %p325
      %p327 = scmp.ne.s32.totalorder %s313, %s314
      %p328 = scmp.eq.s32.totalorder %s28, 1
      %p329 = por %p327, %p328
      %p331 = scmp.ne.s32.totalorder %s314, %s330
      %p332 = scmp.eq.s32.totalorder %s28, 0
      %p333 = por %p331, %p332
      %p334 = scmp.le.s32.totalorder 1, %s22
      %p335 = scmp.lt.s32.totalorder %s22, 3
      %p336 = pnand %p334, %p335
      %p337 = pneg %p336
      // Predicated region
      $region9: #{main_model_forward.1} parent=5 // pred_check
        _
      $region10: #{main_model_forward.1} parent=5 // pred_check_branch
        %339 = sbr.rel (%p336) target = $region12
      $region11: #{main_model_forward.1} parent=5 // pred_region
        %s340 = ssub.s32 %s22, 1
        // Predicated region
        $region13: #{main_model_forward.1} parent=11 // pred_check
          %p341 = pneg %p69
        $region14: #{main_model_forward.1} parent=11 // pred_check_branch
          %343 = sbr.rel (%p341) target = $region16
        $region15: #{main_model_forward.1} parent=11 // pred_region
          _
        $region16: #{main_model_forward.1} parent=11 // pred_fallthru
          _
        // Predicated region
        $region17: #{main_model_forward.1} parent=11 // pred_check
          %p344 = pneg %p90
        $region18: #{main_model_forward.1} parent=11 // pred_check_branch
          %346 = sbr.rel (%p344) target = $region20
        $region19: #{main_model_forward.1} parent=11 // pred_region
          _
        $region20: #{main_model_forward.1} parent=11 // pred_fallthru
          _
        // Predicated region
        $region21: #{main_model_forward.1} parent=11 // pred_check
          %p347 = pneg %p111
        $region22: #{main_model_forward.1} parent=11 // pred_check_branch
          %349 = sbr.rel (%p347) target = $region24
        $region23: #{main_model_forward.1} parent=11 // pred_region
          _
        $region24: #{main_model_forward.1} parent=11 // pred_fallthru
          _
        // Predicated region
        $region25: #{main_model_forward.1} parent=11 // pred_check
          %p350 = pneg %p132
        $region26: #{main_model_forward.1} parent=11 // pred_check_branch
          %352 = sbr.rel (%p350) target = $region28
        $region27: #{main_model_forward.1} parent=11 // pred_region
          _
        $region28: #{main_model_forward.1} parent=11 // pred_fallthru
          _
        // Predicated region
        $region29: #{main_model_forward.1} parent=11 // pred_check
          %p353 = pneg %p153
        $region30: #{main_model_forward.1} parent=11 // pred_check_branch
          %355 = sbr.rel (%p353) target = $region32
        $region31: #{main_model_forward.1} parent=11 // pred_region
          _
        $region32: #{main_model_forward.1} parent=11 // pred_fallthru
          _
        // Predicated region
        $region33: #{main_model_forward.1} parent=11 // pred_check
          %p356 = pneg %p174
        $region34: #{main_model_forward.1} parent=11 // pred_check_branch
          %358 = sbr.rel (%p356) target = $region36
        $region35: #{main_model_forward.1} parent=11 // pred_region
          _
        $region36: #{main_model_forward.1} parent=11 // pred_fallthru
          _
        // Predicated region
        $region37: #{main_model_forward.1} parent=11 // pred_check
          %p359 = pneg %p195
        $region38: #{main_model_forward.1} parent=11 // pred_check_branch
          %361 = sbr.rel (%p359) target = $region40
        $region39: #{main_model_forward.1} parent=11 // pred_region
          _
        $region40: #{main_model_forward.1} parent=11 // pred_fallthru
          _
        // Predicated region
        $region41: #{main_model_forward.1} parent=11 // pred_check
          %p362 = pneg %p216
        $region42: #{main_model_forward.1} parent=11 // pred_check_branch
          %364 = sbr.rel (%p362) target = $region44
        $region43: #{main_model_forward.1} parent=11 // pred_region
          _
        $region44: #{main_model_forward.1} parent=11 // pred_fallthru
          _
        // Predicated region
        $region45: #{main_model_forward.1} parent=11 // pred_check
          %p365 = pneg %p237
        $region46: #{main_model_forward.1} parent=11 // pred_check_branch
          %367 = sbr.rel (%p365) target = $region48
        $region47: #{main_model_forward.1} parent=11 // pred_region
          _
        $region48: #{main_model_forward.1} parent=11 // pred_fallthru
          _
        // Predicated region
        $region49: #{main_model_forward.1} parent=11 // pred_check
          %p368 = pneg %p258
        $region50: #{main_model_forward.1} parent=11 // pred_check_branch
          %370 = sbr.rel (%p368) target = $region52
        $region51: #{main_model_forward.1} parent=11 // pred_region
          _
        $region52: #{main_model_forward.1} parent=11 // pred_fallthru
          _
        // Predicated region
        $region53: #{main_model_forward.1} parent=11 // pred_check
          %p371 = pneg %p279
        $region54: #{main_model_forward.1} parent=11 // pred_check_branch
          %373 = sbr.rel (%p371) target = $region56
        $region55: #{main_model_forward.1} parent=11 // pred_region
          _
        $region56: #{main_model_forward.1} parent=11 // pred_fallthru
          _
        // Predicated region
        $region57: #{main_model_forward.1} parent=11 // pred_check
          %p374 = pneg %p300
        $region58: #{main_model_forward.1} parent=11 // pred_check_branch
          %376 = sbr.rel (%p374) target = $region60
        $region59: #{main_model_forward.1} parent=11 // pred_region
          _
        $region60: #{main_model_forward.1} parent=11 // pred_fallthru
          _
      $region12: #{main_model_forward.1} parent=5 // pred_fallthru
        _
      %p377 = scmp.lt.s32.totalorder %s22, 2
      // Predicated region
      $region61: #{main_model_forward.1} parent=5 // pred_check
        %p378 = pneg %p377
      $region62: #{main_model_forward.1} parent=5 // pred_check_branch
        %380 = sbr.rel (%p378) target = $region64
      $region63: #{main_model_forward.1} parent=5 // pred_region
        // Predicated region
        $region65: #{main_model_forward.1} parent=63 // pred_check
          %p381 = pneg %p42
        $region66: #{main_model_forward.1} parent=63 // pred_check_branch
          %383 = sbr.rel (%p381) target = $region68
        $region67: #{main_model_forward.1} parent=63 // pred_region
          %p384 = scmp.lt.s32.totalorder %s22, 1
          %s385 = scalar_select %p384, %s22, 1
          %s386 = smul.addr %s385, 8
          %s387 = smul.addr %s386, 4
          %s388 = scalar_lea.vmem %s0, %s387
        $region68: #{main_model_forward.1} parent=63 // pred_fallthru
          _
      $region64: #{main_model_forward.1} parent=5 // pred_fallthru
        _
      %p389 = scmp.le.s32.totalorder 1, %s22
      %p390 = scmp.lt.s32.totalorder %s22, 3
      %p391 = pnand %p389, %p390
      %p392 = pneg %p391
      // Predicated region
      $region69: #{main_model_forward.1} parent=5 // pred_check
        _
      $region70: #{main_model_forward.1} parent=5 // pred_check_branch
        %394 = sbr.rel (%p391) target = $region72
      $region71: #{main_model_forward.1} parent=5 // pred_region
        %s395 = ssub.s32 %s22, 1
        %p396 = scmp.lt.s32.totalorder %s27, 1
        %s397 = scalar_select %p396, %s27, 1
        %s398 = smul.addr %s397, 8
        %s399 = smul.addr %s398, 4
        %s400 = scalar_lea.vmem %s0, %s399
        %p401 = pneg %p48
        %p402 = pneg %p45
        %p403 = pneg %p69
        %p404 = pneg %p66
        %p405 = pneg %p90
        %p406 = pneg %p87
        %p407 = pneg %p111
        %p408 = pneg %p108
        %p409 = pneg %p132
        %p410 = pneg %p129
        %p411 = pneg %p153
        %p412 = pneg %p150
        %p413 = pneg %p174
        %p414 = pneg %p171
        %p415 = pneg %p195
        %p416 = pneg %p192
        %p417 = pneg %p216
        %p418 = pneg %p213
        %p419 = pneg %p237
        %p420 = pneg %p234
        %p421 = pneg %p258
        %p422 = pneg %p255
        %p423 = pneg %p279
        %p424 = pneg %p276
        %p425 = pneg %p300
        %p426 = pneg %p297
        %p427 = pneg %p326
        %p428 = pneg %p323
        %s429 = sand.u32 %s313, 1
        %s430 = scalar_lea.sflag [#allocation3], %s429
        %s431 = sand.u32 %s313, 1
        %s432 = smul.addr %s431, 16
        %s433 = scalar_lea.vmem [#allocation2], %s432
        %p434 = scmp.lt.s32.totalorder %s27, 1
        %s435 = scalar_select %p434, %s27, 1
        %s436 = smul.addr %s435, 8
        %s437 = smul.addr %s436, 4
        %s438 = scalar_lea.vmem %s0, %s437
        %v440 = vld [vmem:[%s438] sm:$0xf]
        %v441 = vld [vmem:[%s438 + $0x4] sm:$0xf]
        %v442 = vld [vmem:[%s438 + $0x8] sm:$0xf]
        %v443 = vld [vmem:[%s438 + $0xc] sm:$0xf]
        %v444 = vld [vmem:[%s438 + $0x10] sm:$0xf]
        %v445 = vld [vmem:[%s438 + $0x14] sm:$0xf]
        %v446 = vld [vmem:[%s438 + $0x18] sm:$0xf]
        %v447 = vld [vmem:[%s438 + $0x1c] sm:$0xf]
        %v448 = vld [vmem:[%s1] sm:$0xf]
        %v449 = vld [vmem:[%s1 + $0x4] sm:$0xf]
        %v450 = vld [vmem:[%s1 + $0x8] sm:$0xf]
        %v451 = vld [vmem:[%s1 + $0xc] sm:$0xf]
        %v452 = vld [vmem:[%s1 + $0x10] sm:$0xf]
        %v453 = vld [vmem:[%s1 + $0x14] sm:$0xf]
        %v454 = vld [vmem:[%s1 + $0x18] sm:$0xf]
        %v455 = vld [vmem:[%s1 + $0x1c] sm:$0xf]
        %v456 = vld [vmem:[%s1 + $0x20] sm:$0xf]
        %v457 = vld [vmem:[%s1 + $0x24] sm:$0xf]
        %v458 = vld [vmem:[%s1 + $0x28] sm:$0xf]
        %v459 = vld [vmem:[%s1 + $0x2c] sm:$0xf]
        %v460 = vld [vmem:[%s1 + $0x30] sm:$0xf]
        %v461 = vld [vmem:[%s1 + $0x34] sm:$0xf]
        %v462 = vld [vmem:[%s1 + $0x38] sm:$0xf]
        %v463 = vld [vmem:[%s1 + $0x3c] sm:$0xf]
        %v464 = vld [vmem:[%s2] sm:$0x1]
        %v466 = vlaneseq
        %v467 = vshrl.u32 %v466, 7
        %v468 = vsub.s32 0, %v467
        %v469 = vrot.slane %v464, %v468
        %v479 = vunpack.c.l.b16 %v440
        %v480 = vunpack.c.l.b16 %v441
        %v481 = vunpack.c.l.b16 %v442
        %v482 = vunpack.c.l.b16 %v443
        %v483 = vunpack.c.l.b16 %v444
        %v484 = vunpack.c.l.b16 %v445
        %v485 = vunpack.c.l.b16 %v446
        %v486 = vunpack.c.l.b16 %v447
        %v487 = vpack.c.b16 %v480, %v479
        %v488 = vpack.c.b16 %v482, %v481
        %v489 = vpack.c.b16 %v484, %v483
        %v490 = vpack.c.b16 %v486, %v485
        %v511 = vunpack.c.l.b16 %v448
        %v512 = vunpack.c.l.b16 %v449
        %v513 = vunpack.c.l.b16 %v450
        %v514 = vunpack.c.l.b16 %v451
        %v515 = vunpack.c.l.b16 %v452
        %v516 = vunpack.c.l.b16 %v453
        %v517 = vunpack.c.l.b16 %v454
        %v518 = vunpack.c.l.b16 %v455
        %v519 = vunpack.c.l.b16 %v456
        %v520 = vunpack.c.l.b16 %v457
        %v521 = vunpack.c.l.b16 %v458
        %v522 = vunpack.c.l.b16 %v459
        %v523 = vunpack.c.l.b16 %v460
        %v524 = vunpack.c.l.b16 %v461
        %v525 = vunpack.c.l.b16 %v462
        %v526 = vunpack.c.l.b16 %v463
        %v527 = vpack.c.b16 %v512, %v511
        %v528 = vpack.c.b16 %v514, %v513
        %v529 = vpack.c.b16 %v516, %v515
        %v530 = vpack.c.b16 %v518, %v517
        %v531 = vpack.c.b16 %v520, %v519
        %v532 = vpack.c.b16 %v522, %v521
        %v533 = vpack.c.b16 %v524, %v523
        %v534 = vpack.c.b16 %v526, %v525
        %543 = vmatprep.subr.bf16.mxu0 0
        %544 = vmatpush1.bf16.msra.mxu0 %v534
        %545 = vmatprep.subr.bf16.mxu0 0
        %546 = vmatpush1.bf16.msra.mxu0 %v533
        %547 = vmatprep.subr.bf16.mxu0 0
        %548 = vmatpush1.bf16.msra.mxu0 %v532
        %549 = vmatprep.subr.bf16.mxu0 0
        %550 = vmatpush1.bf16.msra.mxu0 %v531
        %551 = vmatprep.subr.bf16.mxu0 0
        %552 = vmatpush1.bf16.msra.mxu0 %v530
        %553 = vmatprep.subr.bf16.mxu0 0
        %554 = vmatpush1.bf16.msra.mxu0 %v529
        %555 = vmatprep.subr.bf16.mxu0 0
        %556 = vmatpush1.bf16.msra.mxu0 %v528
        %557 = vmatprep.subr.bf16.mxu0 0
        %558 = vmatpush1.bf16.msra.mxu0 %v527
        %559 = vmatprep.subr.bf16.mxu0 0
        %560 = vmatpush2.bf16.msra.mxu0 0
        %561 = vmatprep.subr.bf16.mxu0 0
        %562 = vmatpush2.bf16.msra.mxu0 0
        %563 = vmatprep.subr.bf16.mxu0 0
        %564 = vmatpush2.bf16.msra.mxu0 0
        %565 = vmatprep.subr.bf16.mxu0 0
        %566 = vmatpush2.bf16.msra.mxu0 0
        %567 = vmatprep.subr.bf16.mxu0 0
        %568 = vmatpush2.bf16.msra.mxu0 0
        %569 = vmatprep.subr.bf16.mxu0 0
        %570 = vmatpush2.bf16.msra.mxu0 0
        %571 = vmatprep.subr.bf16.mxu0 0
        %572 = vmatpush2.bf16.msra.mxu0 0
        %573 = vmatprep.subr.bf16.mxu0 0
        %574 = vmatpush2.bf16.msra.mxu0 0
        %575 = vmatprep.mubr.bf16.mxu0 0
        %576 = vmatmul.mubr.bf16.gmra.mxu0 %v487
        %v577 = vpop.f32.mrf.mxu0
        %v578 = vadd.f32 %v469, %v577
        %v579 = vpop.f32.mrf.mxu0
        %v580 = vpop.f32.mrf.mxu0
        %v581 = vadd.f32 %v469, %v580
        %v582 = vpop.f32.mrf.mxu0
        %583 = vmatprep.mubr.bf16.mxu0 0
        %584 = vmatmul.mubr.bf16.gmra.mxu0 %v488
        %v585 = vpop.f32.mrf.mxu0
        %v586 = vadd.f32 %v469, %v585
        %v587 = vpop.f32.mrf.mxu0
        %v588 = vpop.f32.mrf.mxu0
        %v589 = vadd.f32 %v469, %v588
        %v590 = vpop.f32.mrf.mxu0
        %591 = vmatprep.mubr.bf16.mxu0 0
        %592 = vmatmul.mubr.bf16.gmra.mxu0 %v489
        %v593 = vpop.f32.mrf.mxu0
        %v594 = vadd.f32 %v469, %v593
        %v595 = vpop.f32.mrf.mxu0
        %v596 = vpop.f32.mrf.mxu0
        %v597 = vadd.f32 %v469, %v596
        %v598 = vpop.f32.mrf.mxu0
        %599 = vmatprep.mubr.bf16.mxu0 0
        %600 = vmatmul.mubr.bf16.gmra.mxu0 %v490
        %v601 = vpop.f32.mrf.mxu0
        %v602 = vadd.f32 %v469, %v601
        %v603 = vpop.f32.mrf.mxu0
        %v604 = vpop.f32.mrf.mxu0
        %v605 = vadd.f32 %v469, %v604
        %v606 = vpop.f32.mrf.mxu0
        %607 = vdwg.mxu0
        %v608 = vmax.f32 %v578, 0.0
        %v609 = vmax.f32 %v581, 0.0
        %v610 = vmax.f32 %v586, 0.0
        %v611 = vmax.f32 %v589, 0.0
        %v612 = vmax.f32 %v594, 0.0
        %v613 = vmax.f32 %v597, 0.0
        %v614 = vmax.f32 %v602, 0.0
        %v615 = vmax.f32 %v605, 0.0
        %v616 = vpack.c.bf16 %v609, %v608
        %v617 = vpack.c.bf16 %v611, %v610
        %v618 = vpack.c.bf16 %v613, %v612
        %v619 = vpack.c.bf16 %v615, %v614
        %v620 = vld [vmem:[%s3] sm:$0xf]
        %v621 = vld [vmem:[%s3 + $0x4] sm:$0xf]
        %v622 = vld [vmem:[%s3 + $0x8] sm:$0xf]
        %v623 = vld [vmem:[%s3 + $0xc] sm:$0xf]
        %v624 = vld [vmem:[%s3 + $0x10] sm:$0xf]
        %v625 = vld [vmem:[%s3 + $0x14] sm:$0xf]
        %v626 = vld [vmem:[%s3 + $0x18] sm:$0xf]
        %v627 = vld [vmem:[%s3 + $0x1c] sm:$0xf]
        %v628 = vld [vmem:[%s3 + $0x20] sm:$0xf]
        %v629 = vld [vmem:[%s3 + $0x24] sm:$0xf]
        %v630 = vld [vmem:[%s3 + $0x28] sm:$0xf]
        %v631 = vld [vmem:[%s3 + $0x2c] sm:$0xf]
        %v632 = vld [vmem:[%s3 + $0x30] sm:$0xf]
        %v633 = vld [vmem:[%s3 + $0x34] sm:$0xf]
        %v634 = vld [vmem:[%s3 + $0x38] sm:$0xf]
        %v635 = vld [vmem:[%s3 + $0x3c] sm:$0xf]
        %v636 = vld [vmem:[%s3 + $0x40] sm:$0xf]
        %v637 = vld [vmem:[%s3 + $0x44] sm:$0xf]
        %v656 = vunpack.c.l.b16 %v620
        %v657 = vunpack.c.l.b16 %v621
        %v658 = vunpack.c.l.b16 %v622
        %v659 = vunpack.c.l.b16 %v623
        %v660 = vunpack.c.l.b16 %v624
        %v661 = vunpack.c.l.b16 %v625
        %v662 = vunpack.c.l.b16 %v626
        %v663 = vunpack.c.l.b16 %v627
        %v664 = vunpack.c.l.b16 %v628
        %v665 = vunpack.c.l.b16 %v629
        %v666 = vunpack.c.l.b16 %v630
        %v667 = vunpack.c.l.b16 %v631
        %v668 = vunpack.c.l.b16 %v632
        %v669 = vunpack.c.l.b16 %v633
        %v670 = vunpack.c.l.b16 %v634
        %v671 = vunpack.c.l.b16 %v635
        %v672 = vunpack.c.l.b16 %v636
        %v673 = vunpack.c.l.b16 %v637
        %v674 = vpack.c.b16 %v657, %v656
        %v675 = vpack.c.b16 %v659, %v658
        %v676 = vpack.c.b16 %v661, %v660
        %v677 = vpack.c.b16 %v663, %v662
        %v678 = vpack.c.b16 %v665, %v664
        %v679 = vpack.c.b16 %v667, %v666
        %v680 = vpack.c.b16 %v669, %v668
        %v681 = vpack.c.b16 %v671, %v670
        %v682 = vpack.c.b16 %v673, %v672
        %vm683 = vcmask 523264
        %v685 = vsel %vm683, %v674, 0
        %v688 = vsel %vm683, %v675, 0
        %v691 = vsel %vm683, %v676, 0
        %v694 = vsel %vm683, %v677, 0
        %v697 = vsel %vm683, %v678, 0
        %v700 = vsel %vm683, %v679, 0
        %v703 = vsel %vm683, %v680, 0
        %v706 = vsel %vm683, %v681, 0
        %v709 = vsel %vm683, %v682, 0
        %711 = vmatprep.subr.bf16.mxu0 0
        %712 = vmatpush1.bf16.msra.mxu0 0
        %713 = vmatprep.subr.bf16.mxu0 0
        %714 = vmatpush1.bf16.msra.mxu0 0
        %715 = vmatprep.subr.bf16.mxu0 0
        %716 = vmatpush1.bf16.msra.mxu0 0
        %717 = vmatprep.subr.bf16.mxu0 0
        %718 = vmatpush1.bf16.msra.mxu0 0
        %719 = vmatprep.subr.bf16.mxu0 0
        %720 = vmatpush1.bf16.msra.mxu0 %v619
        %721 = vmatprep.subr.bf16.mxu0 0
        %722 = vmatpush1.bf16.msra.mxu0 %v618
        %723 = vmatprep.subr.bf16.mxu0 0
        %724 = vmatpush1.bf16.msra.mxu0 %v617
        %725 = vmatprep.subr.bf16.mxu0 0
        %726 = vmatpush1.bf16.msra.mxu0 %v616
        %727 = vmatprep.subr.bf16.mxu0 0
        %728 = vmatpush2.bf16.msra.mxu0 0
        %729 = vmatprep.subr.bf16.mxu0 0
        %730 = vmatpush2.bf16.msra.mxu0 0
        %731 = vmatprep.subr.bf16.mxu0 0
        %732 = vmatpush2.bf16.msra.mxu0 0
        %733 = vmatprep.subr.bf16.mxu0 0
        %734 = vmatpush2.bf16.msra.mxu0 0
        %735 = vmatprep.subr.bf16.mxu0 0
        %736 = vmatpush2.bf16.msra.mxu0 0
        %737 = vmatprep.subr.bf16.mxu0 0
        %738 = vmatpush2.bf16.msra.mxu0 0
        %739 = vmatprep.subr.bf16.mxu0 0
        %740 = vmatpush2.bf16.msra.mxu0 0
        %741 = vmatprep.subr.bf16.mxu0 0
        %742 = vmatpush2.bf16.msra.mxu0 0
        %743 = vmatprep.mubr.bf16.mxu0 0
        %744 = vmatmul.mubr.bf16.gmra.mxu0 %v685
        %v745 = vpop.f32.mrf.mxu0
        %v746 = vadd.f32 0.0, %v745
        %v747 = vpop.f32.mrf.mxu0
        %v748 = vpop.f32.mrf.mxu0
        %v749 = vadd.f32 0.0, %v748
        %v750 = vpop.f32.mrf.mxu0
        %751 = vmatprep.mubr.bf16.mxu0 0
        %752 = vmatmul.mubr.bf16.gmra.mxu0 %v688
        %v753 = vpop.f32.mrf.mxu0
        %v754 = vadd.f32 0.0, %v753
        %v755 = vpop.f32.mrf.mxu0
        %v756 = vpop.f32.mrf.mxu0
        %v757 = vadd.f32 0.0, %v756
        %v758 = vpop.f32.mrf.mxu0
        %759 = vmatprep.mubr.bf16.mxu0 0
        %760 = vmatmul.mubr.bf16.gmra.mxu0 %v691
        %v761 = vpop.f32.mrf.mxu0
        %v762 = vadd.f32 0.0, %v761
        %v763 = vpop.f32.mrf.mxu0
        %v764 = vpop.f32.mrf.mxu0
        %v765 = vadd.f32 0.0, %v764
        %v766 = vpop.f32.mrf.mxu0
        %767 = vmatprep.mubr.bf16.mxu0 0
        %768 = vmatmul.mubr.bf16.gmra.mxu0 %v694
        %v769 = vpop.f32.mrf.mxu0
        %v770 = vadd.f32 0.0, %v769
        %v771 = vpop.f32.mrf.mxu0
        %v772 = vpop.f32.mrf.mxu0
        %v773 = vadd.f32 0.0, %v772
        %v774 = vpop.f32.mrf.mxu0
        %775 = vmatprep.mubr.bf16.mxu0 0
        %776 = vmatmul.mubr.bf16.gmra.mxu0 %v697
        %v777 = vpop.f32.mrf.mxu0
        %v778 = vadd.f32 0.0, %v777
        %v779 = vpop.f32.mrf.mxu0
        %v780 = vpop.f32.mrf.mxu0
        %v781 = vadd.f32 0.0, %v780
        %v782 = vpop.f32.mrf.mxu0
        %783 = vmatprep.mubr.bf16.mxu0 0
        %784 = vmatmul.mubr.bf16.gmra.mxu0 %v700
        %v785 = vpop.f32.mrf.mxu0
        %v786 = vadd.f32 0.0, %v785
        %v787 = vpop.f32.mrf.mxu0
        %v788 = vpop.f32.mrf.mxu0
        %v789 = vadd.f32 0.0, %v788
        %v790 = vpop.f32.mrf.mxu0
        %791 = vmatprep.mubr.bf16.mxu0 0
        %792 = vmatmul.mubr.bf16.gmra.mxu0 %v703
        %v793 = vpop.f32.mrf.mxu0
        %v794 = vadd.f32 0.0, %v793
        %v795 = vpop.f32.mrf.mxu0
        %v796 = vpop.f32.mrf.mxu0
        %v797 = vadd.f32 0.0, %v796
        %v798 = vpop.f32.mrf.mxu0
        %799 = vmatprep.mubr.bf16.mxu0 0
        %800 = vmatmul.mubr.bf16.gmra.mxu0 %v706
        %v801 = vpop.f32.mrf.mxu0
        %v802 = vadd.f32 0.0, %v801
        %v803 = vpop.f32.mrf.mxu0
        %v804 = vpop.f32.mrf.mxu0
        %v805 = vadd.f32 0.0, %v804
        %v806 = vpop.f32.mrf.mxu0
        %807 = vmatprep.mubr.bf16.mxu0 0
        %808 = vmatmul.mubr.bf16.gmra.mxu0 %v709
        %v809 = vpop.f32.mrf.mxu0
        %v810 = vadd.f32 0.0, %v809
        %v811 = vpop.f32.mrf.mxu0
        %v812 = vpop.f32.mrf.mxu0
        %v813 = vadd.f32 0.0, %v812
        %v814 = vpop.f32.mrf.mxu0
        %815 = vdwg.mxu0
        %v816 = vpack.c.bf16 %v749, %v746
        %v817 = vpack.c.bf16 %v757, %v754
        %v818 = vpack.c.bf16 %v765, %v762
        %v819 = vpack.c.bf16 %v773, %v770
        %v820 = vpack.c.bf16 %v781, %v778
        %v821 = vpack.c.bf16 %v789, %v786
        %v822 = vpack.c.bf16 %v797, %v794
        %v823 = vpack.c.bf16 %v805, %v802
        %v824 = vpack.c.bf16 %v813, %v810
        %v825 = vld [vmem:[%s4] sm:$0xf]
        %v826 = vld [vmem:[%s4 + $0x4] sm:$0xf]
        %v827 = vld [vmem:[%s4 + $0x8] sm:$0xf]
        %v828 = vld [vmem:[%s4 + $0xc] sm:$0xf]
        %v829 = vld [vmem:[%s4 + $0x10] sm:$0xf]
        %v830 = vld [vmem:[%s4 + $0x14] sm:$0xf]
        %v831 = vld [vmem:[%s4 + $0x18] sm:$0xf]
        %v832 = vld [vmem:[%s4 + $0x1c] sm:$0xf]
        %v837 = vunpack.c.l.b16 %v829
        %v838 = vunpack.c.l.b16 %v830
        %v839 = vunpack.c.l.b16 %v831
        %v840 = vunpack.c.l.b16 %v832
        %v841 = vpack.c.b16 %v838, %v837
        %v842 = vpack.c.b16 %v840, %v839
        %vm845 = vcmask 261120
        %v847 = vsel %vm845, %v817, 0
        %849 = vmatprep.subr.bf16.mxu0 0
        %850 = vmatpush1.bf16.msra.mxu0 0
        %851 = vmatprep.subr.bf16.mxu0 0
        %852 = vmatpush1.bf16.msra.mxu0 0
        %853 = vmatprep.subr.bf16.mxu0 0
        %854 = vmatpush1.bf16.msra.mxu0 0
        %855 = vmatprep.subr.bf16.mxu0 0
        %856 = vmatpush1.bf16.msra.mxu0 0
        %857 = vmatprep.subr.bf16.mxu0 0
        %858 = vmatpush1.bf16.msra.mxu0 0
        %859 = vmatprep.subr.bf16.mxu0 0
        %860 = vmatpush1.bf16.msra.mxu0 0
        %861 = vmatprep.subr.bf16.mxu0 0
        %862 = vmatpush1.bf16.msra.mxu0 %v842
        %863 = vmatprep.subr.bf16.mxu0 0
        %864 = vmatpush1.bf16.msra.mxu0 %v841
        %865 = vmatprep.subr.bf16.mxu0 0
        %866 = vmatpush2.bf16.msra.mxu0 0
        %867 = vmatprep.subr.bf16.mxu0 0
        %868 = vmatpush2.bf16.msra.mxu0 0
        %869 = vmatprep.subr.bf16.mxu0 0
        %870 = vmatpush2.bf16.msra.mxu0 0
        %871 = vmatprep.subr.bf16.mxu0 0
        %872 = vmatpush2.bf16.msra.mxu0 0
        %873 = vmatprep.subr.bf16.mxu0 0
        %874 = vmatpush2.bf16.msra.mxu0 0
        %875 = vmatprep.subr.bf16.mxu0 0
        %876 = vmatpush2.bf16.msra.mxu0 0
        %877 = vmatprep.subr.bf16.mxu0 0
        %878 = vmatpush2.bf16.msra.mxu0 0
        %879 = vmatprep.subr.bf16.mxu0 0
        %880 = vmatpush2.bf16.msra.mxu0 0
        %881 = vmatprep.mubr.bf16.mxu0 0
        %882 = vmatmul.mubr.bf16.gmra.mxu0 %v847
        %v883 = vpop.f32.mrf.mxu0
        %v884 = vadd.f32 0.0, %v883
        %v885 = vpop.f32.mrf.mxu0
        %v886 = vpop.f32.mrf.mxu0
        %v887 = vadd.f32 0.0, %v886
        %v888 = vpop.f32.mrf.mxu0
        %889 = vdwg.mxu0
        %v894 = vunpack.c.l.b16 %v825
        %v895 = vunpack.c.l.b16 %v826
        %v896 = vunpack.c.l.b16 %v827
        %v897 = vunpack.c.l.b16 %v828
        %v898 = vpack.c.b16 %v895, %v894
        %v899 = vpack.c.b16 %v897, %v896
        %v903 = vsel %vm845, %v816, 0
        %905 = vmatprep.subr.bf16.mxu0 0
        %906 = vmatpush1.bf16.msra.mxu0 0
        %907 = vmatprep.subr.bf16.mxu0 0
        %908 = vmatpush1.bf16.msra.mxu0 0
        %909 = vmatprep.subr.bf16.mxu0 0
        %910 = vmatpush1.bf16.msra.mxu0 0
        %911 = vmatprep.subr.bf16.mxu0 0
        %912 = vmatpush1.bf16.msra.mxu0 0
        %913 = vmatprep.subr.bf16.mxu0 0
        %914 = vmatpush1.bf16.msra.mxu0 0
        %915 = vmatprep.subr.bf16.mxu0 0
        %916 = vmatpush1.bf16.msra.mxu0 0
        %917 = vmatprep.subr.bf16.mxu0 0
        %918 = vmatpush1.bf16.msra.mxu0 %v899
        %919 = vmatprep.subr.bf16.mxu0 0
        %920 = vmatpush1.bf16.msra.mxu0 %v898
        %921 = vmatprep.subr.bf16.mxu0 0
        %922 = vmatpush2.bf16.msra.mxu0 0
        %923 = vmatprep.subr.bf16.mxu0 0
        %924 = vmatpush2.bf16.msra.mxu0 0
        %925 = vmatprep.subr.bf16.mxu0 0
        %926 = vmatpush2.bf16.msra.mxu0 0
        %927 = vmatprep.subr.bf16.mxu0 0
        %928 = vmatpush2.bf16.msra.mxu0 0
        %929 = vmatprep.subr.bf16.mxu0 0
        %930 = vmatpush2.bf16.msra.mxu0 0
        %931 = vmatprep.subr.bf16.mxu0 0
        %932 = vmatpush2.bf16.msra.mxu0 0
        %933 = vmatprep.subr.bf16.mxu0 0
        %934 = vmatpush2.bf16.msra.mxu0 0
        %935 = vmatprep.subr.bf16.mxu0 0
        %936 = vmatpush2.bf16.msra.mxu0 0
        %937 = vmatprep.mubr.bf16.mxu0 0
        %938 = vmatmul.mubr.bf16.gmra.mxu0 %v903
        %v939 = vpop.f32.mrf.mxu0
        %v940 = vadd.f32 %v884, %v939
        %v941 = vpop.f32.mrf.mxu0
        %v942 = vpop.f32.mrf.mxu0
        %v943 = vadd.f32 %v887, %v942
        %v944 = vpop.f32.mrf.mxu0
        %945 = vdwg.mxu0
        %v946 = vld [vmem:[%s4 + $0x20] sm:$0xf]
        %v947 = vld [vmem:[%s4 + $0x24] sm:$0xf]
        %v948 = vld [vmem:[%s4 + $0x28] sm:$0xf]
        %v949 = vld [vmem:[%s4 + $0x2c] sm:$0xf]
        %v954 = vunpack.c.l.b16 %v946
        %v955 = vunpack.c.l.b16 %v947
        %v956 = vunpack.c.l.b16 %v948
        %v957 = vunpack.c.l.b16 %v949
        %v958 = vpack.c.b16 %v955, %v954
        %v959 = vpack.c.b16 %v957, %v956
        %v963 = vsel %vm845, %v818, 0
        %965 = vmatprep.subr.bf16.mxu0 0
        %966 = vmatpush1.bf16.msra.mxu0 0
        %967 = vmatprep.subr.bf16.mxu0 0
        %968 = vmatpush1.bf16.msra.mxu0 0
        %969 = vmatprep.subr.bf16.mxu0 0
        %970 = vmatpush1.bf16.msra.mxu0 0
        %971 = vmatprep.subr.bf16.mxu0 0
        %972 = vmatpush1.bf16.msra.mxu0 0
        %973 = vmatprep.subr.bf16.mxu0 0
        %974 = vmatpush1.bf16.msra.mxu0 0
        %975 = vmatprep.subr.bf16.mxu0 0
        %976 = vmatpush1.bf16.msra.mxu0 0
        %977 = vmatprep.subr.bf16.mxu0 0
        %978 = vmatpush1.bf16.msra.mxu0 %v959
        %979 = vmatprep.subr.bf16.mxu0 0
        %980 = vmatpush1.bf16.msra.mxu0 %v958
        %981 = vmatprep.subr.bf16.mxu0 0
        %982 = vmatpush2.bf16.msra.mxu0 0
        %983 = vmatprep.subr.bf16.mxu0 0
        %984 = vmatpush2.bf16.msra.mxu0 0
        %985 = vmatprep.subr.bf16.mxu0 0
        %986 = vmatpush2.bf16.msra.mxu0 0
        %987 = vmatprep.subr.bf16.mxu0 0
        %988 = vmatpush2.bf16.msra.mxu0 0
        %989 = vmatprep.subr.bf16.mxu0 0
        %990 = vmatpush2.bf16.msra.mxu0 0
        %991 = vmatprep.subr.bf16.mxu0 0
        %992 = vmatpush2.bf16.msra.mxu0 0
        %993 = vmatprep.subr.bf16.mxu0 0
        %994 = vmatpush2.bf16.msra.mxu0 0
        %995 = vmatprep.subr.bf16.mxu0 0
        %996 = vmatpush2.bf16.msra.mxu0 0
        %997 = vmatprep.mubr.bf16.mxu0 0
        %998 = vmatmul.mubr.bf16.gmra.mxu0 %v963
        %v999 = vpop.f32.mrf.mxu0
        %v1000 = vadd.f32 0.0, %v999
        %v1001 = vpop.f32.mrf.mxu0
        %v1002 = vpop.f32.mrf.mxu0
        %v1003 = vadd.f32 0.0, %v1002
        %v1004 = vpop.f32.mrf.mxu0
        %1005 = vdwg.mxu0
        %v1006 = vadd.f32 %v940, %v1000
        %v1007 = vadd.f32 %v943, %v1003
        %v1008 = vld [vmem:[%s4 + $0x30] sm:$0xf]
        %v1009 = vld [vmem:[%s4 + $0x34] sm:$0xf]
        %v1010 = vld [vmem:[%s4 + $0x38] sm:$0xf]
        %v1011 = vld [vmem:[%s4 + $0x3c] sm:$0xf]
        %v1016 = vunpack.c.l.b16 %v1008
        %v1017 = vunpack.c.l.b16 %v1009
        %v1018 = vunpack.c.l.b16 %v1010
        %v1019 = vunpack.c.l.b16 %v1011
        %v1020 = vpack.c.b16 %v1017, %v1016
        %v1021 = vpack.c.b16 %v1019, %v1018
        %v1025 = vsel %vm845, %v819, 0
        %1027 = vmatprep.subr.bf16.mxu0 0
        %1028 = vmatpush1.bf16.msra.mxu0 0
        %1029 = vmatprep.subr.bf16.mxu0 0
        %1030 = vmatpush1.bf16.msra.mxu0 0
        %1031 = vmatprep.subr.bf16.mxu0 0
        %1032 = vmatpush1.bf16.msra.mxu0 0
        %1033 = vmatprep.subr.bf16.mxu0 0
        %1034 = vmatpush1.bf16.msra.mxu0 0
        %1035 = vmatprep.subr.bf16.mxu0 0
        %1036 = vmatpush1.bf16.msra.mxu0 0
        %1037 = vmatprep.subr.bf16.mxu0 0
        %1038 = vmatpush1.bf16.msra.mxu0 0
        %1039 = vmatprep.subr.bf16.mxu0 0
        %1040 = vmatpush1.bf16.msra.mxu0 %v1021
        %1041 = vmatprep.subr.bf16.mxu0 0
        %1042 = vmatpush1.bf16.msra.mxu0 %v1020
        %1043 = vmatprep.subr.bf16.mxu0 0
        %1044 = vmatpush2.bf16.msra.mxu0 0
        %1045 = vmatprep.subr.bf16.mxu0 0
        %1046 = vmatpush2.bf16.msra.mxu0 0
        %1047 = vmatprep.subr.bf16.mxu0 0
        %1048 = vmatpush2.bf16.msra.mxu0 0
        %1049 = vmatprep.subr.bf16.mxu0 0
        %1050 = vmatpush2.bf16.msra.mxu0 0
        %1051 = vmatprep.subr.bf16.mxu0 0
        %1052 = vmatpush2.bf16.msra.mxu0 0
        %1053 = vmatprep.subr.bf16.mxu0 0
        %1054 = vmatpush2.bf16.msra.mxu0 0
        %1055 = vmatprep.subr.bf16.mxu0 0
        %1056 = vmatpush2.bf16.msra.mxu0 0
        %1057 = vmatprep.subr.bf16.mxu0 0
        %1058 = vmatpush2.bf16.msra.mxu0 0
        %1059 = vmatprep.mubr.bf16.mxu0 0
        %1060 = vmatmul.mubr.bf16.gmra.mxu0 %v1025
        %v1061 = vpop.f32.mrf.mxu0
        %v1062 = vadd.f32 0.0, %v1061
        %v1063 = vpop.f32.mrf.mxu0
        %v1064 = vpop.f32.mrf.mxu0
        %v1065 = vadd.f32 0.0, %v1064
        %v1066 = vpop.f32.mrf.mxu0
        %1067 = vdwg.mxu0
        %v1068 = vadd.f32 %v1006, %v1062
        %v1069 = vadd.f32 %v1007, %v1065
        %v1070 = vld [vmem:[%s4 + $0x40] sm:$0xf]
        %v1071 = vld [vmem:[%s4 + $0x44] sm:$0xf]
        %v1072 = vld [vmem:[%s4 + $0x48] sm:$0xf]
        %v1073 = vld [vmem:[%s4 + $0x4c] sm:$0xf]
        %v1078 = vunpack.c.l.b16 %v1070
        %v1079 = vunpack.c.l.b16 %v1071
        %v1080 = vunpack.c.l.b16 %v1072
        %v1081 = vunpack.c.l.b16 %v1073
        %v1082 = vpack.c.b16 %v1079, %v1078
        %v1083 = vpack.c.b16 %v1081, %v1080
        %v1087 = vsel %vm845, %v820, 0
        %1089 = vmatprep.subr.bf16.mxu0 0
        %1090 = vmatpush1.bf16.msra.mxu0 0
        %1091 = vmatprep.subr.bf16.mxu0 0
        %1092 = vmatpush1.bf16.msra.mxu0 0
        %1093 = vmatprep.subr.bf16.mxu0 0
        %1094 = vmatpush1.bf16.msra.mxu0 0
        %1095 = vmatprep.subr.bf16.mxu0 0
        %1096 = vmatpush1.bf16.msra.mxu0 0
        %1097 = vmatprep.subr.bf16.mxu0 0
        %1098 = vmatpush1.bf16.msra.mxu0 0
        %1099 = vmatprep.subr.bf16.mxu0 0
        %1100 = vmatpush1.bf16.msra.mxu0 0
        %1101 = vmatprep.subr.bf16.mxu0 0
        %1102 = vmatpush1.bf16.msra.mxu0 %v1083
        %1103 = vmatprep.subr.bf16.mxu0 0
        %1104 = vmatpush1.bf16.msra.mxu0 %v1082
        %1105 = vmatprep.subr.bf16.mxu0 0
        %1106 = vmatpush2.bf16.msra.mxu0 0
        %1107 = vmatprep.subr.bf16.mxu0 0
        %1108 = vmatpush2.bf16.msra.mxu0 0
        %1109 = vmatprep.subr.bf16.mxu0 0
        %1110 = vmatpush2.bf16.msra.mxu0 0
        %1111 = vmatprep.subr.bf16.mxu0 0
        %1112 = vmatpush2.bf16.msra.mxu0 0
        %1113 = vmatprep.subr.bf16.mxu0 0
        %1114 = vmatpush2.bf16.msra.mxu0 0
        %1115 = vmatprep.subr.bf16.mxu0 0
        %1116 = vmatpush2.bf16.msra.mxu0 0
        %1117 = vmatprep.subr.bf16.mxu0 0
        %1118 = vmatpush2.bf16.msra.mxu0 0
        %1119 = vmatprep.subr.bf16.mxu0 0
        %1120 = vmatpush2.bf16.msra.mxu0 0
        %1121 = vmatprep.mubr.bf16.mxu0 0
        %1122 = vmatmul.mubr.bf16.gmra.mxu0 %v1087
        %v1123 = vpop.f32.mrf.mxu0
        %v1124 = vadd.f32 0.0, %v1123
        %v1125 = vpop.f32.mrf.mxu0
        %v1126 = vpop.f32.mrf.mxu0
        %v1127 = vadd.f32 0.0, %v1126
        %v1128 = vpop.f32.mrf.mxu0
        %1129 = vdwg.mxu0
        %v1130 = vadd.f32 %v1068, %v1124
        %v1131 = vadd.f32 %v1069, %v1127
        %v1132 = vld [vmem:[%s4 + $0x50] sm:$0xf]
        %v1133 = vld [vmem:[%s4 + $0x54] sm:$0xf]
        %v1134 = vld [vmem:[%s4 + $0x58] sm:$0xf]
        %v1135 = vld [vmem:[%s4 + $0x5c] sm:$0xf]
        %v1140 = vunpack.c.l.b16 %v1132
        %v1141 = vunpack.c.l.b16 %v1133
        %v1142 = vunpack.c.l.b16 %v1134
        %v1143 = vunpack.c.l.b16 %v1135
        %v1144 = vpack.c.b16 %v1141, %v1140
        %v1145 = vpack.c.b16 %v1143, %v1142
        %v1149 = vsel %vm845, %v821, 0
        %1151 = vmatprep.subr.bf16.mxu0 0
        %1152 = vmatpush1.bf16.msra.mxu0 0
        %1153 = vmatprep.subr.bf16.mxu0 0
        %1154 = vmatpush1.bf16.msra.mxu0 0
        %1155 = vmatprep.subr.bf16.mxu0 0
        %1156 = vmatpush1.bf16.msra.mxu0 0
        %1157 = vmatprep.subr.bf16.mxu0 0
        %1158 = vmatpush1.bf16.msra.mxu0 0
        %1159 = vmatprep.subr.bf16.mxu0 0
        %1160 = vmatpush1.bf16.msra.mxu0 0
        %1161 = vmatprep.subr.bf16.mxu0 0
        %1162 = vmatpush1.bf16.msra.mxu0 0
        %1163 = vmatprep.subr.bf16.mxu0 0
        %1164 = vmatpush1.bf16.msra.mxu0 %v1145
        %1165 = vmatprep.subr.bf16.mxu0 0
        %1166 = vmatpush1.bf16.msra.mxu0 %v1144
        %1167 = vmatprep.subr.bf16.mxu0 0
        %1168 = vmatpush2.bf16.msra.mxu0 0
        %1169 = vmatprep.subr.bf16.mxu0 0
        %1170 = vmatpush2.bf16.msra.mxu0 0
        %1171 = vmatprep.subr.bf16.mxu0 0
        %1172 = vmatpush2.bf16.msra.mxu0 0
        %1173 = vmatprep.subr.bf16.mxu0 0
        %1174 = vmatpush2.bf16.msra.mxu0 0
        %1175 = vmatprep.subr.bf16.mxu0 0
        %1176 = vmatpush2.bf16.msra.mxu0 0
        %1177 = vmatprep.subr.bf16.mxu0 0
        %1178 = vmatpush2.bf16.msra.mxu0 0
        %1179 = vmatprep.subr.bf16.mxu0 0
        %1180 = vmatpush2.bf16.msra.mxu0 0
        %1181 = vmatprep.subr.bf16.mxu0 0
        %1182 = vmatpush2.bf16.msra.mxu0 0
        %1183 = vmatprep.mubr.bf16.mxu0 0
        %1184 = vmatmul.mubr.bf16.gmra.mxu0 %v1149
        %v1185 = vpop.f32.mrf.mxu0
        %v1186 = vadd.f32 0.0, %v1185
        %v1187 = vpop.f32.mrf.mxu0
        %v1188 = vpop.f32.mrf.mxu0
        %v1189 = vadd.f32 0.0, %v1188
        %v1190 = vpop.f32.mrf.mxu0
        %1191 = vdwg.mxu0
        %v1192 = vadd.f32 %v1130, %v1186
        %v1193 = vadd.f32 %v1131, %v1189
        %v1194 = vld [vmem:[%s4 + $0x60] sm:$0xf]
        %v1195 = vld [vmem:[%s4 + $0x64] sm:$0xf]
        %v1196 = vld [vmem:[%s4 + $0x68] sm:$0xf]
        %v1197 = vld [vmem:[%s4 + $0x6c] sm:$0xf]
        %v1202 = vunpack.c.l.b16 %v1194
        %v1203 = vunpack.c.l.b16 %v1195
        %v1204 = vunpack.c.l.b16 %v1196
        %v1205 = vunpack.c.l.b16 %v1197
        %v1206 = vpack.c.b16 %v1203, %v1202
        %v1207 = vpack.c.b16 %v1205, %v1204
        %v1211 = vsel %vm845, %v822, 0
        %1213 = vmatprep.subr.bf16.mxu0 0
        %1214 = vmatpush1.bf16.msra.mxu0 0
        %1215 = vmatprep.subr.bf16.mxu0 0
        %1216 = vmatpush1.bf16.msra.mxu0 0
        %1217 = vmatprep.subr.bf16.mxu0 0
        %1218 = vmatpush1.bf16.msra.mxu0 0
        %1219 = vmatprep.subr.bf16.mxu0 0
        %1220 = vmatpush1.bf16.msra.mxu0 0
        %1221 = vmatprep.subr.bf16.mxu0 0
        %1222 = vmatpush1.bf16.msra.mxu0 0
        %1223 = vmatprep.subr.bf16.mxu0 0
        %1224 = vmatpush1.bf16.msra.mxu0 0
        %1225 = vmatprep.subr.bf16.mxu0 0
        %1226 = vmatpush1.bf16.msra.mxu0 %v1207
        %1227 = vmatprep.subr.bf16.mxu0 0
        %1228 = vmatpush1.bf16.msra.mxu0 %v1206
        %1229 = vmatprep.subr.bf16.mxu0 0
        %1230 = vmatpush2.bf16.msra.mxu0 0
        %1231 = vmatprep.subr.bf16.mxu0 0
        %1232 = vmatpush2.bf16.msra.mxu0 0
        %1233 = vmatprep.subr.bf16.mxu0 0
        %1234 = vmatpush2.bf16.msra.mxu0 0
        %1235 = vmatprep.subr.bf16.mxu0 0
        %1236 = vmatpush2.bf16.msra.mxu0 0
        %1237 = vmatprep.subr.bf16.mxu0 0
        %1238 = vmatpush2.bf16.msra.mxu0 0
        %1239 = vmatprep.subr.bf16.mxu0 0
        %1240 = vmatpush2.bf16.msra.mxu0 0
        %1241 = vmatprep.subr.bf16.mxu0 0
        %1242 = vmatpush2.bf16.msra.mxu0 0
        %1243 = vmatprep.subr.bf16.mxu0 0
        %1244 = vmatpush2.bf16.msra.mxu0 0
        %1245 = vmatprep.mubr.bf16.mxu0 0
        %1246 = vmatmul.mubr.bf16.gmra.mxu0 %v1211
        %v1247 = vpop.f32.mrf.mxu0
        %v1248 = vadd.f32 0.0, %v1247
        %v1249 = vpop.f32.mrf.mxu0
        %v1250 = vpop.f32.mrf.mxu0
        %v1251 = vadd.f32 0.0, %v1250
        %v1252 = vpop.f32.mrf.mxu0
        %1253 = vdwg.mxu0
        %v1254 = vadd.f32 %v1192, %v1248
        %v1255 = vadd.f32 %v1193, %v1251
        %v1256 = vld [vmem:[%s4 + $0x70] sm:$0xf]
        %v1257 = vld [vmem:[%s4 + $0x74] sm:$0xf]
        %v1258 = vld [vmem:[%s4 + $0x78] sm:$0xf]
        %v1259 = vld [vmem:[%s4 + $0x7c] sm:$0xf]
        %v1264 = vunpack.c.l.b16 %v1256
        %v1265 = vunpack.c.l.b16 %v1257
        %v1266 = vunpack.c.l.b16 %v1258
        %v1267 = vunpack.c.l.b16 %v1259
        %v1268 = vpack.c.b16 %v1265, %v1264
        %v1269 = vpack.c.b16 %v1267, %v1266
        %v1273 = vsel %vm845, %v823, 0
        %1275 = vmatprep.subr.bf16.mxu0 0
        %1276 = vmatpush1.bf16.msra.mxu0 0
        %1277 = vmatprep.subr.bf16.mxu0 0
        %1278 = vmatpush1.bf16.msra.mxu0 0
        %1279 = vmatprep.subr.bf16.mxu0 0
        %1280 = vmatpush1.bf16.msra.mxu0 0
        %1281 = vmatprep.subr.bf16.mxu0 0
        %1282 = vmatpush1.bf16.msra.mxu0 0
        %1283 = vmatprep.subr.bf16.mxu0 0
        %1284 = vmatpush1.bf16.msra.mxu0 0
        %1285 = vmatprep.subr.bf16.mxu0 0
        %1286 = vmatpush1.bf16.msra.mxu0 0
        %1287 = vmatprep.subr.bf16.mxu0 0
        %1288 = vmatpush1.bf16.msra.mxu0 %v1269
        %1289 = vmatprep.subr.bf16.mxu0 0
        %1290 = vmatpush1.bf16.msra.mxu0 %v1268
        %1291 = vmatprep.subr.bf16.mxu0 0
        %1292 = vmatpush2.bf16.msra.mxu0 0
        %1293 = vmatprep.subr.bf16.mxu0 0
        %1294 = vmatpush2.bf16.msra.mxu0 0
        %1295 = vmatprep.subr.bf16.mxu0 0
        %1296 = vmatpush2.bf16.msra.mxu0 0
        %1297 = vmatprep.subr.bf16.mxu0 0
        %1298 = vmatpush2.bf16.msra.mxu0 0
        %1299 = vmatprep.subr.bf16.mxu0 0
        %1300 = vmatpush2.bf16.msra.mxu0 0
        %1301 = vmatprep.subr.bf16.mxu0 0
        %1302 = vmatpush2.bf16.msra.mxu0 0
        %1303 = vmatprep.subr.bf16.mxu0 0
        %1304 = vmatpush2.bf16.msra.mxu0 0
        %1305 = vmatprep.subr.bf16.mxu0 0
        %1306 = vmatpush2.bf16.msra.mxu0 0
        %1307 = vmatprep.mubr.bf16.mxu0 0
        %1308 = vmatmul.mubr.bf16.gmra.mxu0 %v1273
        %v1309 = vpop.f32.mrf.mxu0
        %v1310 = vadd.f32 0.0, %v1309
        %v1311 = vpop.f32.mrf.mxu0
        %v1312 = vpop.f32.mrf.mxu0
        %v1313 = vadd.f32 0.0, %v1312
        %v1314 = vpop.f32.mrf.mxu0
        %1315 = vdwg.mxu0
        %v1316 = vadd.f32 %v1254, %v1310
        %v1317 = vadd.f32 %v1255, %v1313
        %v1318 = vld [vmem:[%s4 + $0x80] sm:$0xf]
        %v1319 = vld [vmem:[%s4 + $0x84] sm:$0xf]
        %v1320 = vld [vmem:[%s4 + $0x88] sm:$0xf]
        %v1321 = vld [vmem:[%s4 + $0x8c] sm:$0xf]
        %v1326 = vunpack.c.l.b16 %v1318
        %v1327 = vunpack.c.l.b16 %v1319
        %v1328 = vunpack.c.l.b16 %v1320
        %v1329 = vunpack.c.l.b16 %v1321
        %v1330 = vpack.c.b16 %v1327, %v1326
        %v1331 = vpack.c.b16 %v1329, %v1328
        %v1335 = vsel %vm845, %v824, 0
        %1337 = vmatprep.subr.bf16.mxu0 0
        %1338 = vmatpush1.bf16.msra.mxu0 0
        %1339 = vmatprep.subr.bf16.mxu0 0
        %1340 = vmatpush1.bf16.msra.mxu0 0
        %1341 = vmatprep.subr.bf16.mxu0 0
        %1342 = vmatpush1.bf16.msra.mxu0 0
        %1343 = vmatprep.subr.bf16.mxu0 0
        %1344 = vmatpush1.bf16.msra.mxu0 0
        %1345 = vmatprep.subr.bf16.mxu0 0
        %1346 = vmatpush1.bf16.msra.mxu0 0
        %1347 = vmatprep.subr.bf16.mxu0 0
        %1348 = vmatpush1.bf16.msra.mxu0 0
        %1349 = vmatprep.subr.bf16.mxu0 0
        %1350 = vmatpush1.bf16.msra.mxu0 %v1331
        %1351 = vmatprep.subr.bf16.mxu0 0
        %1352 = vmatpush1.bf16.msra.mxu0 %v1330
        %1353 = vmatprep.subr.bf16.mxu0 0
        %1354 = vmatpush2.bf16.msra.mxu0 0
        %1355 = vmatprep.subr.bf16.mxu0 0
        %1356 = vmatpush2.bf16.msra.mxu0 0
        %1357 = vmatprep.subr.bf16.mxu0 0
        %1358 = vmatpush2.bf16.msra.mxu0 0
        %1359 = vmatprep.subr.bf16.mxu0 0
        %1360 = vmatpush2.bf16.msra.mxu0 0
        %1361 = vmatprep.subr.bf16.mxu0 0
        %1362 = vmatpush2.bf16.msra.mxu0 0
        %1363 = vmatprep.subr.bf16.mxu0 0
        %1364 = vmatpush2.bf16.msra.mxu0 0
        %1365 = vmatprep.subr.bf16.mxu0 0
        %1366 = vmatpush2.bf16.msra.mxu0 0
        %1367 = vmatprep.subr.bf16.mxu0 0
        %1368 = vmatpush2.bf16.msra.mxu0 0
        %1369 = vmatprep.mubr.bf16.mxu0 0
        %1370 = vmatmul.mubr.bf16.gmra.mxu0 %v1335
        %v1371 = vpop.f32.mrf.mxu0
        %v1372 = vadd.f32 0.0, %v1371
        %v1373 = vpop.f32.mrf.mxu0
        %v1374 = vpop.f32.mrf.mxu0
        %v1375 = vadd.f32 0.0, %v1374
        %v1376 = vpop.f32.mrf.mxu0
        %1377 = vdwg.mxu0
        %v1378 = vadd.f32 %v1316, %v1372
        %v1379 = vadd.f32 %v1317, %v1375
        %v1380 = vld [vmem:[%s5] sm:$0x1]
        %v1382 = vlaneseq
        %v1383 = vshrl.u32 %v1382, 7
        %v1384 = vsub.s32 0, %v1383
        %v1385 = vrot.slane %v1380, %v1384
        %v1387 = vadd.f32 %v1378, %v1385
        %v1388 = vadd.f32 %v1379, %v1385
        %v1389 = vmax.f32 %v1387, 0.0
        %v1390 = vmax.f32 %v1388, 0.0
        %v1391 = vpack.c.bf16 %v1390, %v1389
        %v1392 = vld [vmem:[%s6] sm:$0xf]
        %v1393 = vld [vmem:[%s6 + $0x4] sm:$0xf]
        %v1394 = vld [vmem:[%s6 + $0x8] sm:$0xf]
        %v1395 = vld [vmem:[%s6 + $0xc] sm:$0xf]
        %v1396 = vld [vmem:[%s6 + $0x10] sm:$0xf]
        %v1397 = vld [vmem:[%s6 + $0x14] sm:$0xf]
        %v1398 = vld [vmem:[%s6 + $0x18] sm:$0xf]
        %v1399 = vld [vmem:[%s6 + $0x1c] sm:$0xf]
        %v1400 = vld [vmem:[%s6 + $0x20] sm:$0xf]
        %v1401 = vld [vmem:[%s6 + $0x24] sm:$0xf]
        %v1402 = vld [vmem:[%s6 + $0x28] sm:$0xf]
        %v1403 = vld [vmem:[%s6 + $0x2c] sm:$0xf]
        %v1404 = vld [vmem:[%s6 + $0x30] sm:$0xf]
        %v1405 = vld [vmem:[%s6 + $0x34] sm:$0xf]
        %v1406 = vld [vmem:[%s6 + $0x38] sm:$0xf]
        %v1407 = vld [vmem:[%s6 + $0x3c] sm:$0xf]
        %v1408 = vld [vmem:[%s6 + $0x40] sm:$0xf]
        %v1409 = vld [vmem:[%s6 + $0x44] sm:$0xf]
        %v1428 = vunpack.c.l.b16 %v1392
        %v1429 = vunpack.c.l.b16 %v1393
        %v1430 = vunpack.c.l.b16 %v1394
        %v1431 = vunpack.c.l.b16 %v1395
        %v1432 = vunpack.c.l.b16 %v1396
        %v1433 = vunpack.c.l.b16 %v1397
        %v1434 = vunpack.c.l.b16 %v1398
        %v1435 = vunpack.c.l.b16 %v1399
        %v1436 = vunpack.c.l.b16 %v1400
        %v1437 = vunpack.c.l.b16 %v1401
        %v1438 = vunpack.c.l.b16 %v1402
        %v1439 = vunpack.c.l.b16 %v1403
        %v1440 = vunpack.c.l.b16 %v1404
        %v1441 = vunpack.c.l.b16 %v1405
        %v1442 = vunpack.c.l.b16 %v1406
        %v1443 = vunpack.c.l.b16 %v1407
        %v1444 = vunpack.c.l.b16 %v1408
        %v1445 = vunpack.c.l.b16 %v1409
        %v1446 = vpack.c.b16 %v1429, %v1428
        %v1447 = vpack.c.b16 %v1431, %v1430
        %v1448 = vpack.c.b16 %v1433, %v1432
        %v1449 = vpack.c.b16 %v1435, %v1434
        %v1450 = vpack.c.b16 %v1437, %v1436
        %v1451 = vpack.c.b16 %v1439, %v1438
        %v1452 = vpack.c.b16 %v1441, %v1440
        %v1453 = vpack.c.b16 %v1443, %v1442
        %v1454 = vpack.c.b16 %v1445, %v1444
        %vm1455 = vcmask 130048
        %v1457 = vsel %vm1455, %v1446, 0
        %v1460 = vsel %vm1455, %v1447, 0
        %v1463 = vsel %vm1455, %v1448, 0
        %v1466 = vsel %vm1455, %v1449, 0
        %v1469 = vsel %vm1455, %v1450, 0
        %v1472 = vsel %vm1455, %v1451, 0
        %v1475 = vsel %vm1455, %v1452, 0
        %v1478 = vsel %vm1455, %v1453, 0
        %v1481 = vsel %vm1455, %v1454, 0
        %1483 = vmatprep.subr.bf16.mxu0 0
        %1484 = vmatpush1.bf16.msra.mxu0 0
        %1485 = vmatprep.subr.bf16.mxu0 0
        %1486 = vmatpush1.bf16.msra.mxu0 0
        %1487 = vmatprep.subr.bf16.mxu0 0
        %1488 = vmatpush1.bf16.msra.mxu0 0
        %1489 = vmatprep.subr.bf16.mxu0 0
        %1490 = vmatpush1.bf16.msra.mxu0 0
        %1491 = vmatprep.subr.bf16.mxu0 0
        %1492 = vmatpush1.bf16.msra.mxu0 0
        %1493 = vmatprep.subr.bf16.mxu0 0
        %1494 = vmatpush1.bf16.msra.mxu0 0
        %1495 = vmatprep.subr.bf16.mxu0 0
        %1496 = vmatpush1.bf16.msra.mxu0 0
        %1497 = vmatprep.subr.bf16.mxu0 0
        %1498 = vmatpush1.bf16.msra.mxu0 %v1391
        %1499 = vmatprep.subr.bf16.mxu0 0
        %1500 = vmatpush2.bf16.msra.mxu0 0
        %1501 = vmatprep.subr.bf16.mxu0 0
        %1502 = vmatpush2.bf16.msra.mxu0 0
        %1503 = vmatprep.subr.bf16.mxu0 0
        %1504 = vmatpush2.bf16.msra.mxu0 0
        %1505 = vmatprep.subr.bf16.mxu0 0
        %1506 = vmatpush2.bf16.msra.mxu0 0
        %1507 = vmatprep.subr.bf16.mxu0 0
        %1508 = vmatpush2.bf16.msra.mxu0 0
        %1509 = vmatprep.subr.bf16.mxu0 0
        %1510 = vmatpush2.bf16.msra.mxu0 0
        %1511 = vmatprep.subr.bf16.mxu0 0
        %1512 = vmatpush2.bf16.msra.mxu0 0
        %1513 = vmatprep.subr.bf16.mxu0 0
        %1514 = vmatpush2.bf16.msra.mxu0 0
        %1515 = vmatprep.mubr.bf16.mxu0 0
        %1516 = vmatmul.mubr.bf16.gmra.mxu0 %v1457
        %v1517 = vpop.f32.mrf.mxu0
        %v1518 = vadd.f32 0.0, %v1517
        %v1519 = vpop.f32.mrf.mxu0
        %v1520 = vpop.f32.mrf.mxu0
        %v1521 = vadd.f32 0.0, %v1520
        %v1522 = vpop.f32.mrf.mxu0
        %1523 = vmatprep.mubr.bf16.mxu0 0
        %1524 = vmatmul.mubr.bf16.gmra.mxu0 %v1460
        %v1525 = vpop.f32.mrf.mxu0
        %v1526 = vadd.f32 0.0, %v1525
        %v1527 = vpop.f32.mrf.mxu0
        %v1528 = vpop.f32.mrf.mxu0
        %v1529 = vadd.f32 0.0, %v1528
        %v1530 = vpop.f32.mrf.mxu0
        %1531 = vmatprep.mubr.bf16.mxu0 0
        %1532 = vmatmul.mubr.bf16.gmra.mxu0 %v1463
        %v1533 = vpop.f32.mrf.mxu0
        %v1534 = vadd.f32 0.0, %v1533
        %v1535 = vpop.f32.mrf.mxu0
        %v1536 = vpop.f32.mrf.mxu0
        %v1537 = vadd.f32 0.0, %v1536
        %v1538 = vpop.f32.mrf.mxu0
        %1539 = vmatprep.mubr.bf16.mxu0 0
        %1540 = vmatmul.mubr.bf16.gmra.mxu0 %v1466
        %v1541 = vpop.f32.mrf.mxu0
        %v1542 = vadd.f32 0.0, %v1541
        %v1543 = vpop.f32.mrf.mxu0
        %v1544 = vpop.f32.mrf.mxu0
        %v1545 = vadd.f32 0.0, %v1544
        %v1546 = vpop.f32.mrf.mxu0
        %1547 = vmatprep.mubr.bf16.mxu0 0
        %1548 = vmatmul.mubr.bf16.gmra.mxu0 %v1469
        %v1549 = vpop.f32.mrf.mxu0
        %v1550 = vadd.f32 0.0, %v1549
        %v1551 = vpop.f32.mrf.mxu0
        %v1552 = vpop.f32.mrf.mxu0
        %v1553 = vadd.f32 0.0, %v1552
        %v1554 = vpop.f32.mrf.mxu0
        %1555 = vmatprep.mubr.bf16.mxu0 0
        %1556 = vmatmul.mubr.bf16.gmra.mxu0 %v1472
        %v1557 = vpop.f32.mrf.mxu0
        %v1558 = vadd.f32 0.0, %v1557
        %v1559 = vpop.f32.mrf.mxu0
        %v1560 = vpop.f32.mrf.mxu0
        %v1561 = vadd.f32 0.0, %v1560
        %v1562 = vpop.f32.mrf.mxu0
        %1563 = vmatprep.mubr.bf16.mxu0 0
        %1564 = vmatmul.mubr.bf16.gmra.mxu0 %v1475
        %v1565 = vpop.f32.mrf.mxu0
        %v1566 = vadd.f32 0.0, %v1565
        %v1567 = vpop.f32.mrf.mxu0
        %v1568 = vpop.f32.mrf.mxu0
        %v1569 = vadd.f32 0.0, %v1568
        %v1570 = vpop.f32.mrf.mxu0
        %1571 = vmatprep.mubr.bf16.mxu0 0
        %1572 = vmatmul.mubr.bf16.gmra.mxu0 %v1478
        %v1573 = vpop.f32.mrf.mxu0
        %v1574 = vadd.f32 0.0, %v1573
        %v1575 = vpop.f32.mrf.mxu0
        %v1576 = vpop.f32.mrf.mxu0
        %v1577 = vadd.f32 0.0, %v1576
        %v1578 = vpop.f32.mrf.mxu0
        %1579 = vmatprep.mubr.bf16.mxu0 0
        %1580 = vmatmul.mubr.bf16.gmra.mxu0 %v1481
        %v1581 = vpop.f32.mrf.mxu0
        %v1582 = vadd.f32 0.0, %v1581
        %v1583 = vpop.f32.mrf.mxu0
        %v1584 = vpop.f32.mrf.mxu0
        %v1585 = vadd.f32 0.0, %v1584
        %v1586 = vpop.f32.mrf.mxu0
        %1587 = vdwg.mxu0
        %v1588 = vpack.c.bf16 %v1521, %v1518
        %v1589 = vpack.c.bf16 %v1529, %v1526
        %v1590 = vpack.c.bf16 %v1537, %v1534
        %v1591 = vpack.c.bf16 %v1545, %v1542
        %v1592 = vpack.c.bf16 %v1553, %v1550
        %v1593 = vpack.c.bf16 %v1561, %v1558
        %v1594 = vpack.c.bf16 %v1569, %v1566
        %v1595 = vpack.c.bf16 %v1577, %v1574
        %v1596 = vpack.c.bf16 %v1585, %v1582
        %v1597 = vld [vmem:[%s7] sm:$0xf]
        %v1598 = vld [vmem:[%s7 + $0x4] sm:$0xf]
        %v1599 = vld [vmem:[%s7 + $0x8] sm:$0xf]
        %v1600 = vld [vmem:[%s7 + $0xc] sm:$0xf]
        %v1601 = vld [vmem:[%s7 + $0x10] sm:$0xf]
        %v1602 = vld [vmem:[%s7 + $0x14] sm:$0xf]
        %v1603 = vld [vmem:[%s7 + $0x18] sm:$0xf]
        %v1604 = vld [vmem:[%s7 + $0x1c] sm:$0xf]
        %v1609 = vunpack.c.l.b16 %v1601
        %v1610 = vunpack.c.l.b16 %v1602
        %v1611 = vunpack.c.l.b16 %v1603
        %v1612 = vunpack.c.l.b16 %v1604
        %v1613 = vpack.c.b16 %v1610, %v1609
        %v1614 = vpack.c.b16 %v1612, %v1611
        %v1618 = vsel %vm845, %v1589, 0
        %1620 = vmatprep.subr.bf16.mxu0 0
        %1621 = vmatpush1.bf16.msra.mxu0 0
        %1622 = vmatprep.subr.bf16.mxu0 0
        %1623 = vmatpush1.bf16.msra.mxu0 0
        %1624 = vmatprep.subr.bf16.mxu0 0
        %1625 = vmatpush1.bf16.msra.mxu0 0
        %1626 = vmatprep.subr.bf16.mxu0 0
        %1627 = vmatpush1.bf16.msra.mxu0 0
        %1628 = vmatprep.subr.bf16.mxu0 0
        %1629 = vmatpush1.bf16.msra.mxu0 0
        %1630 = vmatprep.subr.bf16.mxu0 0
        %1631 = vmatpush1.bf16.msra.mxu0 0
        %1632 = vmatprep.subr.bf16.mxu0 0
        %1633 = vmatpush1.bf16.msra.mxu0 %v1614
        %1634 = vmatprep.subr.bf16.mxu0 0
        %1635 = vmatpush1.bf16.msra.mxu0 %v1613
        %1636 = vmatprep.subr.bf16.mxu0 0
        %1637 = vmatpush2.bf16.msra.mxu0 0
        %1638 = vmatprep.subr.bf16.mxu0 0
        %1639 = vmatpush2.bf16.msra.mxu0 0
        %1640 = vmatprep.subr.bf16.mxu0 0
        %1641 = vmatpush2.bf16.msra.mxu0 0
        %1642 = vmatprep.subr.bf16.mxu0 0
        %1643 = vmatpush2.bf16.msra.mxu0 0
        %1644 = vmatprep.subr.bf16.mxu0 0
        %1645 = vmatpush2.bf16.msra.mxu0 0
        %1646 = vmatprep.subr.bf16.mxu0 0
        %1647 = vmatpush2.bf16.msra.mxu0 0
        %1648 = vmatprep.subr.bf16.mxu0 0
        %1649 = vmatpush2.bf16.msra.mxu0 0
        %1650 = vmatprep.subr.bf16.mxu0 0
        %1651 = vmatpush2.bf16.msra.mxu0 0
        %1652 = vmatprep.mubr.bf16.mxu0 0
        %1653 = vmatmul.mubr.bf16.gmra.mxu0 %v1618
        %v1654 = vpop.f32.mrf.mxu0
        %v1655 = vadd.f32 0.0, %v1654
        %v1656 = vpop.f32.mrf.mxu0
        %v1657 = vpop.f32.mrf.mxu0
        %v1658 = vadd.f32 0.0, %v1657
        %v1659 = vpop.f32.mrf.mxu0
        %1660 = vdwg.mxu0
        %v1665 = vunpack.c.l.b16 %v1597
        %v1666 = vunpack.c.l.b16 %v1598
        %v1667 = vunpack.c.l.b16 %v1599
        %v1668 = vunpack.c.l.b16 %v1600
        %v1669 = vpack.c.b16 %v1666, %v1665
        %v1670 = vpack.c.b16 %v1668, %v1667
        %v1674 = vsel %vm845, %v1588, 0
        %1676 = vmatprep.subr.bf16.mxu0 0
        %1677 = vmatpush1.bf16.msra.mxu0 0
        %1678 = vmatprep.subr.bf16.mxu0 0
        %1679 = vmatpush1.bf16.msra.mxu0 0
        %1680 = vmatprep.subr.bf16.mxu0 0
        %1681 = vmatpush1.bf16.msra.mxu0 0
        %1682 = vmatprep.subr.bf16.mxu0 0
        %1683 = vmatpush1.bf16.msra.mxu0 0
        %1684 = vmatprep.subr.bf16.mxu0 0
        %1685 = vmatpush1.bf16.msra.mxu0 0
        %1686 = vmatprep.subr.bf16.mxu0 0
        %1687 = vmatpush1.bf16.msra.mxu0 0
        %1688 = vmatprep.subr.bf16.mxu0 0
        %1689 = vmatpush1.bf16.msra.mxu0 %v1670
        %1690 = vmatprep.subr.bf16.mxu0 0
        %1691 = vmatpush1.bf16.msra.mxu0 %v1669
        %1692 = vmatprep.subr.bf16.mxu0 0
        %1693 = vmatpush2.bf16.msra.mxu0 0
        %1694 = vmatprep.subr.bf16.mxu0 0
        %1695 = vmatpush2.bf16.msra.mxu0 0
        %1696 = vmatprep.subr.bf16.mxu0 0
        %1697 = vmatpush2.bf16.msra.mxu0 0
        %1698 = vmatprep.subr.bf16.mxu0 0
        %1699 = vmatpush2.bf16.msra.mxu0 0
        %1700 = vmatprep.subr.bf16.mxu0 0
        %1701 = vmatpush2.bf16.msra.mxu0 0
        %1702 = vmatprep.subr.bf16.mxu0 0
        %1703 = vmatpush2.bf16.msra.mxu0 0
        %1704 = vmatprep.subr.bf16.mxu0 0
        %1705 = vmatpush2.bf16.msra.mxu0 0
        %1706 = vmatprep.subr.bf16.mxu0 0
        %1707 = vmatpush2.bf16.msra.mxu0 0
        %1708 = vmatprep.mubr.bf16.mxu0 0
        %1709 = vmatmul.mubr.bf16.gmra.mxu0 %v1674
        %v1710 = vpop.f32.mrf.mxu0
        %v1711 = vadd.f32 %v1655, %v1710
        %v1712 = vpop.f32.mrf.mxu0
        %v1713 = vpop.f32.mrf.mxu0
        %v1714 = vadd.f32 %v1658, %v1713
        %v1715 = vpop.f32.mrf.mxu0
        %1716 = vdwg.mxu0
        %v1717 = vld [vmem:[%s7 + $0x20] sm:$0xf]
        %v1718 = vld [vmem:[%s7 + $0x24] sm:$0xf]
        %v1719 = vld [vmem:[%s7 + $0x28] sm:$0xf]
        %v1720 = vld [vmem:[%s7 + $0x2c] sm:$0xf]
        %v1725 = vunpack.c.l.b16 %v1717
        %v1726 = vunpack.c.l.b16 %v1718
        %v1727 = vunpack.c.l.b16 %v1719
        %v1728 = vunpack.c.l.b16 %v1720
        %v1729 = vpack.c.b16 %v1726, %v1725
        %v1730 = vpack.c.b16 %v1728, %v1727
        %v1734 = vsel %vm845, %v1590, 0
        %1736 = vmatprep.subr.bf16.mxu0 0
        %1737 = vmatpush1.bf16.msra.mxu0 0
        %1738 = vmatprep.subr.bf16.mxu0 0
        %1739 = vmatpush1.bf16.msra.mxu0 0
        %1740 = vmatprep.subr.bf16.mxu0 0
        %1741 = vmatpush1.bf16.msra.mxu0 0
        %1742 = vmatprep.subr.bf16.mxu0 0
        %1743 = vmatpush1.bf16.msra.mxu0 0
        %1744 = vmatprep.subr.bf16.mxu0 0
        %1745 = vmatpush1.bf16.msra.mxu0 0
        %1746 = vmatprep.subr.bf16.mxu0 0
        %1747 = vmatpush1.bf16.msra.mxu0 0
        %1748 = vmatprep.subr.bf16.mxu0 0
        %1749 = vmatpush1.bf16.msra.mxu0 %v1730
        %1750 = vmatprep.subr.bf16.mxu0 0
        %1751 = vmatpush1.bf16.msra.mxu0 %v1729
        %1752 = vmatprep.subr.bf16.mxu0 0
        %1753 = vmatpush2.bf16.msra.mxu0 0
        %1754 = vmatprep.subr.bf16.mxu0 0
        %1755 = vmatpush2.bf16.msra.mxu0 0
        %1756 = vmatprep.subr.bf16.mxu0 0
        %1757 = vmatpush2.bf16.msra.mxu0 0
        %1758 = vmatprep.subr.bf16.mxu0 0
        %1759 = vmatpush2.bf16.msra.mxu0 0
        %1760 = vmatprep.subr.bf16.mxu0 0
        %1761 = vmatpush2.bf16.msra.mxu0 0
        %1762 = vmatprep.subr.bf16.mxu0 0
        %1763 = vmatpush2.bf16.msra.mxu0 0
        %1764 = vmatprep.subr.bf16.mxu0 0
        %1765 = vmatpush2.bf16.msra.mxu0 0
        %1766 = vmatprep.subr.bf16.mxu0 0
        %1767 = vmatpush2.bf16.msra.mxu0 0
        %1768 = vmatprep.mubr.bf16.mxu0 0
        %1769 = vmatmul.mubr.bf16.gmra.mxu0 %v1734
        %v1770 = vpop.f32.mrf.mxu0
        %v1771 = vadd.f32 0.0, %v1770
        %v1772 = vpop.f32.mrf.mxu0
        %v1773 = vpop.f32.mrf.mxu0
        %v1774 = vadd.f32 0.0, %v1773
        %v1775 = vpop.f32.mrf.mxu0
        %1776 = vdwg.mxu0
        %v1777 = vadd.f32 %v1711, %v1771
        %v1778 = vadd.f32 %v1714, %v1774
        %v1779 = vld [vmem:[%s7 + $0x30] sm:$0xf]
        %v1780 = vld [vmem:[%s7 + $0x34] sm:$0xf]
        %v1781 = vld [vmem:[%s7 + $0x38] sm:$0xf]
        %v1782 = vld [vmem:[%s7 + $0x3c] sm:$0xf]
        %v1787 = vunpack.c.l.b16 %v1779
        %v1788 = vunpack.c.l.b16 %v1780
        %v1789 = vunpack.c.l.b16 %v1781
        %v1790 = vunpack.c.l.b16 %v1782
        %v1791 = vpack.c.b16 %v1788, %v1787
        %v1792 = vpack.c.b16 %v1790, %v1789
        %v1796 = vsel %vm845, %v1591, 0
        %1798 = vmatprep.subr.bf16.mxu0 0
        %1799 = vmatpush1.bf16.msra.mxu0 0
        %1800 = vmatprep.subr.bf16.mxu0 0
        %1801 = vmatpush1.bf16.msra.mxu0 0
        %1802 = vmatprep.subr.bf16.mxu0 0
        %1803 = vmatpush1.bf16.msra.mxu0 0
        %1804 = vmatprep.subr.bf16.mxu0 0
        %1805 = vmatpush1.bf16.msra.mxu0 0
        %1806 = vmatprep.subr.bf16.mxu0 0
        %1807 = vmatpush1.bf16.msra.mxu0 0
        %1808 = vmatprep.subr.bf16.mxu0 0
        %1809 = vmatpush1.bf16.msra.mxu0 0
        %1810 = vmatprep.subr.bf16.mxu0 0
        %1811 = vmatpush1.bf16.msra.mxu0 %v1792
        %1812 = vmatprep.subr.bf16.mxu0 0
        %1813 = vmatpush1.bf16.msra.mxu0 %v1791
        %1814 = vmatprep.subr.bf16.mxu0 0
        %1815 = vmatpush2.bf16.msra.mxu0 0
        %1816 = vmatprep.subr.bf16.mxu0 0
        %1817 = vmatpush2.bf16.msra.mxu0 0
        %1818 = vmatprep.subr.bf16.mxu0 0
        %1819 = vmatpush2.bf16.msra.mxu0 0
        %1820 = vmatprep.subr.bf16.mxu0 0
        %1821 = vmatpush2.bf16.msra.mxu0 0
        %1822 = vmatprep.subr.bf16.mxu0 0
        %1823 = vmatpush2.bf16.msra.mxu0 0
        %1824 = vmatprep.subr.bf16.mxu0 0
        %1825 = vmatpush2.bf16.msra.mxu0 0
        %1826 = vmatprep.subr.bf16.mxu0 0
        %1827 = vmatpush2.bf16.msra.mxu0 0
        %1828 = vmatprep.subr.bf16.mxu0 0
        %1829 = vmatpush2.bf16.msra.mxu0 0
        %1830 = vmatprep.mubr.bf16.mxu0 0
        %1831 = vmatmul.mubr.bf16.gmra.mxu0 %v1796
        %v1832 = vpop.f32.mrf.mxu0
        %v1833 = vadd.f32 0.0, %v1832
        %v1834 = vpop.f32.mrf.mxu0
        %v1835 = vpop.f32.mrf.mxu0
        %v1836 = vadd.f32 0.0, %v1835
        %v1837 = vpop.f32.mrf.mxu0
        %1838 = vdwg.mxu0
        %v1839 = vadd.f32 %v1777, %v1833
        %v1840 = vadd.f32 %v1778, %v1836
        %v1841 = vld [vmem:[%s7 + $0x40] sm:$0xf]
        %v1842 = vld [vmem:[%s7 + $0x44] sm:$0xf]
        %v1843 = vld [vmem:[%s7 + $0x48] sm:$0xf]
        %v1844 = vld [vmem:[%s7 + $0x4c] sm:$0xf]
        %v1849 = vunpack.c.l.b16 %v1841
        %v1850 = vunpack.c.l.b16 %v1842
        %v1851 = vunpack.c.l.b16 %v1843
        %v1852 = vunpack.c.l.b16 %v1844
        %v1853 = vpack.c.b16 %v1850, %v1849
        %v1854 = vpack.c.b16 %v1852, %v1851
        %v1858 = vsel %vm845, %v1592, 0
        %1860 = vmatprep.subr.bf16.mxu0 0
        %1861 = vmatpush1.bf16.msra.mxu0 0
        %1862 = vmatprep.subr.bf16.mxu0 0
        %1863 = vmatpush1.bf16.msra.mxu0 0
        %1864 = vmatprep.subr.bf16.mxu0 0
        %1865 = vmatpush1.bf16.msra.mxu0 0
        %1866 = vmatprep.subr.bf16.mxu0 0
        %1867 = vmatpush1.bf16.msra.mxu0 0
        %1868 = vmatprep.subr.bf16.mxu0 0
        %1869 = vmatpush1.bf16.msra.mxu0 0
        %1870 = vmatprep.subr.bf16.mxu0 0
        %1871 = vmatpush1.bf16.msra.mxu0 0
        %1872 = vmatprep.subr.bf16.mxu0 0
        %1873 = vmatpush1.bf16.msra.mxu0 %v1854
        %1874 = vmatprep.subr.bf16.mxu0 0
        %1875 = vmatpush1.bf16.msra.mxu0 %v1853
        %1876 = vmatprep.subr.bf16.mxu0 0
        %1877 = vmatpush2.bf16.msra.mxu0 0
        %1878 = vmatprep.subr.bf16.mxu0 0
        %1879 = vmatpush2.bf16.msra.mxu0 0
        %1880 = vmatprep.subr.bf16.mxu0 0
        %1881 = vmatpush2.bf16.msra.mxu0 0
        %1882 = vmatprep.subr.bf16.mxu0 0
        %1883 = vmatpush2.bf16.msra.mxu0 0
        %1884 = vmatprep.subr.bf16.mxu0 0
        %1885 = vmatpush2.bf16.msra.mxu0 0
        %1886 = vmatprep.subr.bf16.mxu0 0
        %1887 = vmatpush2.bf16.msra.mxu0 0
        %1888 = vmatprep.subr.bf16.mxu0 0
        %1889 = vmatpush2.bf16.msra.mxu0 0
        %1890 = vmatprep.subr.bf16.mxu0 0
        %1891 = vmatpush2.bf16.msra.mxu0 0
        %1892 = vmatprep.mubr.bf16.mxu0 0
        %1893 = vmatmul.mubr.bf16.gmra.mxu0 %v1858
        %v1894 = vpop.f32.mrf.mxu0
        %v1895 = vadd.f32 0.0, %v1894
        %v1896 = vpop.f32.mrf.mxu0
        %v1897 = vpop.f32.mrf.mxu0
        %v1898 = vadd.f32 0.0, %v1897
        %v1899 = vpop.f32.mrf.mxu0
        %1900 = vdwg.mxu0
        %v1901 = vadd.f32 %v1839, %v1895
        %v1902 = vadd.f32 %v1840, %v1898
        %v1903 = vld [vmem:[%s7 + $0x50] sm:$0xf]
        %v1904 = vld [vmem:[%s7 + $0x54] sm:$0xf]
        %v1905 = vld [vmem:[%s7 + $0x58] sm:$0xf]
        %v1906 = vld [vmem:[%s7 + $0x5c] sm:$0xf]
        %v1911 = vunpack.c.l.b16 %v1903
        %v1912 = vunpack.c.l.b16 %v1904
        %v1913 = vunpack.c.l.b16 %v1905
        %v1914 = vunpack.c.l.b16 %v1906
        %v1915 = vpack.c.b16 %v1912, %v1911
        %v1916 = vpack.c.b16 %v1914, %v1913
        %v1920 = vsel %vm845, %v1593, 0
        %1922 = vmatprep.subr.bf16.mxu0 0
        %1923 = vmatpush1.bf16.msra.mxu0 0
        %1924 = vmatprep.subr.bf16.mxu0 0
        %1925 = vmatpush1.bf16.msra.mxu0 0
        %1926 = vmatprep.subr.bf16.mxu0 0
        %1927 = vmatpush1.bf16.msra.mxu0 0
        %1928 = vmatprep.subr.bf16.mxu0 0
        %1929 = vmatpush1.bf16.msra.mxu0 0
        %1930 = vmatprep.subr.bf16.mxu0 0
        %1931 = vmatpush1.bf16.msra.mxu0 0
        %1932 = vmatprep.subr.bf16.mxu0 0
        %1933 = vmatpush1.bf16.msra.mxu0 0
        %1934 = vmatprep.subr.bf16.mxu0 0
        %1935 = vmatpush1.bf16.msra.mxu0 %v1916
        %1936 = vmatprep.subr.bf16.mxu0 0
        %1937 = vmatpush1.bf16.msra.mxu0 %v1915
        %1938 = vmatprep.subr.bf16.mxu0 0
        %1939 = vmatpush2.bf16.msra.mxu0 0
        %1940 = vmatprep.subr.bf16.mxu0 0
        %1941 = vmatpush2.bf16.msra.mxu0 0
        %1942 = vmatprep.subr.bf16.mxu0 0
        %1943 = vmatpush2.bf16.msra.mxu0 0
        %1944 = vmatprep.subr.bf16.mxu0 0
        %1945 = vmatpush2.bf16.msra.mxu0 0
        %1946 = vmatprep.subr.bf16.mxu0 0
        %1947 = vmatpush2.bf16.msra.mxu0 0
        %1948 = vmatprep.subr.bf16.mxu0 0
        %1949 = vmatpush2.bf16.msra.mxu0 0
        %1950 = vmatprep.subr.bf16.mxu0 0
        %1951 = vmatpush2.bf16.msra.mxu0 0
        %1952 = vmatprep.subr.bf16.mxu0 0
        %1953 = vmatpush2.bf16.msra.mxu0 0
        %1954 = vmatprep.mubr.bf16.mxu0 0
        %1955 = vmatmul.mubr.bf16.gmra.mxu0 %v1920
        %v1956 = vpop.f32.mrf.mxu0
        %v1957 = vadd.f32 0.0, %v1956
        %v1958 = vpop.f32.mrf.mxu0
        %v1959 = vpop.f32.mrf.mxu0
        %v1960 = vadd.f32 0.0, %v1959
        %v1961 = vpop.f32.mrf.mxu0
        %1962 = vdwg.mxu0
        %v1963 = vadd.f32 %v1901, %v1957
        %v1964 = vadd.f32 %v1902, %v1960
        %v1965 = vld [vmem:[%s7 + $0x60] sm:$0xf]
        %v1966 = vld [vmem:[%s7 + $0x64] sm:$0xf]
        %v1967 = vld [vmem:[%s7 + $0x68] sm:$0xf]
        %v1968 = vld [vmem:[%s7 + $0x6c] sm:$0xf]
        %v1973 = vunpack.c.l.b16 %v1965
        %v1974 = vunpack.c.l.b16 %v1966
        %v1975 = vunpack.c.l.b16 %v1967
        %v1976 = vunpack.c.l.b16 %v1968
        %v1977 = vpack.c.b16 %v1974, %v1973
        %v1978 = vpack.c.b16 %v1976, %v1975
        %v1982 = vsel %vm845, %v1594, 0
        %1984 = vmatprep.subr.bf16.mxu0 0
        %1985 = vmatpush1.bf16.msra.mxu0 0
        %1986 = vmatprep.subr.bf16.mxu0 0
        %1987 = vmatpush1.bf16.msra.mxu0 0
        %1988 = vmatprep.subr.bf16.mxu0 0
        %1989 = vmatpush1.bf16.msra.mxu0 0
        %1990 = vmatprep.subr.bf16.mxu0 0
        %1991 = vmatpush1.bf16.msra.mxu0 0
        %1992 = vmatprep.subr.bf16.mxu0 0
        %1993 = vmatpush1.bf16.msra.mxu0 0
        %1994 = vmatprep.subr.bf16.mxu0 0
        %1995 = vmatpush1.bf16.msra.mxu0 0
        %1996 = vmatprep.subr.bf16.mxu0 0
        %1997 = vmatpush1.bf16.msra.mxu0 %v1978
        %1998 = vmatprep.subr.bf16.mxu0 0
        %1999 = vmatpush1.bf16.msra.mxu0 %v1977
        %2000 = vmatprep.subr.bf16.mxu0 0
        %2001 = vmatpush2.bf16.msra.mxu0 0
        %2002 = vmatprep.subr.bf16.mxu0 0
        %2003 = vmatpush2.bf16.msra.mxu0 0
        %2004 = vmatprep.subr.bf16.mxu0 0
        %2005 = vmatpush2.bf16.msra.mxu0 0
        %2006 = vmatprep.subr.bf16.mxu0 0
        %2007 = vmatpush2.bf16.msra.mxu0 0
        %2008 = vmatprep.subr.bf16.mxu0 0
        %2009 = vmatpush2.bf16.msra.mxu0 0
        %2010 = vmatprep.subr.bf16.mxu0 0
        %2011 = vmatpush2.bf16.msra.mxu0 0
        %2012 = vmatprep.subr.bf16.mxu0 0
        %2013 = vmatpush2.bf16.msra.mxu0 0
        %2014 = vmatprep.subr.bf16.mxu0 0
        %2015 = vmatpush2.bf16.msra.mxu0 0
        %2016 = vmatprep.mubr.bf16.mxu0 0
        %2017 = vmatmul.mubr.bf16.gmra.mxu0 %v1982
        %v2018 = vpop.f32.mrf.mxu0
        %v2019 = vadd.f32 0.0, %v2018
        %v2020 = vpop.f32.mrf.mxu0
        %v2021 = vpop.f32.mrf.mxu0
        %v2022 = vadd.f32 0.0, %v2021
        %v2023 = vpop.f32.mrf.mxu0
        %2024 = vdwg.mxu0
        %v2025 = vadd.f32 %v1963, %v2019
        %v2026 = vadd.f32 %v1964, %v2022
        %v2027 = vld [vmem:[%s7 + $0x70] sm:$0xf]
        %v2028 = vld [vmem:[%s7 + $0x74] sm:$0xf]
        %v2029 = vld [vmem:[%s7 + $0x78] sm:$0xf]
        %v2030 = vld [vmem:[%s7 + $0x7c] sm:$0xf]
        %v2035 = vunpack.c.l.b16 %v2027
        %v2036 = vunpack.c.l.b16 %v2028
        %v2037 = vunpack.c.l.b16 %v2029
        %v2038 = vunpack.c.l.b16 %v2030
        %v2039 = vpack.c.b16 %v2036, %v2035
        %v2040 = vpack.c.b16 %v2038, %v2037
        %v2044 = vsel %vm845, %v1595, 0
        %2046 = vmatprep.subr.bf16.mxu0 0
        %2047 = vmatpush1.bf16.msra.mxu0 0
        %2048 = vmatprep.subr.bf16.mxu0 0
        %2049 = vmatpush1.bf16.msra.mxu0 0
        %2050 = vmatprep.subr.bf16.mxu0 0
        %2051 = vmatpush1.bf16.msra.mxu0 0
        %2052 = vmatprep.subr.bf16.mxu0 0
        %2053 = vmatpush1.bf16.msra.mxu0 0
        %2054 = vmatprep.subr.bf16.mxu0 0
        %2055 = vmatpush1.bf16.msra.mxu0 0
        %2056 = vmatprep.subr.bf16.mxu0 0
        %2057 = vmatpush1.bf16.msra.mxu0 0
        %2058 = vmatprep.subr.bf16.mxu0 0
        %2059 = vmatpush1.bf16.msra.mxu0 %v2040
        %2060 = vmatprep.subr.bf16.mxu0 0
        %2061 = vmatpush1.bf16.msra.mxu0 %v2039
        %2062 = vmatprep.subr.bf16.mxu0 0
        %2063 = vmatpush2.bf16.msra.mxu0 0
        %2064 = vmatprep.subr.bf16.mxu0 0
        %2065 = vmatpush2.bf16.msra.mxu0 0
        %2066 = vmatprep.subr.bf16.mxu0 0
        %2067 = vmatpush2.bf16.msra.mxu0 0
        %2068 = vmatprep.subr.bf16.mxu0 0
        %2069 = vmatpush2.bf16.msra.mxu0 0
        %2070 = vmatprep.subr.bf16.mxu0 0
        %2071 = vmatpush2.bf16.msra.mxu0 0
        %2072 = vmatprep.subr.bf16.mxu0 0
        %2073 = vmatpush2.bf16.msra.mxu0 0
        %2074 = vmatprep.subr.bf16.mxu0 0
        %2075 = vmatpush2.bf16.msra.mxu0 0
        %2076 = vmatprep.subr.bf16.mxu0 0
        %2077 = vmatpush2.bf16.msra.mxu0 0
        %2078 = vmatprep.mubr.bf16.mxu0 0
        %2079 = vmatmul.mubr.bf16.gmra.mxu0 %v2044
        %v2080 = vpop.f32.mrf.mxu0
        %v2081 = vadd.f32 0.0, %v2080
        %v2082 = vpop.f32.mrf.mxu0
        %v2083 = vpop.f32.mrf.mxu0
        %v2084 = vadd.f32 0.0, %v2083
        %v2085 = vpop.f32.mrf.mxu0
        %2086 = vdwg.mxu0
        %v2087 = vadd.f32 %v2025, %v2081
        %v2088 = vadd.f32 %v2026, %v2084
        %v2089 = vld [vmem:[%s7 + $0x80] sm:$0xf]
        %v2090 = vld [vmem:[%s7 + $0x84] sm:$0xf]
        %v2091 = vld [vmem:[%s7 + $0x88] sm:$0xf]
        %v2092 = vld [vmem:[%s7 + $0x8c] sm:$0xf]
        %v2097 = vunpack.c.l.b16 %v2089
        %v2098 = vunpack.c.l.b16 %v2090
        %v2099 = vunpack.c.l.b16 %v2091
        %v2100 = vunpack.c.l.b16 %v2092
        %v2101 = vpack.c.b16 %v2098, %v2097
        %v2102 = vpack.c.b16 %v2100, %v2099
        %v2106 = vsel %vm845, %v1596, 0
        %2108 = vmatprep.subr.bf16.mxu0 0
        %2109 = vmatpush1.bf16.msra.mxu0 0
        %2110 = vmatprep.subr.bf16.mxu0 0
        %2111 = vmatpush1.bf16.msra.mxu0 0
        %2112 = vmatprep.subr.bf16.mxu0 0
        %2113 = vmatpush1.bf16.msra.mxu0 0
        %2114 = vmatprep.subr.bf16.mxu0 0
        %2115 = vmatpush1.bf16.msra.mxu0 0
        %2116 = vmatprep.subr.bf16.mxu0 0
        %2117 = vmatpush1.bf16.msra.mxu0 0
        %2118 = vmatprep.subr.bf16.mxu0 0
        %2119 = vmatpush1.bf16.msra.mxu0 0
        %2120 = vmatprep.subr.bf16.mxu0 0
        %2121 = vmatpush1.bf16.msra.mxu0 %v2102
        %2122 = vmatprep.subr.bf16.mxu0 0
        %2123 = vmatpush1.bf16.msra.mxu0 %v2101
        %2124 = vmatprep.subr.bf16.mxu0 0
        %2125 = vmatpush2.bf16.msra.mxu0 0
        %2126 = vmatprep.subr.bf16.mxu0 0
        %2127 = vmatpush2.bf16.msra.mxu0 0
        %2128 = vmatprep.subr.bf16.mxu0 0
        %2129 = vmatpush2.bf16.msra.mxu0 0
        %2130 = vmatprep.subr.bf16.mxu0 0
        %2131 = vmatpush2.bf16.msra.mxu0 0
        %2132 = vmatprep.subr.bf16.mxu0 0
        %2133 = vmatpush2.bf16.msra.mxu0 0
        %2134 = vmatprep.subr.bf16.mxu0 0
        %2135 = vmatpush2.bf16.msra.mxu0 0
        %2136 = vmatprep.subr.bf16.mxu0 0
        %2137 = vmatpush2.bf16.msra.mxu0 0
        %2138 = vmatprep.subr.bf16.mxu0 0
        %2139 = vmatpush2.bf16.msra.mxu0 0
        %2140 = vmatprep.mubr.bf16.mxu0 0
        %2141 = vmatmul.mubr.bf16.gmra.mxu0 %v2106
        %v2142 = vpop.f32.mrf.mxu0
        %v2143 = vadd.f32 0.0, %v2142
        %v2144 = vpop.f32.mrf.mxu0
        %v2145 = vpop.f32.mrf.mxu0
        %v2146 = vadd.f32 0.0, %v2145
        %v2147 = vpop.f32.mrf.mxu0
        %2148 = vdwg.mxu0
        %v2149 = vadd.f32 %v2087, %v2143
        %v2150 = vadd.f32 %v2088, %v2146
        %v2151 = vld [vmem:[%s8] sm:$0x1]
        %v2153 = vlaneseq
        %v2154 = vshrl.u32 %v2153, 7
        %v2155 = vsub.s32 0, %v2154
        %v2156 = vrot.slane %v2151, %v2155
        %v2158 = vadd.f32 %v2149, %v2156
        %v2159 = vadd.f32 %v2150, %v2156
        %v2160 = vmax.f32 %v2158, 0.0
        %v2161 = vmax.f32 %v2159, 0.0
        %v2162 = vpack.c.bf16 %v2161, %v2160
        %2163 = vmatprep.subr.bf16.mxu0 0
        %2164 = vmatpush1.bf16.msra.mxu0 0
        %2165 = vmatprep.subr.bf16.mxu0 0
        %2166 = vmatpush1.bf16.msra.mxu0 0
        %2167 = vmatprep.subr.bf16.mxu0 0
        %2168 = vmatpush1.bf16.msra.mxu0 0
        %2169 = vmatprep.subr.bf16.mxu0 0
        %2170 = vmatpush1.bf16.msra.mxu0 0
        %2171 = vmatprep.subr.bf16.mxu0 0
        %2172 = vmatpush1.bf16.msra.mxu0 0
        %2173 = vmatprep.subr.bf16.mxu0 0
        %2174 = vmatpush1.bf16.msra.mxu0 0
        %2175 = vmatprep.subr.bf16.mxu0 0
        %2176 = vmatpush1.bf16.msra.mxu0 0
        %2177 = vmatprep.subr.bf16.mxu0 0
        %2178 = vmatpush1.bf16.msra.mxu0 %v2162
        %2179 = vmatprep.subr.bf16.mxu0 0
        %2180 = vmatpush2.bf16.msra.mxu0 0
        %2181 = vmatprep.subr.bf16.mxu0 0
        %2182 = vmatpush2.bf16.msra.mxu0 0
        %2183 = vmatprep.subr.bf16.mxu0 0
        %2184 = vmatpush2.bf16.msra.mxu0 0
        %2185 = vmatprep.subr.bf16.mxu0 0
        %2186 = vmatpush2.bf16.msra.mxu0 0
        %2187 = vmatprep.subr.bf16.mxu0 0
        %2188 = vmatpush2.bf16.msra.mxu0 0
        %2189 = vmatprep.subr.bf16.mxu0 0
        %2190 = vmatpush2.bf16.msra.mxu0 0
        %2191 = vmatprep.subr.bf16.mxu0 0
        %2192 = vmatpush2.bf16.msra.mxu0 0
        %2193 = vmatprep.subr.bf16.mxu0 0
        %2194 = vmatpush2.bf16.msra.mxu0 0
        %2195 = vmatprep.mubr.bf16.mxu0 0
        %2196 = vmatmul.mubr.bf16.gmra.mxu0 %v1457
        %v2197 = vpop.f32.mrf.mxu0
        %v2198 = vadd.f32 0.0, %v2197
        %v2199 = vpop.f32.mrf.mxu0
        %v2200 = vpop.f32.mrf.mxu0
        %v2201 = vadd.f32 0.0, %v2200
        %v2202 = vpop.f32.mrf.mxu0
        %2203 = vmatprep.mubr.bf16.mxu0 0
        %2204 = vmatmul.mubr.bf16.gmra.mxu0 %v1460
        %v2205 = vpop.f32.mrf.mxu0
        %v2206 = vadd.f32 0.0, %v2205
        %v2207 = vpop.f32.mrf.mxu0
        %v2208 = vpop.f32.mrf.mxu0
        %v2209 = vadd.f32 0.0, %v2208
        %v2210 = vpop.f32.mrf.mxu0
        %2211 = vmatprep.mubr.bf16.mxu0 0
        %2212 = vmatmul.mubr.bf16.gmra.mxu0 %v1463
        %v2213 = vpop.f32.mrf.mxu0
        %v2214 = vadd.f32 0.0, %v2213
        %v2215 = vpop.f32.mrf.mxu0
        %v2216 = vpop.f32.mrf.mxu0
        %v2217 = vadd.f32 0.0, %v2216
        %v2218 = vpop.f32.mrf.mxu0
        %2219 = vmatprep.mubr.bf16.mxu0 0
        %2220 = vmatmul.mubr.bf16.gmra.mxu0 %v1466
        %v2221 = vpop.f32.mrf.mxu0
        %v2222 = vadd.f32 0.0, %v2221
        %v2223 = vpop.f32.mrf.mxu0
        %v2224 = vpop.f32.mrf.mxu0
        %v2225 = vadd.f32 0.0, %v2224
        %v2226 = vpop.f32.mrf.mxu0
        %2227 = vmatprep.mubr.bf16.mxu0 0
        %2228 = vmatmul.mubr.bf16.gmra.mxu0 %v1469
        %v2229 = vpop.f32.mrf.mxu0
        %v2230 = vadd.f32 0.0, %v2229
        %v2231 = vpop.f32.mrf.mxu0
        %v2232 = vpop.f32.mrf.mxu0
        %v2233 = vadd.f32 0.0, %v2232
        %v2234 = vpop.f32.mrf.mxu0
        %2235 = vmatprep.mubr.bf16.mxu0 0
        %2236 = vmatmul.mubr.bf16.gmra.mxu0 %v1472
        %v2237 = vpop.f32.mrf.mxu0
        %v2238 = vadd.f32 0.0, %v2237
        %v2239 = vpop.f32.mrf.mxu0
        %v2240 = vpop.f32.mrf.mxu0
        %v2241 = vadd.f32 0.0, %v2240
        %v2242 = vpop.f32.mrf.mxu0
        %2243 = vmatprep.mubr.bf16.mxu0 0
        %2244 = vmatmul.mubr.bf16.gmra.mxu0 %v1475
        %v2245 = vpop.f32.mrf.mxu0
        %v2246 = vadd.f32 0.0, %v2245
        %v2247 = vpop.f32.mrf.mxu0
        %v2248 = vpop.f32.mrf.mxu0
        %v2249 = vadd.f32 0.0, %v2248
        %v2250 = vpop.f32.mrf.mxu0
        %2251 = vmatprep.mubr.bf16.mxu0 0
        %2252 = vmatmul.mubr.bf16.gmra.mxu0 %v1478
        %v2253 = vpop.f32.mrf.mxu0
        %v2254 = vadd.f32 0.0, %v2253
        %v2255 = vpop.f32.mrf.mxu0
        %v2256 = vpop.f32.mrf.mxu0
        %v2257 = vadd.f32 0.0, %v2256
        %v2258 = vpop.f32.mrf.mxu0
        %2259 = vmatprep.mubr.bf16.mxu0 0
        %2260 = vmatmul.mubr.bf16.gmra.mxu0 %v1481
        %v2261 = vpop.f32.mrf.mxu0
        %v2262 = vadd.f32 0.0, %v2261
        %v2263 = vpop.f32.mrf.mxu0
        %v2264 = vpop.f32.mrf.mxu0
        %v2265 = vadd.f32 0.0, %v2264
        %v2266 = vpop.f32.mrf.mxu0
        %2267 = vdwg.mxu0
        %v2268 = vpack.c.bf16 %v2201, %v2198
        %v2269 = vpack.c.bf16 %v2209, %v2206
        %v2270 = vpack.c.bf16 %v2217, %v2214
        %v2271 = vpack.c.bf16 %v2225, %v2222
        %v2272 = vpack.c.bf16 %v2233, %v2230
        %v2273 = vpack.c.bf16 %v2241, %v2238
        %v2274 = vpack.c.bf16 %v2249, %v2246
        %v2275 = vpack.c.bf16 %v2257, %v2254
        %v2276 = vpack.c.bf16 %v2265, %v2262
        %v2277 = vld [vmem:[%s9] sm:$0xf]
        %v2278 = vld [vmem:[%s9 + $0x4] sm:$0xf]
        %v2279 = vld [vmem:[%s9 + $0x8] sm:$0xf]
        %v2280 = vld [vmem:[%s9 + $0xc] sm:$0xf]
        %v2281 = vld [vmem:[%s9 + $0x10] sm:$0xf]
        %v2282 = vld [vmem:[%s9 + $0x14] sm:$0xf]
        %v2283 = vld [vmem:[%s9 + $0x18] sm:$0xf]
        %v2284 = vld [vmem:[%s9 + $0x1c] sm:$0xf]
        %v2289 = vunpack.c.l.b16 %v2281
        %v2290 = vunpack.c.l.b16 %v2282
        %v2291 = vunpack.c.l.b16 %v2283
        %v2292 = vunpack.c.l.b16 %v2284
        %v2293 = vpack.c.b16 %v2290, %v2289
        %v2294 = vpack.c.b16 %v2292, %v2291
        %v2298 = vsel %vm845, %v2269, 0
        %2300 = vmatprep.subr.bf16.mxu0 0
        %2301 = vmatpush1.bf16.msra.mxu0 0
        %2302 = vmatprep.subr.bf16.mxu0 0
        %2303 = vmatpush1.bf16.msra.mxu0 0
        %2304 = vmatprep.subr.bf16.mxu0 0
        %2305 = vmatpush1.bf16.msra.mxu0 0
        %2306 = vmatprep.subr.bf16.mxu0 0
        %2307 = vmatpush1.bf16.msra.mxu0 0
        %2308 = vmatprep.subr.bf16.mxu0 0
        %2309 = vmatpush1.bf16.msra.mxu0 0
        %2310 = vmatprep.subr.bf16.mxu0 0
        %2311 = vmatpush1.bf16.msra.mxu0 0
        %2312 = vmatprep.subr.bf16.mxu0 0
        %2313 = vmatpush1.bf16.msra.mxu0 %v2294
        %2314 = vmatprep.subr.bf16.mxu0 0
        %2315 = vmatpush1.bf16.msra.mxu0 %v2293
        %2316 = vmatprep.subr.bf16.mxu0 0
        %2317 = vmatpush2.bf16.msra.mxu0 0
        %2318 = vmatprep.subr.bf16.mxu0 0
        %2319 = vmatpush2.bf16.msra.mxu0 0
        %2320 = vmatprep.subr.bf16.mxu0 0
        %2321 = vmatpush2.bf16.msra.mxu0 0
        %2322 = vmatprep.subr.bf16.mxu0 0
        %2323 = vmatpush2.bf16.msra.mxu0 0
        %2324 = vmatprep.subr.bf16.mxu0 0
        %2325 = vmatpush2.bf16.msra.mxu0 0
        %2326 = vmatprep.subr.bf16.mxu0 0
        %2327 = vmatpush2.bf16.msra.mxu0 0
        %2328 = vmatprep.subr.bf16.mxu0 0
        %2329 = vmatpush2.bf16.msra.mxu0 0
        %2330 = vmatprep.subr.bf16.mxu0 0
        %2331 = vmatpush2.bf16.msra.mxu0 0
        %2332 = vmatprep.mubr.bf16.mxu0 0
        %2333 = vmatmul.mubr.bf16.gmra.mxu0 %v2298
        %v2334 = vpop.f32.mrf.mxu0
        %v2335 = vadd.f32 0.0, %v2334
        %v2336 = vpop.f32.mrf.mxu0
        %v2337 = vpop.f32.mrf.mxu0
        %v2338 = vadd.f32 0.0, %v2337
        %v2339 = vpop.f32.mrf.mxu0
        %2340 = vdwg.mxu0
        %v2345 = vunpack.c.l.b16 %v2277
        %v2346 = vunpack.c.l.b16 %v2278
        %v2347 = vunpack.c.l.b16 %v2279
        %v2348 = vunpack.c.l.b16 %v2280
        %v2349 = vpack.c.b16 %v2346, %v2345
        %v2350 = vpack.c.b16 %v2348, %v2347
        %v2354 = vsel %vm845, %v2268, 0
        %2356 = vmatprep.subr.bf16.mxu0 0
        %2357 = vmatpush1.bf16.msra.mxu0 0
        %2358 = vmatprep.subr.bf16.mxu0 0
        %2359 = vmatpush1.bf16.msra.mxu0 0
        %2360 = vmatprep.subr.bf16.mxu0 0
        %2361 = vmatpush1.bf16.msra.mxu0 0
        %2362 = vmatprep.subr.bf16.mxu0 0
        %2363 = vmatpush1.bf16.msra.mxu0 0
        %2364 = vmatprep.subr.bf16.mxu0 0
        %2365 = vmatpush1.bf16.msra.mxu0 0
        %2366 = vmatprep.subr.bf16.mxu0 0
        %2367 = vmatpush1.bf16.msra.mxu0 0
        %2368 = vmatprep.subr.bf16.mxu0 0
        %2369 = vmatpush1.bf16.msra.mxu0 %v2350
        %2370 = vmatprep.subr.bf16.mxu0 0
        %2371 = vmatpush1.bf16.msra.mxu0 %v2349
        %2372 = vmatprep.subr.bf16.mxu0 0
        %2373 = vmatpush2.bf16.msra.mxu0 0
        %2374 = vmatprep.subr.bf16.mxu0 0
        %2375 = vmatpush2.bf16.msra.mxu0 0
        %2376 = vmatprep.subr.bf16.mxu0 0
        %2377 = vmatpush2.bf16.msra.mxu0 0
        %2378 = vmatprep.subr.bf16.mxu0 0
        %2379 = vmatpush2.bf16.msra.mxu0 0
        %2380 = vmatprep.subr.bf16.mxu0 0
        %2381 = vmatpush2.bf16.msra.mxu0 0
        %2382 = vmatprep.subr.bf16.mxu0 0
        %2383 = vmatpush2.bf16.msra.mxu0 0
        %2384 = vmatprep.subr.bf16.mxu0 0
        %2385 = vmatpush2.bf16.msra.mxu0 0
        %2386 = vmatprep.subr.bf16.mxu0 0
        %2387 = vmatpush2.bf16.msra.mxu0 0
        %2388 = vmatprep.mubr.bf16.mxu0 0
        %2389 = vmatmul.mubr.bf16.gmra.mxu0 %v2354
        %v2390 = vpop.f32.mrf.mxu0
        %v2391 = vadd.f32 %v2335, %v2390
        %v2392 = vpop.f32.mrf.mxu0
        %v2393 = vpop.f32.mrf.mxu0
        %v2394 = vadd.f32 %v2338, %v2393
        %v2395 = vpop.f32.mrf.mxu0
        %2396 = vdwg.mxu0
        %v2397 = vld [vmem:[%s9 + $0x20] sm:$0xf]
        %v2398 = vld [vmem:[%s9 + $0x24] sm:$0xf]
        %v2399 = vld [vmem:[%s9 + $0x28] sm:$0xf]
        %v2400 = vld [vmem:[%s9 + $0x2c] sm:$0xf]
        %v2405 = vunpack.c.l.b16 %v2397
        %v2406 = vunpack.c.l.b16 %v2398
        %v2407 = vunpack.c.l.b16 %v2399
        %v2408 = vunpack.c.l.b16 %v2400
        %v2409 = vpack.c.b16 %v2406, %v2405
        %v2410 = vpack.c.b16 %v2408, %v2407
        %v2414 = vsel %vm845, %v2270, 0
        %2416 = vmatprep.subr.bf16.mxu0 0
        %2417 = vmatpush1.bf16.msra.mxu0 0
        %2418 = vmatprep.subr.bf16.mxu0 0
        %2419 = vmatpush1.bf16.msra.mxu0 0
        %2420 = vmatprep.subr.bf16.mxu0 0
        %2421 = vmatpush1.bf16.msra.mxu0 0
        %2422 = vmatprep.subr.bf16.mxu0 0
        %2423 = vmatpush1.bf16.msra.mxu0 0
        %2424 = vmatprep.subr.bf16.mxu0 0
        %2425 = vmatpush1.bf16.msra.mxu0 0
        %2426 = vmatprep.subr.bf16.mxu0 0
        %2427 = vmatpush1.bf16.msra.mxu0 0
        %2428 = vmatprep.subr.bf16.mxu0 0
        %2429 = vmatpush1.bf16.msra.mxu0 %v2410
        %2430 = vmatprep.subr.bf16.mxu0 0
        %2431 = vmatpush1.bf16.msra.mxu0 %v2409
        %2432 = vmatprep.subr.bf16.mxu0 0
        %2433 = vmatpush2.bf16.msra.mxu0 0
        %2434 = vmatprep.subr.bf16.mxu0 0
        %2435 = vmatpush2.bf16.msra.mxu0 0
        %2436 = vmatprep.subr.bf16.mxu0 0
        %2437 = vmatpush2.bf16.msra.mxu0 0
        %2438 = vmatprep.subr.bf16.mxu0 0
        %2439 = vmatpush2.bf16.msra.mxu0 0
        %2440 = vmatprep.subr.bf16.mxu0 0
        %2441 = vmatpush2.bf16.msra.mxu0 0
        %2442 = vmatprep.subr.bf16.mxu0 0
        %2443 = vmatpush2.bf16.msra.mxu0 0
        %2444 = vmatprep.subr.bf16.mxu0 0
        %2445 = vmatpush2.bf16.msra.mxu0 0
        %2446 = vmatprep.subr.bf16.mxu0 0
        %2447 = vmatpush2.bf16.msra.mxu0 0
        %2448 = vmatprep.mubr.bf16.mxu0 0
        %2449 = vmatmul.mubr.bf16.gmra.mxu0 %v2414
        %v2450 = vpop.f32.mrf.mxu0
        %v2451 = vadd.f32 0.0, %v2450
        %v2452 = vpop.f32.mrf.mxu0
        %v2453 = vpop.f32.mrf.mxu0
        %v2454 = vadd.f32 0.0, %v2453
        %v2455 = vpop.f32.mrf.mxu0
        %2456 = vdwg.mxu0
        %v2457 = vadd.f32 %v2391, %v2451
        %v2458 = vadd.f32 %v2394, %v2454
        %v2459 = vld [vmem:[%s9 + $0x30] sm:$0xf]
        %v2460 = vld [vmem:[%s9 + $0x34] sm:$0xf]
        %v2461 = vld [vmem:[%s9 + $0x38] sm:$0xf]
        %v2462 = vld [vmem:[%s9 + $0x3c] sm:$0xf]
        %v2467 = vunpack.c.l.b16 %v2459
        %v2468 = vunpack.c.l.b16 %v2460
        %v2469 = vunpack.c.l.b16 %v2461
        %v2470 = vunpack.c.l.b16 %v2462
        %v2471 = vpack.c.b16 %v2468, %v2467
        %v2472 = vpack.c.b16 %v2470, %v2469
        %v2476 = vsel %vm845, %v2271, 0
        %2478 = vmatprep.subr.bf16.mxu0 0
        %2479 = vmatpush1.bf16.msra.mxu0 0
        %2480 = vmatprep.subr.bf16.mxu0 0
        %2481 = vmatpush1.bf16.msra.mxu0 0
        %2482 = vmatprep.subr.bf16.mxu0 0
        %2483 = vmatpush1.bf16.msra.mxu0 0
        %2484 = vmatprep.subr.bf16.mxu0 0
        %2485 = vmatpush1.bf16.msra.mxu0 0
        %2486 = vmatprep.subr.bf16.mxu0 0
        %2487 = vmatpush1.bf16.msra.mxu0 0
        %2488 = vmatprep.subr.bf16.mxu0 0
        %2489 = vmatpush1.bf16.msra.mxu0 0
        %2490 = vmatprep.subr.bf16.mxu0 0
        %2491 = vmatpush1.bf16.msra.mxu0 %v2472
        %2492 = vmatprep.subr.bf16.mxu0 0
        %2493 = vmatpush1.bf16.msra.mxu0 %v2471
        %2494 = vmatprep.subr.bf16.mxu0 0
        %2495 = vmatpush2.bf16.msra.mxu0 0
        %2496 = vmatprep.subr.bf16.mxu0 0
        %2497 = vmatpush2.bf16.msra.mxu0 0
        %2498 = vmatprep.subr.bf16.mxu0 0
        %2499 = vmatpush2.bf16.msra.mxu0 0
        %2500 = vmatprep.subr.bf16.mxu0 0
        %2501 = vmatpush2.bf16.msra.mxu0 0
        %2502 = vmatprep.subr.bf16.mxu0 0
        %2503 = vmatpush2.bf16.msra.mxu0 0
        %2504 = vmatprep.subr.bf16.mxu0 0
        %2505 = vmatpush2.bf16.msra.mxu0 0
        %2506 = vmatprep.subr.bf16.mxu0 0
        %2507 = vmatpush2.bf16.msra.mxu0 0
        %2508 = vmatprep.subr.bf16.mxu0 0
        %2509 = vmatpush2.bf16.msra.mxu0 0
        %2510 = vmatprep.mubr.bf16.mxu0 0
        %2511 = vmatmul.mubr.bf16.gmra.mxu0 %v2476
        %v2512 = vpop.f32.mrf.mxu0
        %v2513 = vadd.f32 0.0, %v2512
        %v2514 = vpop.f32.mrf.mxu0
        %v2515 = vpop.f32.mrf.mxu0
        %v2516 = vadd.f32 0.0, %v2515
        %v2517 = vpop.f32.mrf.mxu0
        %2518 = vdwg.mxu0
        %v2519 = vadd.f32 %v2457, %v2513
        %v2520 = vadd.f32 %v2458, %v2516
        %v2521 = vld [vmem:[%s9 + $0x40] sm:$0xf]
        %v2522 = vld [vmem:[%s9 + $0x44] sm:$0xf]
        %v2523 = vld [vmem:[%s9 + $0x48] sm:$0xf]
        %v2524 = vld [vmem:[%s9 + $0x4c] sm:$0xf]
        %v2529 = vunpack.c.l.b16 %v2521
        %v2530 = vunpack.c.l.b16 %v2522
        %v2531 = vunpack.c.l.b16 %v2523
        %v2532 = vunpack.c.l.b16 %v2524
        %v2533 = vpack.c.b16 %v2530, %v2529
        %v2534 = vpack.c.b16 %v2532, %v2531
        %v2538 = vsel %vm845, %v2272, 0
        %2540 = vmatprep.subr.bf16.mxu0 0
        %2541 = vmatpush1.bf16.msra.mxu0 0
        %2542 = vmatprep.subr.bf16.mxu0 0
        %2543 = vmatpush1.bf16.msra.mxu0 0
        %2544 = vmatprep.subr.bf16.mxu0 0
        %2545 = vmatpush1.bf16.msra.mxu0 0
        %2546 = vmatprep.subr.bf16.mxu0 0
        %2547 = vmatpush1.bf16.msra.mxu0 0
        %2548 = vmatprep.subr.bf16.mxu0 0
        %2549 = vmatpush1.bf16.msra.mxu0 0
        %2550 = vmatprep.subr.bf16.mxu0 0
        %2551 = vmatpush1.bf16.msra.mxu0 0
        %2552 = vmatprep.subr.bf16.mxu0 0
        %2553 = vmatpush1.bf16.msra.mxu0 %v2534
        %2554 = vmatprep.subr.bf16.mxu0 0
        %2555 = vmatpush1.bf16.msra.mxu0 %v2533
        %2556 = vmatprep.subr.bf16.mxu0 0
        %2557 = vmatpush2.bf16.msra.mxu0 0
        %2558 = vmatprep.subr.bf16.mxu0 0
        %2559 = vmatpush2.bf16.msra.mxu0 0
        %2560 = vmatprep.subr.bf16.mxu0 0
        %2561 = vmatpush2.bf16.msra.mxu0 0
        %2562 = vmatprep.subr.bf16.mxu0 0
        %2563 = vmatpush2.bf16.msra.mxu0 0
        %2564 = vmatprep.subr.bf16.mxu0 0
        %2565 = vmatpush2.bf16.msra.mxu0 0
        %2566 = vmatprep.subr.bf16.mxu0 0
        %2567 = vmatpush2.bf16.msra.mxu0 0
        %2568 = vmatprep.subr.bf16.mxu0 0
        %2569 = vmatpush2.bf16.msra.mxu0 0
        %2570 = vmatprep.subr.bf16.mxu0 0
        %2571 = vmatpush2.bf16.msra.mxu0 0
        %2572 = vmatprep.mubr.bf16.mxu0 0
        %2573 = vmatmul.mubr.bf16.gmra.mxu0 %v2538
        %v2574 = vpop.f32.mrf.mxu0
        %v2575 = vadd.f32 0.0, %v2574
        %v2576 = vpop.f32.mrf.mxu0
        %v2577 = vpop.f32.mrf.mxu0
        %v2578 = vadd.f32 0.0, %v2577
        %v2579 = vpop.f32.mrf.mxu0
        %2580 = vdwg.mxu0
        %v2581 = vadd.f32 %v2519, %v2575
        %v2582 = vadd.f32 %v2520, %v2578
        %v2583 = vld [vmem:[%s9 + $0x50] sm:$0xf]
        %v2584 = vld [vmem:[%s9 + $0x54] sm:$0xf]
        %v2585 = vld [vmem:[%s9 + $0x58] sm:$0xf]
        %v2586 = vld [vmem:[%s9 + $0x5c] sm:$0xf]
        %v2591 = vunpack.c.l.b16 %v2583
        %v2592 = vunpack.c.l.b16 %v2584
        %v2593 = vunpack.c.l.b16 %v2585
        %v2594 = vunpack.c.l.b16 %v2586
        %v2595 = vpack.c.b16 %v2592, %v2591
        %v2596 = vpack.c.b16 %v2594, %v2593
        %v2600 = vsel %vm845, %v2273, 0
        %2602 = vmatprep.subr.bf16.mxu0 0
        %2603 = vmatpush1.bf16.msra.mxu0 0
        %2604 = vmatprep.subr.bf16.mxu0 0
        %2605 = vmatpush1.bf16.msra.mxu0 0
        %2606 = vmatprep.subr.bf16.mxu0 0
        %2607 = vmatpush1.bf16.msra.mxu0 0
        %2608 = vmatprep.subr.bf16.mxu0 0
        %2609 = vmatpush1.bf16.msra.mxu0 0
        %2610 = vmatprep.subr.bf16.mxu0 0
        %2611 = vmatpush1.bf16.msra.mxu0 0
        %2612 = vmatprep.subr.bf16.mxu0 0
        %2613 = vmatpush1.bf16.msra.mxu0 0
        %2614 = vmatprep.subr.bf16.mxu0 0
        %2615 = vmatpush1.bf16.msra.mxu0 %v2596
        %2616 = vmatprep.subr.bf16.mxu0 0
        %2617 = vmatpush1.bf16.msra.mxu0 %v2595
        %2618 = vmatprep.subr.bf16.mxu0 0
        %2619 = vmatpush2.bf16.msra.mxu0 0
        %2620 = vmatprep.subr.bf16.mxu0 0
        %2621 = vmatpush2.bf16.msra.mxu0 0
        %2622 = vmatprep.subr.bf16.mxu0 0
        %2623 = vmatpush2.bf16.msra.mxu0 0
        %2624 = vmatprep.subr.bf16.mxu0 0
        %2625 = vmatpush2.bf16.msra.mxu0 0
        %2626 = vmatprep.subr.bf16.mxu0 0
        %2627 = vmatpush2.bf16.msra.mxu0 0
        %2628 = vmatprep.subr.bf16.mxu0 0
        %2629 = vmatpush2.bf16.msra.mxu0 0
        %2630 = vmatprep.subr.bf16.mxu0 0
        %2631 = vmatpush2.bf16.msra.mxu0 0
        %2632 = vmatprep.subr.bf16.mxu0 0
        %2633 = vmatpush2.bf16.msra.mxu0 0
        %2634 = vmatprep.mubr.bf16.mxu0 0
        %2635 = vmatmul.mubr.bf16.gmra.mxu0 %v2600
        %v2636 = vpop.f32.mrf.mxu0
        %v2637 = vadd.f32 0.0, %v2636
        %v2638 = vpop.f32.mrf.mxu0
        %v2639 = vpop.f32.mrf.mxu0
        %v2640 = vadd.f32 0.0, %v2639
        %v2641 = vpop.f32.mrf.mxu0
        %2642 = vdwg.mxu0
        %v2643 = vadd.f32 %v2581, %v2637
        %v2644 = vadd.f32 %v2582, %v2640
        %v2645 = vld [vmem:[%s9 + $0x60] sm:$0xf]
        %v2646 = vld [vmem:[%s9 + $0x64] sm:$0xf]
        %v2647 = vld [vmem:[%s9 + $0x68] sm:$0xf]
        %v2648 = vld [vmem:[%s9 + $0x6c] sm:$0xf]
        %v2653 = vunpack.c.l.b16 %v2645
        %v2654 = vunpack.c.l.b16 %v2646
        %v2655 = vunpack.c.l.b16 %v2647
        %v2656 = vunpack.c.l.b16 %v2648
        %v2657 = vpack.c.b16 %v2654, %v2653
        %v2658 = vpack.c.b16 %v2656, %v2655
        %v2662 = vsel %vm845, %v2274, 0
        %2664 = vmatprep.subr.bf16.mxu0 0
        %2665 = vmatpush1.bf16.msra.mxu0 0
        %2666 = vmatprep.subr.bf16.mxu0 0
        %2667 = vmatpush1.bf16.msra.mxu0 0
        %2668 = vmatprep.subr.bf16.mxu0 0
        %2669 = vmatpush1.bf16.msra.mxu0 0
        %2670 = vmatprep.subr.bf16.mxu0 0
        %2671 = vmatpush1.bf16.msra.mxu0 0
        %2672 = vmatprep.subr.bf16.mxu0 0
        %2673 = vmatpush1.bf16.msra.mxu0 0
        %2674 = vmatprep.subr.bf16.mxu0 0
        %2675 = vmatpush1.bf16.msra.mxu0 0
        %2676 = vmatprep.subr.bf16.mxu0 0
        %2677 = vmatpush1.bf16.msra.mxu0 %v2658
        %2678 = vmatprep.subr.bf16.mxu0 0
        %2679 = vmatpush1.bf16.msra.mxu0 %v2657
        %2680 = vmatprep.subr.bf16.mxu0 0
        %2681 = vmatpush2.bf16.msra.mxu0 0
        %2682 = vmatprep.subr.bf16.mxu0 0
        %2683 = vmatpush2.bf16.msra.mxu0 0
        %2684 = vmatprep.subr.bf16.mxu0 0
        %2685 = vmatpush2.bf16.msra.mxu0 0
        %2686 = vmatprep.subr.bf16.mxu0 0
        %2687 = vmatpush2.bf16.msra.mxu0 0
        %2688 = vmatprep.subr.bf16.mxu0 0
        %2689 = vmatpush2.bf16.msra.mxu0 0
        %2690 = vmatprep.subr.bf16.mxu0 0
        %2691 = vmatpush2.bf16.msra.mxu0 0
        %2692 = vmatprep.subr.bf16.mxu0 0
        %2693 = vmatpush2.bf16.msra.mxu0 0
        %2694 = vmatprep.subr.bf16.mxu0 0
        %2695 = vmatpush2.bf16.msra.mxu0 0
        %2696 = vmatprep.mubr.bf16.mxu0 0
        %2697 = vmatmul.mubr.bf16.gmra.mxu0 %v2662
        %v2698 = vpop.f32.mrf.mxu0
        %v2699 = vadd.f32 0.0, %v2698
        %v2700 = vpop.f32.mrf.mxu0
        %v2701 = vpop.f32.mrf.mxu0
        %v2702 = vadd.f32 0.0, %v2701
        %v2703 = vpop.f32.mrf.mxu0
        %2704 = vdwg.mxu0
        %v2705 = vadd.f32 %v2643, %v2699
        %v2706 = vadd.f32 %v2644, %v2702
        %v2707 = vld [vmem:[%s9 + $0x70] sm:$0xf]
        %v2708 = vld [vmem:[%s9 + $0x74] sm:$0xf]
        %v2709 = vld [vmem:[%s9 + $0x78] sm:$0xf]
        %v2710 = vld [vmem:[%s9 + $0x7c] sm:$0xf]
        %v2715 = vunpack.c.l.b16 %v2707
        %v2716 = vunpack.c.l.b16 %v2708
        %v2717 = vunpack.c.l.b16 %v2709
        %v2718 = vunpack.c.l.b16 %v2710
        %v2719 = vpack.c.b16 %v2716, %v2715
        %v2720 = vpack.c.b16 %v2718, %v2717
        %v2724 = vsel %vm845, %v2275, 0
        %2726 = vmatprep.subr.bf16.mxu0 0
        %2727 = vmatpush1.bf16.msra.mxu0 0
        %2728 = vmatprep.subr.bf16.mxu0 0
        %2729 = vmatpush1.bf16.msra.mxu0 0
        %2730 = vmatprep.subr.bf16.mxu0 0
        %2731 = vmatpush1.bf16.msra.mxu0 0
        %2732 = vmatprep.subr.bf16.mxu0 0
        %2733 = vmatpush1.bf16.msra.mxu0 0
        %2734 = vmatprep.subr.bf16.mxu0 0
        %2735 = vmatpush1.bf16.msra.mxu0 0
        %2736 = vmatprep.subr.bf16.mxu0 0
        %2737 = vmatpush1.bf16.msra.mxu0 0
        %2738 = vmatprep.subr.bf16.mxu0 0
        %2739 = vmatpush1.bf16.msra.mxu0 %v2720
        %2740 = vmatprep.subr.bf16.mxu0 0
        %2741 = vmatpush1.bf16.msra.mxu0 %v2719
        %2742 = vmatprep.subr.bf16.mxu0 0
        %2743 = vmatpush2.bf16.msra.mxu0 0
        %2744 = vmatprep.subr.bf16.mxu0 0
        %2745 = vmatpush2.bf16.msra.mxu0 0
        %2746 = vmatprep.subr.bf16.mxu0 0
        %2747 = vmatpush2.bf16.msra.mxu0 0
        %2748 = vmatprep.subr.bf16.mxu0 0
        %2749 = vmatpush2.bf16.msra.mxu0 0
        %2750 = vmatprep.subr.bf16.mxu0 0
        %2751 = vmatpush2.bf16.msra.mxu0 0
        %2752 = vmatprep.subr.bf16.mxu0 0
        %2753 = vmatpush2.bf16.msra.mxu0 0
        %2754 = vmatprep.subr.bf16.mxu0 0
        %2755 = vmatpush2.bf16.msra.mxu0 0
        %2756 = vmatprep.subr.bf16.mxu0 0
        %2757 = vmatpush2.bf16.msra.mxu0 0
        %2758 = vmatprep.mubr.bf16.mxu0 0
        %2759 = vmatmul.mubr.bf16.gmra.mxu0 %v2724
        %v2760 = vpop.f32.mrf.mxu0
        %v2761 = vadd.f32 0.0, %v2760
        %v2762 = vpop.f32.mrf.mxu0
        %v2763 = vpop.f32.mrf.mxu0
        %v2764 = vadd.f32 0.0, %v2763
        %v2765 = vpop.f32.mrf.mxu0
        %2766 = vdwg.mxu0
        %v2767 = vadd.f32 %v2705, %v2761
        %v2768 = vadd.f32 %v2706, %v2764
        %v2769 = vld [vmem:[%s9 + $0x80] sm:$0xf]
        %v2770 = vld [vmem:[%s9 + $0x84] sm:$0xf]
        %v2771 = vld [vmem:[%s9 + $0x88] sm:$0xf]
        %v2772 = vld [vmem:[%s9 + $0x8c] sm:$0xf]
        %v2777 = vunpack.c.l.b16 %v2769
        %v2778 = vunpack.c.l.b16 %v2770
        %v2779 = vunpack.c.l.b16 %v2771
        %v2780 = vunpack.c.l.b16 %v2772
        %v2781 = vpack.c.b16 %v2778, %v2777
        %v2782 = vpack.c.b16 %v2780, %v2779
        %v2786 = vsel %vm845, %v2276, 0
        %2788 = vmatprep.subr.bf16.mxu0 0
        %2789 = vmatpush1.bf16.msra.mxu0 0
        %2790 = vmatprep.subr.bf16.mxu0 0
        %2791 = vmatpush1.bf16.msra.mxu0 0
        %2792 = vmatprep.subr.bf16.mxu0 0
        %2793 = vmatpush1.bf16.msra.mxu0 0
        %2794 = vmatprep.subr.bf16.mxu0 0
        %2795 = vmatpush1.bf16.msra.mxu0 0
        %2796 = vmatprep.subr.bf16.mxu0 0
        %2797 = vmatpush1.bf16.msra.mxu0 0
        %2798 = vmatprep.subr.bf16.mxu0 0
        %2799 = vmatpush1.bf16.msra.mxu0 0
        %2800 = vmatprep.subr.bf16.mxu0 0
        %2801 = vmatpush1.bf16.msra.mxu0 %v2782
        %2802 = vmatprep.subr.bf16.mxu0 0
        %2803 = vmatpush1.bf16.msra.mxu0 %v2781
        %2804 = vmatprep.subr.bf16.mxu0 0
        %2805 = vmatpush2.bf16.msra.mxu0 0
        %2806 = vmatprep.subr.bf16.mxu0 0
        %2807 = vmatpush2.bf16.msra.mxu0 0
        %2808 = vmatprep.subr.bf16.mxu0 0
        %2809 = vmatpush2.bf16.msra.mxu0 0
        %2810 = vmatprep.subr.bf16.mxu0 0
        %2811 = vmatpush2.bf16.msra.mxu0 0
        %2812 = vmatprep.subr.bf16.mxu0 0
        %2813 = vmatpush2.bf16.msra.mxu0 0
        %2814 = vmatprep.subr.bf16.mxu0 0
        %2815 = vmatpush2.bf16.msra.mxu0 0
        %2816 = vmatprep.subr.bf16.mxu0 0
        %2817 = vmatpush2.bf16.msra.mxu0 0
        %2818 = vmatprep.subr.bf16.mxu0 0
        %2819 = vmatpush2.bf16.msra.mxu0 0
        %2820 = vmatprep.mubr.bf16.mxu0 0
        %2821 = vmatmul.mubr.bf16.gmra.mxu0 %v2786
        %v2822 = vpop.f32.mrf.mxu0
        %v2823 = vadd.f32 0.0, %v2822
        %v2824 = vpop.f32.mrf.mxu0
        %v2825 = vpop.f32.mrf.mxu0
        %v2826 = vadd.f32 0.0, %v2825
        %v2827 = vpop.f32.mrf.mxu0
        %2828 = vdwg.mxu0
        %v2829 = vadd.f32 %v2767, %v2823
        %v2830 = vadd.f32 %v2768, %v2826
        %v2831 = vld [vmem:[%s10] sm:$0x1]
        %v2833 = vlaneseq
        %v2834 = vshrl.u32 %v2833, 7
        %v2835 = vsub.s32 0, %v2834
        %v2836 = vrot.slane %v2831, %v2835
        %v2838 = vadd.f32 %v2829, %v2836
        %v2839 = vadd.f32 %v2830, %v2836
        %v2840 = vadd.f32 %v2838, %v1389
        %v2841 = vadd.f32 %v2839, %v1390
        %v2842 = vmax.f32 %v2840, 0.0
        %v2843 = vmax.f32 %v2841, 0.0
        %v2844 = vpack.c.bf16 %v2843, %v2842
        %v2845 = vld [vmem:[%s11] sm:$0xf]
        %v2846 = vld [vmem:[%s11 + $0x4] sm:$0xf]
        %v2847 = vld [vmem:[%s11 + $0x8] sm:$0xf]
        %v2848 = vld [vmem:[%s11 + $0xc] sm:$0xf]
        %v2849 = vld [vmem:[%s12] sm:$0x1]
        %v2851 = vlaneseq
        %v2852 = vshrl.u32 %v2851, 7
        %v2853 = vsub.s32 0, %v2852
        %v2854 = vrot.slane %v2849, %v2853
        %v2860 = vunpack.c.l.b16 %v2845
        %v2861 = vunpack.c.l.b16 %v2846
        %v2862 = vunpack.c.l.b16 %v2847
        %v2863 = vunpack.c.l.b16 %v2848
        %v2864 = vpack.c.b16 %v2861, %v2860
        %v2865 = vpack.c.b16 %v2863, %v2862
        %v2869 = vsel %vm845, %v2844, 0
        %2871 = vmatprep.subr.bf16.mxu0 0
        %2872 = vmatpush1.bf16.msra.mxu0 0
        %2873 = vmatprep.subr.bf16.mxu0 0
        %2874 = vmatpush1.bf16.msra.mxu0 0
        %2875 = vmatprep.subr.bf16.mxu0 0
        %2876 = vmatpush1.bf16.msra.mxu0 0
        %2877 = vmatprep.subr.bf16.mxu0 0
        %2878 = vmatpush1.bf16.msra.mxu0 0
        %2879 = vmatprep.subr.bf16.mxu0 0
        %2880 = vmatpush1.bf16.msra.mxu0 0
        %2881 = vmatprep.subr.bf16.mxu0 0
        %2882 = vmatpush1.bf16.msra.mxu0 0
        %2883 = vmatprep.subr.bf16.mxu0 0
        %2884 = vmatpush1.bf16.msra.mxu0 %v2865
        %2885 = vmatprep.subr.bf16.mxu0 0
        %2886 = vmatpush1.bf16.msra.mxu0 %v2864
        %2887 = vmatprep.subr.bf16.mxu0 0
        %2888 = vmatpush2.bf16.msra.mxu0 0
        %2889 = vmatprep.subr.bf16.mxu0 0
        %2890 = vmatpush2.bf16.msra.mxu0 0
        %2891 = vmatprep.subr.bf16.mxu0 0
        %2892 = vmatpush2.bf16.msra.mxu0 0
        %2893 = vmatprep.subr.bf16.mxu0 0
        %2894 = vmatpush2.bf16.msra.mxu0 0
        %2895 = vmatprep.subr.bf16.mxu0 0
        %2896 = vmatpush2.bf16.msra.mxu0 0
        %2897 = vmatprep.subr.bf16.mxu0 0
        %2898 = vmatpush2.bf16.msra.mxu0 0
        %2899 = vmatprep.subr.bf16.mxu0 0
        %2900 = vmatpush2.bf16.msra.mxu0 0
        %2901 = vmatprep.subr.bf16.mxu0 0
        %2902 = vmatpush2.bf16.msra.mxu0 0
        %2903 = vmatprep.mubr.bf16.mxu0 0
        %2904 = vmatmul.mubr.bf16.gmra.mxu0 %v2869
        %v2905 = vpop.f32.mrf.mxu0
        %v2906 = vadd.f32 %v2854, %v2905
        %v2907 = vpop.f32.mrf.mxu0
        %v2908 = vpop.f32.mrf.mxu0
        %v2909 = vadd.f32 %v2854, %v2908
        %v2910 = vpop.f32.mrf.mxu0
        %2911 = vdwg.mxu0
        %2912 = vst [vmem:[%s433] sm:$0xff] %v2906
        %2913 = vst [vmem:[%s433 + $0x8] sm:$0xff] %v2909
        %s2914 = sand.u32 %s313, 1
        %s2915 = scalar_lea.sflag [#allocation3], %s2914
        %s2916 = sand.u32 %s313, 1
        %s2917 = smul.addr %s2916, 16
        %s2918 = scalar_lea.vmem [#allocation2], %s2917
        // Predicated region
        $region73: #{main_model_forward.1} parent=71 // pred_check
          %p2919 = pneg %p323
        $region74: #{main_model_forward.1} parent=71 // pred_check_branch
          %2921 = sbr.rel (%p2919) target = $region76
        $region75: #{main_model_forward.1} parent=71 // pred_region
          %s2923 = ssub.s32 256, 256
          %2924 = vsyncadd %s2915, %s2923
          %s2925 = smul.addr %s27, 2
          %s2926 = smul.addr %s2925, 128
          %s2927 = scalar_lea.hbm %s13, %s2926
          %s2928 = sshll.u32 %s2918, 4
          %s2929 = int_to_ptr.vmem [resolvable:$true] %s2928
          %2934 = dma.vmem_to_hbm [thread:$0]  %s2929, 256, %s2927, %s2915, 128, 128, 8
        $region76: #{main_model_forward.1} parent=71 // pred_fallthru
          _
      $region72: #{main_model_forward.1} parent=5 // pred_fallthru
        _
      %p2935 = scmp.le.s32.totalorder 2, %s22
      // Predicated region
      $region77: #{main_model_forward.1} parent=5 // pred_check
        %p2936 = pneg %p2935
      $region78: #{main_model_forward.1} parent=5 // pred_check_branch
        %2938 = sbr.rel (%p2936) target = $region80
      $region79: #{main_model_forward.1} parent=5 // pred_region
        %s2939 = ssub.s32 %s22, 2
        // Predicated region
        $region81: #{main_model_forward.1} parent=79 // pred_check
          %p2940 = pneg %p329
        $region82: #{main_model_forward.1} parent=79 // pred_check_branch
          %2942 = sbr.rel (%p2940) target = $region84
        $region83: #{main_model_forward.1} parent=79 // pred_region
          %s2943 = sand.u32 %s314, 1
          %s2944 = scalar_lea.sflag [#allocation3], %s2943
          %s2945 = sand.u32 %s314, 1
          %s2946 = smul.addr %s2945, 16
          %s2947 = scalar_lea.vmem [#allocation2], %s2946
          %2948 = dma.done %s2944, 256
        $region84: #{main_model_forward.1} parent=79 // pred_fallthru
          _
      $region80: #{main_model_forward.1} parent=5 // pred_fallthru
        _
    $region6: #{main_model_forward.1} parent=1 // loop_footer
      %s26 = sadd.s32 1, %s22
    $region7: #{main_model_forward.1} parent=1 // loop_footer_branch
      %21 = sbr.rel target = $region3
    $region8: #{main_model_forward.1} parent=1 // loop_exit
      _
    %2949 = vsyncpa [#allocation3], 1
    %s2950 = scalar_lea.sflag [#allocation3], 1
    %2951 = vsyncpa %s2950, 1

</llo_original>
